<compile_context>
chip_gen: v6e
topology: v6e:2x2x1
jax: 0.10.0
libtpu: 0.0.40
codegen_flags: <defaults>
</compile_context>

<pallas_src>
import functools
import math

import jax
import jax.numpy as jnp
from jax.experimental import pallas as pl
from jax.experimental.pallas import tpu as pltpu

IMAGE_CHANNELS = 1
INIT_CHANNELS = 8
KERNEL_SIZE = 4
LATENT_DIM = 16

_MM_DTYPE = jnp.bfloat16   # MXU operand dtype for conv matmuls (f32 accumulate)


def _apply_act(y, act):
    if act == "relu":
        return jnp.maximum(y, 0.0)
    if act == "sigmoid":
        # exp + reciprocal run on the EUP (VALU slots stay free); the clip guards
        # the tiny approx-reciprocal error so the mathematical [0,1] range holds.
        return jnp.clip(pl.reciprocal(1.0 + jnp.exp(-y), approx=True), 0.0, 1.0)
    return y


# ---------------------------------------------------------------------------
# Pallas kernels
# ---------------------------------------------------------------------------
def _mm_bias_act_kernel(act, x_ref, w_ref, b_ref, o_ref):
    """o = act(x @ w + b);  x:[tm,K]  w:[K,N]  b:[1,N]."""
    y = jnp.dot(x_ref[...], w_ref[...], preferred_element_type=jnp.float32)
    y = _apply_act(y + b_ref[...], act)
    o_ref[...] = y.astype(o_ref.dtype)


def matmul_bias_act(x, w, b, act="none", tm=256):
    """act(x @ w + b) -> [M, N] float32, M tiled on a 'parallel' grid axis."""
    M, K = x.shape
    N = w.shape[1]
    tm = M if M <= tm else tm
    return pl.pallas_call(
        functools.partial(_mm_bias_act_kernel, act),
        out_shape=jax.ShapeDtypeStruct((M, N), jnp.float32),
        grid=(pl.cdiv(M, tm),),
        in_specs=[
            pl.BlockSpec((tm, K), lambda i: (i, 0)),
            pl.BlockSpec((K, N), lambda i: (0, 0)),
            pl.BlockSpec((1, N), lambda i: (0, 0)),
        ],
        out_specs=pl.BlockSpec((tm, N), lambda i: (i, 0)),
        compiler_params=pltpu.CompilerParams(dimension_semantics=("parallel",)),
    )(x, w, b.reshape(1, N).astype(jnp.float32))


def _mm_t_bias_act_kernel(act, w_ref, x_ref, b_ref, o_ref):
    """o = act(w @ x + b);  w:[N,K]  x:[K,tm]  b:[N,1]  -> lane axis carries M."""
    y = jnp.dot(w_ref[...], x_ref[...], preferred_element_type=jnp.float32)
    y = _apply_act(y + b_ref[...], act)
    o_ref[...] = y.astype(o_ref.dtype)


def matmul_t_bias_act(xt, wt, b, act="none", tm=256):
    """act(wt @ xt + b[:,None]) -> [N, M].  Used when N (channels) is tiny so the
    128-lane axis carries M = B*Ho*Wo instead -> lane-dense stores."""
    K, M = xt.shape
    N = wt.shape[0]
    tm = M if M <= tm else tm
    return pl.pallas_call(
        functools.partial(_mm_t_bias_act_kernel, act),
        out_shape=jax.ShapeDtypeStruct((N, M), jnp.float32),
        grid=(pl.cdiv(M, tm),),
        in_specs=[
            pl.BlockSpec((N, K), lambda i: (0, 0)),
            pl.BlockSpec((K, tm), lambda i: (0, i)),
            pl.BlockSpec((N, 1), lambda i: (0, 0)),
        ],
        out_specs=pl.BlockSpec((N, tm), lambda i: (0, i)),
        compiler_params=pltpu.CompilerParams(dimension_semantics=("parallel",)),
    )(wt, xt, b.reshape(N, 1).astype(jnp.float32))


def _latent_kernel(cols4_ref, w4_ref, b4_ref, pool_ref,
                   fc1w_ref, fc1b_ref, fcmvw_ref, fcmvb_ref, eps_ref,
                   fc2w_ref, fc2b_ref, d1w_ref, d1b_ref,
                   d1_ref, mulv_ref):
    """Fused enc4 -> GAP -> fc1 -> (fc_mu | fc_log_var) -> reparam -> fc2 -> dec1."""
    f32 = jnp.float32
    y4 = jnp.dot(cols4_ref[...], w4_ref[...], preferred_element_type=f32)
    y4 = jnp.maximum(y4 + b4_ref[...], 0.0)                               # relu(enc4): [B*S,64]
    pooled = jnp.dot(pool_ref[...], y4, preferred_element_type=f32)       # GAP:        [B,64]
    hidden = jnp.dot(pooled, fc1w_ref[...], preferred_element_type=f32) + fc1b_ref[...]
    mulv = jnp.dot(hidden, fcmvw_ref[...], preferred_element_type=f32) + fcmvb_ref[...]
    mu = mulv[:, :LATENT_DIM]
    log_var = mulv[:, LATENT_DIM:]
    z = mu + eps_ref[...] * jnp.exp(0.5 * log_var)                        # reparameterize
    z = jnp.dot(z, fc2w_ref[...], preferred_element_type=f32) + fc2b_ref[...]   # fc2
    d1 = jnp.dot(z, d1w_ref[...], preferred_element_type=f32) + d1b_ref[...]    # dec1 (1x1 input)
    d1_ref[...] = jnp.maximum(d1, 0.0)
    mulv_ref[...] = mulv


def latent_path(cols4, w4, b4, pool, fc1w, fc1b, fcmvw, fcmvb, eps,
                fc2w, fc2b, d1w, d1b):
    B = eps.shape[0]
    d1_dim = d1w.shape[1]
    ins = (cols4, w4, b4.reshape(1, -1), pool,
           fc1w, fc1b.reshape(1, -1), fcmvw, fcmvb.reshape(1, -1), eps,
           fc2w, fc2b.reshape(1, -1), d1w, d1b.reshape(1, -1))
    full = lambda a: pl.BlockSpec(a.shape, lambda i: (0, 0))
    d1, mulv = pl.pallas_call(
        _latent_kernel,
        out_shape=(jax.ShapeDtypeStruct((B, d1_dim), jnp.float32),
                   jax.ShapeDtypeStruct((B, 2 * LATENT_DIM), jnp.float32)),
        grid=(1,),
        in_specs=[full(a) for a in ins],
        out_specs=(pl.BlockSpec((B, d1_dim), lambda i: (0, 0)),
                   pl.BlockSpec((B, 2 * LATENT_DIM), lambda i: (0, 0))),
    )(*ins)
    return d1, mulv


# ---------------------------------------------------------------------------
# Plain-JAX glue: im2col, conv / conv-transpose wrappers
# ---------------------------------------------------------------------------
# TODO(synk): move patch extraction into the kernels (strided pl.ds gathers) once
# batch sizes make the im2col HBM round-trip the dominant traffic.
def _im2col(x, k, stride, pad):
    """x NHWC -> ([B*Ho*Wo, k*k*C], (B,Ho,Wo)); column order (ki, kj, c)."""
    if pad > 0:
        x = jnp.pad(x, ((0, 0), (pad, pad), (pad, pad), (0, 0)))
    B, Hp, Wp, C = x.shape
    Ho = (Hp - k) // stride + 1
    Wo = (Wp - k) // stride + 1
    patches = []
    for di in range(k):
        for dj in range(k):
            patches.append(
                x[:, di:di + stride * (Ho - 1) + 1:stride,
                     dj:dj + stride * (Wo - 1) + 1:stride, :])
    cols = jnp.stack(patches, axis=3)          # [B, Ho, Wo, k*k, C]
    return cols.reshape(B * Ho * Wo, k * k * C), (B, Ho, Wo)


def conv2d(x, w, b, stride, pad, act):
    """x NHWC; w: PyTorch Conv2d layout [Cout, Cin, kh, kw]; b: [Cout]."""
    cout, cin, kh, kw = w.shape
    cols, (B, Ho, Wo) = _im2col(x, kh, stride, pad)
    wmat = jnp.transpose(w, (2, 3, 1, 0)).reshape(kh * kw * cin, cout)
    y = matmul_bias_act(cols.astype(_MM_DTYPE), wmat.astype(_MM_DTYPE), b, act)
    return y.reshape(B, Ho, Wo, cout)


def conv2d_cin1_lane_dense(x, w, b, stride, pad, act):
    """Single-input-channel conv (enc1) computed transposed: out^T = W^T @ cols^T
    so the lane axis is B*Ho*Wo; Cout=8 sits on the sublane axis."""
    cout, cin, kh, kw = w.shape
    assert cin == 1
    if pad > 0:
        x = jnp.pad(x, ((0, 0), (pad, pad), (pad, pad), (0, 0)))
    B, Hp, Wp, _ = x.shape
    Ho = (Hp - kh) // stride + 1
    Wo = (Wp - kw) // stride + 1
    patches = [x[:, di:di + stride * (Ho - 1) + 1:stride,
                   dj:dj + stride * (Wo - 1) + 1:stride, 0]
               for di in range(kh) for dj in range(kw)]
    cols_t = jnp.stack(patches, axis=0).reshape(kh * kw, B * Ho * Wo)    # [K, M]
    wt = w.reshape(cout, kh * kw)                                        # [Cout, K]
    y_t = matmul_t_bias_act(cols_t.astype(_MM_DTYPE), wt.astype(_MM_DTYPE), b, act)
    return jnp.transpose(y_t.reshape(cout, B, Ho, Wo), (1, 2, 3, 0))     # NHWC


def _tconv_s2_weights(w):
    """ConvTranspose2d(k=4, stride=2, pad=1) weight [Cin,Cout,4,4] -> equivalent
    3x3 stride-1 conv weight [9*Cin, 4*Cout]; N axis ordered (parity, Cout)."""
    cin, cout, kh, kw = w.shape
    w9 = jnp.zeros((3, 3, cin, 4, cout), jnp.float32)
    for py in (0, 1):
        for px in (0, 1):
            for r in range(3):
                ky = py - 2 * r + 3
                if not 0 <= ky < kh:
                    continue
                for c in range(3):
                    kx = px - 2 * c + 3
                    if not 0 <= kx < kw:
                        continue
                    w9 = w9.at[r, c, :, py * 2 + px, :].set(w[:, :, ky, kx])
    return w9.reshape(9 * cin, 4 * cout)


def conv_transpose2d_s2(x, w, b, act):
    """nn.ConvTranspose2d(kernel=4, stride=2, padding=1) on NHWC x via the
    output-parity decomposition (no zero-dilated input)."""
    cin, cout, kh, kw = w.shape
    w9 = _tconv_s2_weights(w)                              # [9*Cin, 4*Cout]
    b4 = jnp.tile(b, 4)                                    # bias per (parity, co)
    cols, (B, H, W) = _im2col(x, 3, 1, 1)                  # [B*H*W, 9*Cin]
    y = matmul_bias_act(cols.astype(_MM_DTYPE), w9.astype(_MM_DTYPE), b4, act)
    y = y.reshape(B, H, W, 2, 2, cout)                     # (b, m, n, py, px, co)
    return jnp.transpose(y, (0, 1, 3, 2, 4, 5)).reshape(B, 2 * H, 2 * W, cout)


def conv_transpose2d_s2_to_nchw(x, w, b, act):
    """Same decomposition, computed transposed (lane axis = B*H*W) and returned
    directly in NCHW -- used for the Cout=1 output layer (dec4)."""
    cin, cout, kh, kw = w.shape
    w9t = _tconv_s2_weights(w).T                           # [4*Cout, 9*Cin]
    b4 = jnp.tile(b, 4)
    cols, (B, H, W) = _im2col(x, 3, 1, 1)
    y_t = matmul_t_bias_act(cols.T.astype(_MM_DTYPE), w9t.astype(_MM_DTYPE), b4, act)
    y_t = y_t.reshape(2, 2, cout, B, H, W)                 # (py, px, co, b, m, n)
    return jnp.transpose(y_t, (3, 2, 4, 0, 5, 1)).reshape(B, cout, 2 * H, 2 * W)


# ---------------------------------------------------------------------------
# Deterministic parameter construction (matches nn.Module shapes)
# ---------------------------------------------------------------------------
def _uniform(key, shape):
    fan_in = int(math.prod(shape[1:])) if len(shape) > 1 else int(shape[0])
    bound = 1.0 / math.sqrt(max(fan_in, 1))
    return jax.random.uniform(key, shape, jnp.float32, -bound, bound)


def init_params(key):
    ic, k = INIT_CHANNELS, KERNEL_SIZE
    shapes = {
        "enc1_w": (ic, IMAGE_CHANNELS, k, k),      "enc1_b": (ic,),
        "enc2_w": (ic * 2, ic, k, k),              "enc2_b": (ic * 2,),
        "enc3_w": (ic * 4, ic * 2, k, k),          "enc3_b": (ic * 4,),
        "enc4_w": (64, ic * 4, k, k),              "enc4_b": (64,),
        "fc1_w": (128, 64),                        "fc1_b": (128,),
        "fc_mu_w": (LATENT_DIM, 128),              "fc_mu_b": (LATENT_DIM,),
        "fc_log_var_w": (LATENT_DIM, 128),         "fc_log_var_b": (LATENT_DIM,),
        "fc2_w": (64, LATENT_DIM),                 "fc2_b": (64,),
        "dec1_w": (64, ic * 8, k, k),              "dec1_b": (ic * 8,),
        "dec2_w": (ic * 8, ic * 4, k, k),          "dec2_b": (ic * 4,),
        "dec3_w": (ic * 4, ic * 2, k, k),          "dec3_b": (ic * 2,),
        "dec4_w": (ic * 2, IMAGE_CHANNELS, k, k),  "dec4_b": (IMAGE_CHANNELS,),
    }
    keys = jax.random.split(key, len(shapes))
    return {n: _uniform(kk, s) for kk, (n, s) in zip(keys, shapes.items())}


# ---------------------------------------------------------------------------
# Full forward pass (mirrors ConvolutionalVAE.forward)
# ---------------------------------------------------------------------------
def vae_forward(params, x_nchw, eps):
    x = jnp.transpose(x_nchw, (0, 2, 3, 1))                              # NCHW -> NHWC
    x = conv2d_cin1_lane_dense(x, params["enc1_w"], params["enc1_b"], 2, 1, "relu")
    x = conv2d(x, params["enc2_w"], params["enc2_b"], 2, 1, "relu")
    x = conv2d(x, params["enc3_w"], params["enc3_b"], 2, 1, "relu")

    # --- fused latent path: enc4 + GAP + fc1 + fc_mu/fc_log_var + reparam + fc2 + dec1
    cols4, (B, ho4, wo4) = _im2col(x, KERNEL_SIZE, 2, 0)                 # [B*S4, k*k*32]
    s4 = ho4 * wo4
    w4 = jnp.transpose(params["enc4_w"], (2, 3, 1, 0)).reshape(-1, 64)
    pool = jnp.repeat(jnp.eye(B, dtype=jnp.float32), s4, axis=1) / float(s4)
    fcmv_w = jnp.concatenate([params["fc_mu_w"].T, params["fc_log_var_w"].T], axis=1)
    fcmv_b = jnp.concatenate([params["fc_mu_b"], params["fc_log_var_b"]])
    # dec1 is a ConvTranspose2d on a 1x1 input == a plain matmul; cols ordered (ky,kx,co)
    d1w = jnp.transpose(params["dec1_w"], (0, 2, 3, 1)).reshape(64, -1)
    d1b = jnp.tile(params["dec1_b"], KERNEL_SIZE * KERNEL_SIZE)
    d1, mulv = latent_path(cols4, w4, params["enc4_b"], pool,
                           params["fc1_w"].T, params["fc1_b"], fcmv_w, fcmv_b, eps,
                           params["fc2_w"].T, params["fc2_b"], d1w, d1b)
    mu, log_var = mulv[:, :LATENT_DIM], mulv[:, LATENT_DIM:]

    x = d1.reshape(B, KERNEL_SIZE, KERNEL_SIZE, INIT_CHANNELS * 8)       # dec1 out, NHWC
    x = conv_transpose2d_s2(x, params["dec2_w"], params["dec2_b"], "relu")
    x = conv_transpose2d_s2(x, params["dec3_w"], params["dec3_b"], "relu")
    reconstruction = conv_transpose2d_s2_to_nchw(
        x, params["dec4_w"], params["dec4_b"], "sigmoid")                # already NCHW
    return reconstruction, mu, log_var


# ---------------------------------------------------------------------------
if __name__ == "__main__":
    key = jax.random.PRNGKey(0)
    k_x, k_eps, k_params = jax.random.split(key, 3)

    batch, spatial = 2, 32                      # 32x32 -> enc4 yields 1x1x64
    x = jax.random.normal(k_x, (batch, IMAGE_CHANNELS, spatial, spatial), jnp.float32)
    # eps for the reparameterization trick (randn_like(std)), hoisted out of the
    # kernel so the whole forward is deterministic.
    eps = jax.random.normal(k_eps, (batch, LATENT_DIM), jnp.float32)
    params = init_params(k_params)

    fwd = jax.jit(vae_forward)
    recon, mu, log_var = fwd(params, x, eps)
    jax.block_until_ready((recon, mu, log_var))

    assert recon.shape == (batch, IMAGE_CHANNELS, spatial, spatial), recon.shape
    assert mu.shape == (batch, LATENT_DIM) and log_var.shape == (batch, LATENT_DIM)
    assert bool(jnp.all(jnp.isfinite(recon)))
    assert bool(jnp.all((recon >= 0.0) & (recon <= 1.0)))  # sigmoid output range
    print("KERNEL_OK")
</pallas_src>

<mosaic_0001>
module attributes {stable_mosaic.version = 11 : i64} {
  func.func @_mm_t_bias_act_kernel(%arg0: i32, %arg1: memref<8x16xbf16, #tpu.memory_space<vmem>>, %arg2: memref<16x256xbf16, #tpu.memory_space<vmem>>, %arg3: memref<8x1xf32, #tpu.memory_space<vmem>>, %arg4: memref<8x256xf32, #tpu.memory_space<vmem>>) attributes {dimension_semantics = [#tpu.dimension_semantics<parallel>], iteration_bounds = array<i64: 2>, scalar_prefetch = 0 : i64, scratch_operands = 0 : i64, tpu.core_type = #tpu.core_type<tc>, window_params = [{pipeline_mode = #tpu.pipeline_mode<synchronous>, transform_indices = @transform_0, window_bounds = array<i64: 8, 16>}, {transform_indices = @transform_1, window_bounds = array<i64: 16, 256>}, {pipeline_mode = #tpu.pipeline_mode<synchronous>, transform_indices = @transform_2, window_bounds = array<i64: 8, 1>}, {transform_indices = @transform_3, window_bounds = array<i64: 8, 256>}]} {
    %c0 = arith.constant 0 : index
    %c0_0 = arith.constant 0 : index
    %0 = vector.load %arg1[%c0, %c0_0] : memref<8x16xbf16, #tpu.memory_space<vmem>>, vector<8x16xbf16>
    %c0_1 = arith.constant 0 : index
    %c0_2 = arith.constant 0 : index
    %1 = vector.load %arg2[%c0_1, %c0_2] : memref<16x256xbf16, #tpu.memory_space<vmem>>, vector<16x256xbf16>
    %cst = arith.constant dense<0.000000e+00> : vector<8x256xf32>
    %2 = tpu.matmul %0, %1, %cst {dimension_numbers = #tpu.dot_dimension_numbers<[1], [0], [0], [1], [0, 0, 1, 1], [], []>} : vector<8x16xbf16>, vector<16x256xbf16>, vector<8x256xf32> -> vector<8x256xf32>
    %c0_3 = arith.constant 0 : index
    %c0_4 = arith.constant 0 : index
    %3 = vector.load %arg3[%c0_3, %c0_4] : memref<8x1xf32, #tpu.memory_space<vmem>>, vector<8x1xf32>
    %4 = vector.broadcast %3 : vector<8x1xf32> to vector<8x256xf32>
    %5 = arith.addf %2, %4 : vector<8x256xf32>
    %cst_5 = arith.constant 0.000000e+00 : f32
    %6 = vector.broadcast %cst_5 : f32 to vector<8x256xf32>
    %7 = arith.maximumf %5, %6 : vector<8x256xf32>
    %c0_6 = arith.constant 0 : index
    %c0_7 = arith.constant 0 : index
    %8 = vector.load %arg4[%c0_6, %c0_7] : memref<8x256xf32, #tpu.memory_space<vmem>>, vector<8x256xf32>
    tpu.vector_store %arg4[%c0_6, %c0_7], %7 {strides = array<i32>} : memref<8x256xf32, #tpu.memory_space<vmem>>, vector<8x256xf32>,
    return
  }
  func.func @transform_0(%arg0: i32) -> (i32, i32) {
    %c0_i32 = arith.constant 0 : i32
    %c0_i32_0 = arith.constant 0 : i32
    %c0_i32_1 = arith.constant 0 : i32
    return %c0_i32, %c0_i32_0 : i32, i32
  }
  func.func @transform_1(%arg0: i32) -> (i32, i32) {
    %c0_i32 = arith.constant 0 : i32
    %c0_i32_0 = arith.constant 0 : i32
    return %c0_i32, %arg0 : i32, i32
  }
  func.func @transform_2(%arg0: i32) -> (i32, i32) {
    %c0_i32 = arith.constant 0 : i32
    %c0_i32_0 = arith.constant 0 : i32
    %c0_i32_1 = arith.constant 0 : i32
    return %c0_i32, %c0_i32_0 : i32, i32
  }
  func.func @transform_3(%arg0: i32) -> (i32, i32) {
    %c0_i32 = arith.constant 0 : i32
    %c0_i32_0 = arith.constant 0 : i32
    return %c0_i32, %arg0 : i32, i32
  }
}

module attributes {stable_mosaic.version = 11 : i64} {
  func.func @_mm_bias_act_kernel(%arg0: i32, %arg1: memref<128x128xbf16, #tpu.memory_space<vmem>>, %arg2: memref<128x16xbf16, #tpu.memory_space<vmem>>, %arg3: memref<1x16xf32, #tpu.memory_space<vmem>>, %arg4: memref<128x16xf32, #tpu.memory_space<vmem>>) attributes {dimension_semantics = [#tpu.dimension_semantics<parallel>], iteration_bounds = array<i64: 1>, scalar_prefetch = 0 : i64, scratch_operands = 0 : i64, tpu.core_type = #tpu.core_type<tc>, window_params = [{transform_indices = @transform_0, window_bounds = array<i64: 128, 128>}, {pipeline_mode = #tpu.pipeline_mode<synchronous>, transform_indices = @transform_1, window_bounds = array<i64: 128, 16>}, {pipeline_mode = #tpu.pipeline_mode<synchronous>, transform_indices = @transform_2, window_bounds = array<i64: 1, 16>}, {transform_indices = @transform_3, window_bounds = array<i64: 128, 16>}]} {
    %c0 = arith.constant 0 : index
    %c0_0 = arith.constant 0 : index
    %0 = vector.load %arg1[%c0, %c0_0] : memref<128x128xbf16, #tpu.memory_space<vmem>>, vector<128x128xbf16>
    %c0_1 = arith.constant 0 : index
    %c0_2 = arith.constant 0 : index
    %1 = vector.load %arg2[%c0_1, %c0_2] : memref<128x16xbf16, #tpu.memory_space<vmem>>, vector<128x16xbf16>
    %cst = arith.constant dense<0.000000e+00> : vector<128x16xf32>
    %2 = tpu.matmul %0, %1, %cst {dimension_numbers = #tpu.dot_dimension_numbers<[1], [0], [0], [1], [0, 0, 1, 1], [], []>} : vector<128x128xbf16>, vector<128x16xbf16>, vector<128x16xf32> -> vector<128x16xf32>
    %c0_3 = arith.constant 0 : index
    %c0_4 = arith.constant 0 : index
    %3 = vector.load %arg3[%c0_3, %c0_4] : memref<1x16xf32, #tpu.memory_space<vmem>>, vector<1x16xf32>
    %4 = vector.broadcast %3 : vector<1x16xf32> to vector<128x16xf32>
    %5 = arith.addf %2, %4 : vector<128x16xf32>
    %cst_5 = arith.constant 0.000000e+00 : f32
    %6 = vector.broadcast %cst_5 : f32 to vector<128x16xf32>
    %7 = arith.maximumf %5, %6 : vector<128x16xf32>
    %c0_6 = arith.constant 0 : index
    %c0_7 = arith.constant 0 : index
    %8 = vector.load %arg4[%c0_6, %c0_7] : memref<128x16xf32, #tpu.memory_space<vmem>>, vector<128x16xf32>
    tpu.vector_store %arg4[%c0_6, %c0_7], %7 {strides = array<i32>} : memref<128x16xf32, #tpu.memory_space<vmem>>, vector<128x16xf32>,
    return
  }
  func.func @transform_0(%arg0: i32) -> (i32, i32) {
    %c0_i32 = arith.constant 0 : i32
    %c0_i32_0 = arith.constant 0 : i32
    return %arg0, %c0_i32 : i32, i32
  }
  func.func @transform_1(%arg0: i32) -> (i32, i32) {
    %c0_i32 = arith.constant 0 : i32
    %c0_i32_0 = arith.constant 0 : i32
    %c0_i32_1 = arith.constant 0 : i32
    return %c0_i32, %c0_i32_0 : i32, i32
  }
  func.func @transform_2(%arg0: i32) -> (i32, i32) {
    %c0_i32 = arith.constant 0 : i32
    %c0_i32_0 = arith.constant 0 : i32
    %c0_i32_1 = arith.constant 0 : i32
    return %c0_i32, %c0_i32_0 : i32, i32
  }
  func.func @transform_3(%arg0: i32) -> (i32, i32) {
    %c0_i32 = arith.constant 0 : i32
    %c0_i32_0 = arith.constant 0 : i32
    return %arg0, %c0_i32 : i32, i32
  }
}

module attributes {stable_mosaic.version = 11 : i64} {
  func.func @_mm_bias_act_kernel(%arg0: i32, %arg1: memref<32x256xbf16, #tpu.memory_space<vmem>>, %arg2: memref<256x32xbf16, #tpu.memory_space<vmem>>, %arg3: memref<1x32xf32, #tpu.memory_space<vmem>>, %arg4: memref<32x32xf32, #tpu.memory_space<vmem>>) attributes {dimension_semantics = [#tpu.dimension_semantics<parallel>], iteration_bounds = array<i64: 1>, scalar_prefetch = 0 : i64, scratch_operands = 0 : i64, tpu.core_type = #tpu.core_type<tc>, window_params = [{transform_indices = @transform_0, window_bounds = array<i64: 32, 256>}, {pipeline_mode = #tpu.pipeline_mode<synchronous>, transform_indices = @transform_1, window_bounds = array<i64: 256, 32>}, {pipeline_mode = #tpu.pipeline_mode<synchronous>, transform_indices = @transform_2, window_bounds = array<i64: 1, 32>}, {transform_indices = @transform_3, window_bounds = array<i64: 32, 32>}]} {
    %c0 = arith.constant 0 : index
    %c0_0 = arith.constant 0 : index
    %0 = vector.load %arg1[%c0, %c0_0] : memref<32x256xbf16, #tpu.memory_space<vmem>>, vector<32x256xbf16>
    %c0_1 = arith.constant 0 : index
    %c0_2 = arith.constant 0 : index
    %1 = vector.load %arg2[%c0_1, %c0_2] : memref<256x32xbf16, #tpu.memory_space<vmem>>, vector<256x32xbf16>
    %cst = arith.constant dense<0.000000e+00> : vector<32x32xf32>
    %2 = tpu.matmul %0, %1, %cst {dimension_numbers = #tpu.dot_dimension_numbers<[1], [0], [0], [1], [0, 0, 1, 1], [], []>} : vector<32x256xbf16>, vector<256x32xbf16>, vector<32x32xf32> -> vector<32x32xf32>
    %c0_3 = arith.constant 0 : index
    %c0_4 = arith.constant 0 : index
    %3 = vector.load %arg3[%c0_3, %c0_4] : memref<1x32xf32, #tpu.memory_space<vmem>>, vector<1x32xf32>
    %4 = vector.broadcast %3 : vector<1x32xf32> to vector<32x32xf32>
    %5 = arith.addf %2, %4 : vector<32x32xf32>
    %cst_5 = arith.constant 0.000000e+00 : f32
    %6 = vector.broadcast %cst_5 : f32 to vector<32x32xf32>
    %7 = arith.maximumf %5, %6 : vector<32x32xf32>
    %c0_6 = arith.constant 0 : index
    %c0_7 = arith.constant 0 : index
    %8 = vector.load %arg4[%c0_6, %c0_7] : memref<32x32xf32, #tpu.memory_space<vmem>>, vector<32x32xf32>
    tpu.vector_store %arg4[%c0_6, %c0_7], %7 {strides = array<i32>} : memref<32x32xf32, #tpu.memory_space<vmem>>, vector<32x32xf32>,
    return
  }
  func.func @transform_0(%arg0: i32) -> (i32, i32) {
    %c0_i32 = arith.constant 0 : i32
    %c0_i32_0 = arith.constant 0 : i32
    return %arg0, %c0_i32 : i32, i32
  }
  func.func @transform_1(%arg0: i32) -> (i32, i32) {
    %c0_i32 = arith.constant 0 : i32
    %c0_i32_0 = arith.constant 0 : i32
    %c0_i32_1 = arith.constant 0 : i32
    return %c0_i32, %c0_i32_0 : i32, i32
  }
  func.func @transform_2(%arg0: i32) -> (i32, i32) {
    %c0_i32 = arith.constant 0 : i32
    %c0_i32_0 = arith.constant 0 : i32
    %c0_i32_1 = arith.constant 0 : i32
    return %c0_i32, %c0_i32_0 : i32, i32
  }
  func.func @transform_3(%arg0: i32) -> (i32, i32) {
    %c0_i32 = arith.constant 0 : i32
    %c0_i32_0 = arith.constant 0 : i32
    return %arg0, %c0_i32 : i32, i32
  }
}

module attributes {stable_mosaic.version = 11 : i64} {
  func.func @_latent_kernel(%arg0: i32, %arg1: memref<2x512xf32, #tpu.memory_space<vmem>>, %arg2: memref<512x64xf32, #tpu.memory_space<vmem>>, %arg3: memref<1x64xf32, #tpu.memory_space<vmem>>, %arg4: memref<2x2xf32, #tpu.memory_space<vmem>>, %arg5: memref<64x128xf32, #tpu.memory_space<vmem>>, %arg6: memref<1x128xf32, #tpu.memory_space<vmem>>, %arg7: memref<128x32xf32, #tpu.memory_space<vmem>>, %arg8: memref<1x32xf32, #tpu.memory_space<vmem>>, %arg9: memref<2x16xf32, #tpu.memory_space<vmem>>, %arg10: memref<16x64xf32, #tpu.memory_space<vmem>>, %arg11: memref<1x64xf32, #tpu.memory_space<vmem>>, %arg12: memref<64x1024xf32, #tpu.memory_space<vmem>>, %arg13: memref<1x1024xf32, #tpu.memory_space<vmem>>, %arg14: memref<2x1024xf32, #tpu.memory_space<vmem>>, %arg15: memref<2x32xf32, #tpu.memory_space<vmem>>) attributes {dimension_semantics = [#tpu.dimension_semantics<arbitrary>], iteration_bounds = array<i64: 1>, scalar_prefetch = 0 : i64, scratch_operands = 0 : i64, tpu.core_type = #tpu.core_type<tc>, window_params = [{pipeline_mode = #tpu.pipeline_mode<synchronous>, transform_indices = @transform_0, window_bounds = array<i64: 2, 512>}, {pipeline_mode = #tpu.pipeline_mode<synchronous>, transform_indices = @transform_1, window_bounds = array<i64: 512, 64>}, {pipeline_mode = #tpu.pipeline_mode<synchronous>, transform_indices = @transform_2, window_bounds = array<i64: 1, 64>}, {pipeline_mode = #tpu.pipeline_mode<synchronous>, transform_indices = @transform_3, window_bounds = array<i64: 2, 2>}, {pipeline_mode = #tpu.pipeline_mode<synchronous>, transform_indices = @transform_4, window_bounds = array<i64: 64, 128>}, {pipeline_mode = #tpu.pipeline_mode<synchronous>, transform_indices = @transform_5, window_bounds = array<i64: 1, 128>}, {pipeline_mode = #tpu.pipeline_mode<synchronous>, transform_indices = @transform_6, window_bounds = array<i64: 128, 32>}, {pipeline_mode = #tpu.pipeline_mode<synchronous>, transform_indices = @transform_7, window_bounds = array<i64: 1, 32>}, {pipeline_mode = #tpu.pipeline_mode<synchronous>, transform_indices = @transform_8, window_bounds = array<i64: 2, 16>}, {pipeline_mode = #tpu.pipeline_mode<synchronous>, transform_indices = @transform_9, window_bounds = array<i64: 16, 64>}, {pipeline_mode = #tpu.pipeline_mode<synchronous>, transform_indices = @transform_10, window_bounds = array<i64: 1, 64>}, {pipeline_mode = #tpu.pipeline_mode<synchronous>, transform_indices = @transform_11, window_bounds = array<i64: 64, 1024>}, {pipeline_mode = #tpu.pipeline_mode<synchronous>, transform_indices = @transform_12, window_bounds = array<i64: 1, 1024>}, {pipeline_mode = #tpu.pipeline_mode<synchronous>, transform_indices = @transform_13, window_bounds = array<i64: 2, 1024>}, {pipeline_mode = #tpu.pipeline_mode<synchronous>, transform_indices = @transform_14, window_bounds = array<i64: 2, 32>}]} {
    %c0 = arith.constant 0 : index
    %c0_0 = arith.constant 0 : index
    %0 = vector.load %arg1[%c0, %c0_0] : memref<2x512xf32, #tpu.memory_space<vmem>>, vector<2x512xf32>
    %c0_1 = arith.constant 0 : index
    %c0_2 = arith.constant 0 : index
    %1 = vector.load %arg2[%c0_1, %c0_2] : memref<512x64xf32, #tpu.memory_space<vmem>>, vector<512x64xf32>
    %cst = arith.constant dense<0.000000e+00> : vector<2x64xf32>
    %2 = tpu.matmul %0, %1, %cst {dimension_numbers = #tpu.dot_dimension_numbers<[1], [0], [0], [1], [0, 0, 1, 1], [], []>} : vector<2x512xf32>, vector<512x64xf32>, vector<2x64xf32> -> vector<2x64xf32>
    %c0_3 = arith.constant 0 : index
    %c0_4 = arith.constant 0 : index
    %3 = vector.load %arg3[%c0_3, %c0_4] : memref<1x64xf32, #tpu.memory_space<vmem>>, vector<1x64xf32>
    %4 = vector.broadcast %3 : vector<1x64xf32> to vector<2x64xf32>
    %5 = arith.addf %2, %4 : vector<2x64xf32>
    %cst_5 = arith.constant 0.000000e+00 : f32
    %6 = vector.broadcast %cst_5 : f32 to vector<2x64xf32>
    %7 = arith.maximumf %5, %6 : vector<2x64xf32>
    %c0_6 = arith.constant 0 : index
    %c0_7 = arith.constant 0 : index
    %8 = vector.load %arg4[%c0_6, %c0_7] : memref<2x2xf32, #tpu.memory_space<vmem>>, vector<2x2xf32>
    %cst_8 = arith.constant dense<0.000000e+00> : vector<2x64xf32>
    %9 = tpu.matmul %8, %7, %cst_8 {dimension_numbers = #tpu.dot_dimension_numbers<[1], [0], [0], [1], [0, 0, 1, 1], [], []>} : vector<2x2xf32>, vector<2x64xf32>, vector<2x64xf32> -> vector<2x64xf32>
    %c0_9 = arith.constant 0 : index
    %c0_10 = arith.constant 0 : index
    %10 = vector.load %arg5[%c0_9, %c0_10] : memref<64x128xf32, #tpu.memory_space<vmem>>, vector<64x128xf32>
    %cst_11 = arith.constant dense<0.000000e+00> : vector<2x128xf32>
    %11 = tpu.matmul %9, %10, %cst_11 {dimension_numbers = #tpu.dot_dimension_numbers<[1], [0], [0], [1], [0, 0, 1, 1], [], []>} : vector<2x64xf32>, vector<64x128xf32>, vector<2x128xf32> -> vector<2x128xf32>
    %c0_12 = arith.constant 0 : index
    %c0_13 = arith.constant 0 : index
    %12 = vector.load %arg6[%c0_12, %c0_13] : memref<1x128xf32, #tpu.memory_space<vmem>>, vector<1x128xf32>
    %13 = vector.broadcast %12 : vector<1x128xf32> to vector<2x128xf32>
    %14 = arith.addf %11, %13 : vector<2x128xf32>
    %c0_14 = arith.constant 0 : index
    %c0_15 = arith.constant 0 : index
    %15 = vector.load %arg7[%c0_14, %c0_15] : memref<128x32xf32, #tpu.memory_space<vmem>>, vector<128x32xf32>
    %cst_16 = arith.constant dense<0.000000e+00> : vector<2x32xf32>
    %16 = tpu.matmul %14, %15, %cst_16 {dimension_numbers = #tpu.dot_dimension_numbers<[1], [0], [0], [1], [0, 0, 1, 1], [], []>} : vector<2x128xf32>, vector<128x32xf32>, vector<2x32xf32> -> vector<2x32xf32>
    %c0_17 = arith.constant 0 : index
    %c0_18 = arith.constant 0 : index
    %17 = vector.load %arg8[%c0_17, %c0_18] : memref<1x32xf32, #tpu.memory_space<vmem>>, vector<1x32xf32>
    %18 = vector.broadcast %17 : vector<1x32xf32> to vector<2x32xf32>
    %19 = arith.addf %16, %18 : vector<2x32xf32>
    %20 = vector.extract_strided_slice %19 {offsets = [0, 0], sizes = [2, 16], strides = [1, 1]} : vector<2x32xf32> to vector<2x16xf32>
    %21 = vector.extract_strided_slice %19 {offsets = [0, 16], sizes = [2, 16], strides = [1, 1]} : vector<2x32xf32> to vector<2x16xf32>
    %c0_19 = arith.constant 0 : index
    %c0_20 = arith.constant 0 : index
    %22 = vector.load %arg9[%c0_19, %c0_20] : memref<2x16xf32, #tpu.memory_space<vmem>>, vector<2x16xf32>
    %cst_21 = arith.constant 5.000000e-01 : f32
    %23 = vector.broadcast %cst_21 : f32 to vector<2x16xf32>
    %24 = arith.mulf %23, %21 : vector<2x16xf32>
    %25 = math.exp %24 : vector<2x16xf32>
    %26 = arith.mulf %22, %25 : vector<2x16xf32>
    %27 = arith.addf %20, %26 : vector<2x16xf32>
    %c0_22 = arith.constant 0 : index
    %c0_23 = arith.constant 0 : index
    %28 = vector.load %arg10[%c0_22, %c0_23] : memref<16x64xf32, #tpu.memory_space<vmem>>, vector<16x64xf32>
    %cst_24 = arith.constant dense<0.000000e+00> : vector<2x64xf32>
    %29 = tpu.matmul %27, %28, %cst_24 {dimension_numbers = #tpu.dot_dimension_numbers<[1], [0], [0], [1], [0, 0, 1, 1], [], []>} : vector<2x16xf32>, vector<16x64xf32>, vector<2x64xf32> -> vector<2x64xf32>
    %c0_25 = arith.constant 0 : index
    %c0_26 = arith.constant 0 : index
    %30 = vector.load %arg11[%c0_25, %c0_26] : memref<1x64xf32, #tpu.memory_space<vmem>>, vector<1x64xf32>
    %31 = vector.broadcast %30 : vector<1x64xf32> to vector<2x64xf32>
    %32 = arith.addf %29, %31 : vector<2x64xf32>
    %c0_27 = arith.constant 0 : index
    %c0_28 = arith.constant 0 : index
    %33 = vector.load %arg12[%c0_27, %c0_28] : memref<64x1024xf32, #tpu.memory_space<vmem>>, vector<64x1024xf32>
    %cst_29 = arith.constant dense<0.000000e+00> : vector<2x1024xf32>
    %34 = tpu.matmul %32, %33, %cst_29 {dimension_numbers = #tpu.dot_dimension_numbers<[1], [0], [0], [1], [0, 0, 1, 1], [], []>} : vector<2x64xf32>, vector<64x1024xf32>, vector<2x1024xf32> -> vector<2x1024xf32>
    %c0_30 = arith.constant 0 : index
    %c0_31 = arith.constant 0 : index
    %35 = vector.load %arg13[%c0_30, %c0_31] : memref<1x1024xf32, #tpu.memory_space<vmem>>, vector<1x1024xf32>
    %36 = vector.broadcast %35 : vector<1x1024xf32> to vector<2x1024xf32>
    %37 = arith.addf %34, %36 : vector<2x1024xf32>
    %cst_32 = arith.constant 0.000000e+00 : f32
    %38 = vector.broadcast %cst_32 : f32 to vector<2x1024xf32>
    %39 = arith.maximumf %37, %38 : vector<2x1024xf32>
    %c0_33 = arith.constant 0 : index
    %c0_34 = arith.constant 0 : index
    %40 = vector.load %arg14[%c0_33, %c0_34] : memref<2x1024xf32, #tpu.memory_space<vmem>>, vector<2x1024xf32>
    tpu.vector_store %arg14[%c0_33, %c0_34], %39 {strides = array<i32>} : memref<2x1024xf32, #tpu.memory_space<vmem>>, vector<2x1024xf32>,
    %c0_35 = arith.constant 0 : index
    %c0_36 = arith.constant 0 : index
    %41 = vector.load %arg15[%c0_35, %c0_36] : memref<2x32xf32, #tpu.memory_space<vmem>>, vector<2x32xf32>
    tpu.vector_store %arg15[%c0_35, %c0_36], %19 {strides = array<i32>} : memref<2x32xf32, #tpu.memory_space<vmem>>, vector<2x32xf32>,
    return
  }
  func.func @transform_0(%arg0: i32) -> (i32, i32) {
    %c0_i32 = arith.constant 0 : i32
    %c0_i32_0 = arith.constant 0 : i32
    %c0_i32_1 = arith.constant 0 : i32
    return %c0_i32, %c0_i32_0 : i32, i32
  }
  func.func @transform_1(%arg0: i32) -> (i32, i32) {
    %c0_i32 = arith.constant 0 : i32
    %c0_i32_0 = arith.constant 0 : i32
    %c0_i32_1 = arith.constant 0 : i32
    return %c0_i32, %c0_i32_0 : i32, i32
  }
  func.func @transform_2(%arg0: i32) -> (i32, i32) {
    %c0_i32 = arith.constant 0 : i32
    %c0_i32_0 = arith.constant 0 : i32
    %c0_i32_1 = arith.constant 0 : i32
    return %c0_i32, %c0_i32_0 : i32, i32
  }
  func.func @transform_3(%arg0: i32) -> (i32, i32) {
    %c0_i32 = arith.constant 0 : i32
    %c0_i32_0 = arith.constant 0 : i32
    %c0_i32_1 = arith.constant 0 : i32
    return %c0_i32, %c0_i32_0 : i32, i32
  }
  func.func @transform_4(%arg0: i32) -> (i32, i32) {
    %c0_i32 = arith.constant 0 : i32
    %c0_i32_0 = arith.constant 0 : i32
    %c0_i32_1 = arith.constant 0 : i32
    return %c0_i32, %c0_i32_0 : i32, i32
  }
  func.func @transform_5(%arg0: i32) -> (i32, i32) {
    %c0_i32 = arith.constant 0 : i32
    %c0_i32_0 = arith.constant 0 : i32
    %c0_i32_1 = arith.constant 0 : i32
    return %c0_i32, %c0_i32_0 : i32, i32
  }
  func.func @transform_6(%arg0: i32) -> (i32, i32) {
    %c0_i32 = arith.constant 0 : i32
    %c0_i32_0 = arith.constant 0 : i32
    %c0_i32_1 = arith.constant 0 : i32
    return %c0_i32, %c0_i32_0 : i32, i32
  }
  func.func @transform_7(%arg0: i32) -> (i32, i32) {
    %c0_i32 = arith.constant 0 : i32
    %c0_i32_0 = arith.constant 0 : i32
    %c0_i32_1 = arith.constant 0 : i32
    return %c0_i32, %c0_i32_0 : i32, i32
  }
  func.func @transform_8(%arg0: i32) -> (i32, i32) {
    %c0_i32 = arith.constant 0 : i32
    %c0_i32_0 = arith.constant 0 : i32
    %c0_i32_1 = arith.constant 0 : i32
    return %c0_i32, %c0_i32_0 : i32, i32
  }
  func.func @transform_9(%arg0: i32) -> (i32, i32) {
    %c0_i32 = arith.constant 0 : i32
    %c0_i32_0 = arith.constant 0 : i32
    %c0_i32_1 = arith.constant 0 : i32
    return %c0_i32, %c0_i32_0 : i32, i32
  }
  func.func @transform_10(%arg0: i32) -> (i32, i32) {
    %c0_i32 = arith.constant 0 : i32
    %c0_i32_0 = arith.constant 0 : i32
    %c0_i32_1 = arith.constant 0 : i32
    return %c0_i32, %c0_i32_0 : i32, i32
  }
  func.func @transform_11(%arg0: i32) -> (i32, i32) {
    %c0_i32 = arith.constant 0 : i32
    %c0_i32_0 = arith.constant 0 : i32
    %c0_i32_1 = arith.constant 0 : i32
    return %c0_i32, %c0_i32_0 : i32, i32
  }
  func.func @transform_12(%arg0: i32) -> (i32, i32) {
    %c0_i32 = arith.constant 0 : i32
    %c0_i32_0 = arith.constant 0 : i32
    %c0_i32_1 = arith.constant 0 : i32
    return %c0_i32, %c0_i32_0 : i32, i32
  }
  func.func @transform_13(%arg0: i32) -> (i32, i32) {
    %c0_i32 = arith.constant 0 : i32
    %c0_i32_0 = arith.constant 0 : i32
    %c0_i32_1 = arith.constant 0 : i32
    return %c0_i32, %c0_i32_0 : i32, i32
  }
  func.func @transform_14(%arg0: i32) -> (i32, i32) {
    %c0_i32 = arith.constant 0 : i32
    %c0_i32_0 = arith.constant 0 : i32
    %c0_i32_1 = arith.constant 0 : i32
    return %c0_i32, %c0_i32_0 : i32, i32
  }
}

module attributes {stable_mosaic.version = 11 : i64} {
  func.func @_mm_bias_act_kernel(%arg0: i32, %arg1: memref<32x576xbf16, #tpu.memory_space<vmem>>, %arg2: memref<576x128xbf16, #tpu.memory_space<vmem>>, %arg3: memref<1x128xf32, #tpu.memory_space<vmem>>, %arg4: memref<32x128xf32, #tpu.memory_space<vmem>>) attributes {dimension_semantics = [#tpu.dimension_semantics<parallel>], iteration_bounds = array<i64: 1>, scalar_prefetch = 0 : i64, scratch_operands = 0 : i64, tpu.core_type = #tpu.core_type<tc>, window_params = [{transform_indices = @transform_0, window_bounds = array<i64: 32, 576>}, {pipeline_mode = #tpu.pipeline_mode<synchronous>, transform_indices = @transform_1, window_bounds = array<i64: 576, 128>}, {pipeline_mode = #tpu.pipeline_mode<synchronous>, transform_indices = @transform_2, window_bounds = array<i64: 1, 128>}, {transform_indices = @transform_3, window_bounds = array<i64: 32, 128>}]} {
    %c0 = arith.constant 0 : index
    %c0_0 = arith.constant 0 : index
    %0 = vector.load %arg1[%c0, %c0_0] : memref<32x576xbf16, #tpu.memory_space<vmem>>, vector<32x576xbf16>
    %c0_1 = arith.constant 0 : index
    %c0_2 = arith.constant 0 : index
    %1 = vector.load %arg2[%c0_1, %c0_2] : memref<576x128xbf16, #tpu.memory_space<vmem>>, vector<576x128xbf16>
    %cst = arith.constant dense<0.000000e+00> : vector<32x128xf32>
    %2 = tpu.matmul %0, %1, %cst {dimension_numbers = #tpu.dot_dimension_numbers<[1], [0], [0], [1], [0, 0, 1, 1], [], []>} : vector<32x576xbf16>, vector<576x128xbf16>, vector<32x128xf32> -> vector<32x128xf32>
    %c0_3 = arith.constant 0 : index
    %c0_4 = arith.constant 0 : index
    %3 = vector.load %arg3[%c0_3, %c0_4] : memref<1x128xf32, #tpu.memory_space<vmem>>, vector<1x128xf32>
    %4 = vector.broadcast %3 : vector<1x128xf32> to vector<32x128xf32>
    %5 = arith.addf %2, %4 : vector<32x128xf32>
    %cst_5 = arith.constant 0.000000e+00 : f32
    %6 = vector.broadcast %cst_5 : f32 to vector<32x128xf32>
    %7 = arith.maximumf %5, %6 : vector<32x128xf32>
    %c0_6 = arith.constant 0 : index
    %c0_7 = arith.constant 0 : index
    %8 = vector.load %arg4[%c0_6, %c0_7] : memref<32x128xf32, #tpu.memory_space<vmem>>, vector<32x128xf32>
    tpu.vector_store %arg4[%c0_6, %c0_7], %7 {strides = array<i32>} : memref<32x128xf32, #tpu.memory_space<vmem>>, vector<32x128xf32>,
    return
  }
  func.func @transform_0(%arg0: i32) -> (i32, i32) {
    %c0_i32 = arith.constant 0 : i32
    %c0_i32_0 = arith.constant 0 : i32
    return %arg0, %c0_i32 : i32, i32
  }
  func.func @transform_1(%arg0: i32) -> (i32, i32) {
    %c0_i32 = arith.constant 0 : i32
    %c0_i32_0 = arith.constant 0 : i32
    %c0_i32_1 = arith.constant 0 : i32
    return %c0_i32, %c0_i32_0 : i32, i32
  }
  func.func @transform_2(%arg0: i32) -> (i32, i32) {
    %c0_i32 = arith.constant 0 : i32
    %c0_i32_0 = arith.constant 0 : i32
    %c0_i32_1 = arith.constant 0 : i32
    return %c0_i32, %c0_i32_0 : i32, i32
  }
  func.func @transform_3(%arg0: i32) -> (i32, i32) {
    %c0_i32 = arith.constant 0 : i32
    %c0_i32_0 = arith.constant 0 : i32
    return %arg0, %c0_i32 : i32, i32
  }
}

module attributes {stable_mosaic.version = 11 : i64} {
  func.func @_mm_bias_act_kernel(%arg0: i32, %arg1: memref<128x288xbf16, #tpu.memory_space<vmem>>, %arg2: memref<288x64xbf16, #tpu.memory_space<vmem>>, %arg3: memref<1x64xf32, #tpu.memory_space<vmem>>, %arg4: memref<128x64xf32, #tpu.memory_space<vmem>>) attributes {dimension_semantics = [#tpu.dimension_semantics<parallel>], iteration_bounds = array<i64: 1>, scalar_prefetch = 0 : i64, scratch_operands = 0 : i64, tpu.core_type = #tpu.core_type<tc>, window_params = [{transform_indices = @transform_0, window_bounds = array<i64: 128, 288>}, {pipeline_mode = #tpu.pipeline_mode<synchronous>, transform_indices = @transform_1, window_bounds = array<i64: 288, 64>}, {pipeline_mode = #tpu.pipeline_mode<synchronous>, transform_indices = @transform_2, window_bounds = array<i64: 1, 64>}, {transform_indices = @transform_3, window_bounds = array<i64: 128, 64>}]} {
    %c0 = arith.constant 0 : index
    %c0_0 = arith.constant 0 : index
    %0 = vector.load %arg1[%c0, %c0_0] : memref<128x288xbf16, #tpu.memory_space<vmem>>, vector<128x288xbf16>
    %c0_1 = arith.constant 0 : index
    %c0_2 = arith.constant 0 : index
    %1 = vector.load %arg2[%c0_1, %c0_2] : memref<288x64xbf16, #tpu.memory_space<vmem>>, vector<288x64xbf16>
    %cst = arith.constant dense<0.000000e+00> : vector<128x64xf32>
    %2 = tpu.matmul %0, %1, %cst {dimension_numbers = #tpu.dot_dimension_numbers<[1], [0], [0], [1], [0, 0, 1, 1], [], []>} : vector<128x288xbf16>, vector<288x64xbf16>, vector<128x64xf32> -> vector<128x64xf32>
    %c0_3 = arith.constant 0 : index
    %c0_4 = arith.constant 0 : index
    %3 = vector.load %arg3[%c0_3, %c0_4] : memref<1x64xf32, #tpu.memory_space<vmem>>, vector<1x64xf32>
    %4 = vector.broadcast %3 : vector<1x64xf32> to vector<128x64xf32>
    %5 = arith.addf %2, %4 : vector<128x64xf32>
    %cst_5 = arith.constant 0.000000e+00 : f32
    %6 = vector.broadcast %cst_5 : f32 to vector<128x64xf32>
    %7 = arith.maximumf %5, %6 : vector<128x64xf32>
    %c0_6 = arith.constant 0 : index
    %c0_7 = arith.constant 0 : index
    %8 = vector.load %arg4[%c0_6, %c0_7] : memref<128x64xf32, #tpu.memory_space<vmem>>, vector<128x64xf32>
    tpu.vector_store %arg4[%c0_6, %c0_7], %7 {strides = array<i32>} : memref<128x64xf32, #tpu.memory_space<vmem>>, vector<128x64xf32>,
    return
  }
  func.func @transform_0(%arg0: i32) -> (i32, i32) {
    %c0_i32 = arith.constant 0 : i32
    %c0_i32_0 = arith.constant 0 : i32
    return %arg0, %c0_i32 : i32, i32
  }
  func.func @transform_1(%arg0: i32) -> (i32, i32) {
    %c0_i32 = arith.constant 0 : i32
    %c0_i32_0 = arith.constant 0 : i32
    %c0_i32_1 = arith.constant 0 : i32
    return %c0_i32, %c0_i32_0 : i32, i32
  }
  func.func @transform_2(%arg0: i32) -> (i32, i32) {
    %c0_i32 = arith.constant 0 : i32
    %c0_i32_0 = arith.constant 0 : i32
    %c0_i32_1 = arith.constant 0 : i32
    return %c0_i32, %c0_i32_0 : i32, i32
  }
  func.func @transform_3(%arg0: i32) -> (i32, i32) {
    %c0_i32 = arith.constant 0 : i32
    %c0_i32_0 = arith.constant 0 : i32
    return %arg0, %c0_i32 : i32, i32
  }
}

module attributes {stable_mosaic.version = 11 : i64} {
  func.func @_mm_t_bias_act_kernel(%arg0: i32, %arg1: memref<4x144xbf16, #tpu.memory_space<vmem>>, %arg2: memref<144x256xbf16, #tpu.memory_space<vmem>>, %arg3: memref<4x1xf32, #tpu.memory_space<vmem>>, %arg4: memref<4x256xf32, #tpu.memory_space<vmem>>) attributes {dimension_semantics = [#tpu.dimension_semantics<parallel>], iteration_bounds = array<i64: 2>, scalar_prefetch = 0 : i64, scratch_operands = 0 : i64, tpu.core_type = #tpu.core_type<tc>, window_params = [{pipeline_mode = #tpu.pipeline_mode<synchronous>, transform_indices = @transform_0, window_bounds = array<i64: 4, 144>}, {transform_indices = @transform_1, window_bounds = array<i64: 144, 256>}, {pipeline_mode = #tpu.pipeline_mode<synchronous>, transform_indices = @transform_2, window_bounds = array<i64: 4, 1>}, {transform_indices = @transform_3, window_bounds = array<i64: 4, 256>}]} {
    %c0 = arith.constant 0 : index
    %c0_0 = arith.constant 0 : index
    %0 = vector.load %arg1[%c0, %c0_0] : memref<4x144xbf16, #tpu.memory_space<vmem>>, vector<4x144xbf16>
    %c0_1 = arith.constant 0 : index
    %c0_2 = arith.constant 0 : index
    %1 = vector.load %arg2[%c0_1, %c0_2] : memref<144x256xbf16, #tpu.memory_space<vmem>>, vector<144x256xbf16>
    %cst = arith.constant dense<0.000000e+00> : vector<4x256xf32>
    %2 = tpu.matmul %0, %1, %cst {dimension_numbers = #tpu.dot_dimension_numbers<[1], [0], [0], [1], [0, 0, 1, 1], [], []>} : vector<4x144xbf16>, vector<144x256xbf16>, vector<4x256xf32> -> vector<4x256xf32>
    %c0_3 = arith.constant 0 : index
    %c0_4 = arith.constant 0 : index
    %3 = vector.load %arg3[%c0_3, %c0_4] : memref<4x1xf32, #tpu.memory_space<vmem>>, vector<4x1xf32>
    %4 = vector.broadcast %3 : vector<4x1xf32> to vector<4x256xf32>
    %5 = arith.addf %2, %4 : vector<4x256xf32>
    %cst_5 = arith.constant 0.000000e+00 : f32
    %6 = vector.broadcast %cst_5 : f32 to vector<4x256xf32>
    %7 = arith.subf %6, %5 : vector<4x256xf32>
    %8 = math.exp %7 : vector<4x256xf32>
    %cst_6 = arith.constant 1.000000e+00 : f32
    %9 = vector.broadcast %cst_6 : f32 to vector<4x256xf32>
    %10 = arith.addf %9, %8 : vector<4x256xf32>
    %11 = tpu.reciprocal %10 {approx = true} : vector<4x256xf32> -> vector<4x256xf32>
    %cst_7 = arith.constant 0.000000e+00 : f32
    %cst_8 = arith.constant 1.000000e+00 : f32
    %12 = vector.broadcast %cst_7 : f32 to vector<4x256xf32>
    %13 = arith.maximumf %12, %11 : vector<4x256xf32>
    %14 = vector.broadcast %cst_8 : f32 to vector<4x256xf32>
    %15 = arith.minimumf %14, %13 : vector<4x256xf32>
    %c0_9 = arith.constant 0 : index
    %c0_10 = arith.constant 0 : index
    %16 = vector.load %arg4[%c0_9, %c0_10] : memref<4x256xf32, #tpu.memory_space<vmem>>, vector<4x256xf32>
    tpu.vector_store %arg4[%c0_9, %c0_10], %15 {strides = array<i32>} : memref<4x256xf32, #tpu.memory_space<vmem>>, vector<4x256xf32>,
    return
  }
  func.func @transform_0(%arg0: i32) -> (i32, i32) {
    %c0_i32 = arith.constant 0 : i32
    %c0_i32_0 = arith.constant 0 : i32
    %c0_i32_1 = arith.constant 0 : i32
    return %c0_i32, %c0_i32_0 : i32, i32
  }
  func.func @transform_1(%arg0: i32) -> (i32, i32) {
    %c0_i32 = arith.constant 0 : i32
    %c0_i32_0 = arith.constant 0 : i32
    return %c0_i32, %arg0 : i32, i32
  }
  func.func @transform_2(%arg0: i32) -> (i32, i32) {
    %c0_i32 = arith.constant 0 : i32
    %c0_i32_0 = arith.constant 0 : i32
    %c0_i32_1 = arith.constant 0 : i32
    return %c0_i32, %c0_i32_0 : i32, i32
  }
  func.func @transform_3(%arg0: i32) -> (i32, i32) {
    %c0_i32 = arith.constant 0 : i32
    %c0_i32_0 = arith.constant 0 : i32
    return %c0_i32, %arg0 : i32, i32
  }
}

</mosaic_0001>

<llo_original>
// kernel: vae_forward.7
$region0: #{vae_forward.7}
  #allocation0 [shape = 'u32[]', space=smem, size = 0x4, offset = 0x4, fixed_abs, tag = 'smem constant byte address 0x4 - core index']
  #allocation1 [shape = 'u32[144,128]{1,0:T(1,128)}', space=vmem, size = 0x12000, scoped, tag = 'internal scratch']
  %s0 = inlined_call_operand.vmem [shape: bf16[8,16], index: 0, kind: input, shape index: {}]
  %s1 = inlined_call_operand.vmem [shape: bf16[16,512], index: 1, kind: input, shape index: {}]
  %s2 = inlined_call_operand.vmem [shape: f32[8,1], index: 2, kind: input, shape index: {}]
  %s3 = inlined_call_operand.vmem [shape: f32[8,512], index: 3, kind: output, shape index: {}]
  %s4 = sld [smem:[#allocation0]]
  $region83: #{vae_forward.7} parent=0
    _
  %s6 = ssub.s32 1, %s4
  %s7 = scalar_select 0, %s6, %s4
  $region1: #{vae_forward.7} parent=0
    #allocation2 [shape = 'u8[16384]{0}', space=vmem, size = 0x4000, scoped, tag = 'input window, operand 1']
    loop: start=0, step=1, limit=4
    $region2: #{vae_forward.7} parent=1 // loop_pre_header
      _
    $region3: #{vae_forward.7} parent=1 // loop_header
      %s9 = sphi 0, %s13
      %p10 = scmp.ge.s32.totalorder %s9, 4
      %s17 = sphi 0, %s17
      %s19 = sphi 0, %s17
      %s20 = sphi 0, %s19
      %s34 = sphi 0, %s20
      %s40 = sphi 0, %s42
      %s43 = sphi 0, %s40
      %s44 = sphi 0, %s43
      %s60 = sphi 0, %s44
      %s64 = sphi 0, %s64
      %s66 = sphi 0, %s64
      %s67 = sphi 0, %s66
      %s81 = sphi 0, %s67
      %s87 = sphi 0, %s89
      %s90 = sphi 0, %s87
      %s91 = sphi 0, %s90
      %s107 = sphi 0, %s91
    $region4: #{vae_forward.7} parent=1 // loop_header_branch
      %12 = sbr.rel (%p10) target = $region8
    $region5: #{vae_forward.7} parent=1 // loop_body
      %s14 = ssub.s32 %s9, 1
      %s15 = ssub.s32 %s9, 2
      %s16 = sadd.s32 %s9, 1
      %s18 = sadd.s32 %s17, 1
      %p21 = scmp.eq.s32.totalorder %s9, 1
      %p22 = scmp.ne.s32.totalorder %s17, %s19
      %p23 = scmp.eq.s32.totalorder %s9, 0
      %p24 = por %p22, %p23
      %p25 = scmp.ne.s32.totalorder %s17, %s19
      %p26 = scmp.eq.s32.totalorder %s14, 1
      %p27 = por %p25, %p26
      %p28 = scmp.ne.s32.totalorder %s19, %s20
      %p29 = scmp.eq.s32.totalorder %s14, 0
      %p30 = por %p28, %p29
      %p31 = scmp.ne.s32.totalorder %s19, %s20
      %p32 = scmp.eq.s32.totalorder %s15, 1
      %p33 = por %p31, %p32
      %p35 = scmp.ne.s32.totalorder %s20, %s34
      %p36 = scmp.eq.s32.totalorder %s15, 0
      %p37 = por %p35, %p36
      %s38 = ssub.s32 %s9, %s16
      %p39 = scmp.eq.s32.totalorder %s38, 0
      %s41 = sadd.s32 %s40, 1
      %s42 = scalar_select %p39, %s40, %s41
      %p45 = pneg %p39
      %p46 = scmp.eq.s32.totalorder %s9, 1
      %p47 = por %p45, %p46
      %p48 = scmp.ne.s32.totalorder %s40, %s43
      %p49 = scmp.eq.s32.totalorder %s9, 0
      %p50 = por %p48, %p49
      %p51 = scmp.ne.s32.totalorder %s40, %s43
      %p52 = scmp.eq.s32.totalorder %s14, 1
      %p53 = por %p51, %p52
      %p54 = scmp.ne.s32.totalorder %s43, %s44
      %p55 = scmp.eq.s32.totalorder %s14, 0
      %p56 = por %p54, %p55
      %p57 = scmp.ne.s32.totalorder %s43, %s44
      %p58 = scmp.eq.s32.totalorder %s15, 1
      %p59 = por %p57, %p58
      %p61 = scmp.ne.s32.totalorder %s44, %s60
      %p62 = scmp.eq.s32.totalorder %s15, 0
      %p63 = por %p61, %p62
      %s65 = sadd.s32 %s64, 1
      %p68 = scmp.eq.s32.totalorder %s9, 1
      %p69 = scmp.ne.s32.totalorder %s64, %s66
      %p70 = scmp.eq.s32.totalorder %s9, 0
      %p71 = por %p69, %p70
      %p72 = scmp.ne.s32.totalorder %s64, %s66
      %p73 = scmp.eq.s32.totalorder %s14, 1
      %p74 = por %p72, %p73
      %p75 = scmp.ne.s32.totalorder %s66, %s67
      %p76 = scmp.eq.s32.totalorder %s14, 0
      %p77 = por %p75, %p76
      %p78 = scmp.ne.s32.totalorder %s66, %s67
      %p79 = scmp.eq.s32.totalorder %s15, 1
      %p80 = por %p78, %p79
      %p82 = scmp.ne.s32.totalorder %s67, %s81
      %p83 = scmp.eq.s32.totalorder %s15, 0
      %p84 = por %p82, %p83
      %s85 = ssub.s32 %s9, %s16
      %p86 = scmp.eq.s32.totalorder %s85, 0
      %s88 = sadd.s32 %s87, 1
      %s89 = scalar_select %p86, %s87, %s88
      %p92 = pneg %p86
      %p93 = scmp.eq.s32.totalorder %s9, 1
      %p94 = por %p92, %p93
      %p95 = scmp.ne.s32.totalorder %s87, %s90
      %p96 = scmp.eq.s32.totalorder %s9, 0
      %p97 = por %p95, %p96
      %p98 = scmp.ne.s32.totalorder %s87, %s90
      %p99 = scmp.eq.s32.totalorder %s14, 1
      %p100 = por %p98, %p99
      %p101 = scmp.ne.s32.totalorder %s90, %s91
      %p102 = scmp.eq.s32.totalorder %s14, 0
      %p103 = por %p101, %p102
      %p104 = scmp.ne.s32.totalorder %s90, %s91
      %p105 = scmp.eq.s32.totalorder %s15, 1
      %p106 = por %p104, %p105
      %p108 = scmp.ne.s32.totalorder %s91, %s107
      %p109 = scmp.eq.s32.totalorder %s15, 0
      %p110 = por %p108, %p109
      %p111 = scmp.le.s32.totalorder 1, %s9
      %p112 = scmp.lt.s32.totalorder %s9, 3
      %p113 = pnand %p111, %p112
      %p114 = pneg %p113
      // Predicated region
      $region9: #{vae_forward.7} parent=5 // pred_check
        _
      $region10: #{vae_forward.7} parent=5 // pred_check_branch
        %116 = sbr.rel (%p113) target = $region12
      $region11: #{vae_forward.7} parent=5 // pred_region
        %s117 = ssub.s32 %s9, 1
        // Predicated region
        $region13: #{vae_forward.7} parent=11 // pred_check
          %p118 = pneg %p30
        $region14: #{vae_forward.7} parent=11 // pred_check_branch
          %120 = sbr.rel (%p118) target = $region16
        $region15: #{vae_forward.7} parent=11 // pred_region
          _
        $region16: #{vae_forward.7} parent=11 // pred_fallthru
          _
        // Predicated region
        $region17: #{vae_forward.7} parent=11 // pred_check
          %p121 = pneg %p77
        $region18: #{vae_forward.7} parent=11 // pred_check_branch
          %123 = sbr.rel (%p121) target = $region20
        $region19: #{vae_forward.7} parent=11 // pred_region
          _
        $region20: #{vae_forward.7} parent=11 // pred_fallthru
          _
      $region12: #{vae_forward.7} parent=5 // pred_fallthru
        _
      %p124 = scmp.lt.s32.totalorder %s9, 2
      // Predicated region
      $region21: #{vae_forward.7} parent=5 // pred_check
        %p125 = pneg %p124
      $region22: #{vae_forward.7} parent=5 // pred_check_branch
        %127 = sbr.rel (%p125) target = $region24
      $region23: #{vae_forward.7} parent=5 // pred_region
        // Predicated region
        $region25: #{vae_forward.7} parent=23 // pred_check
          %p128 = pneg %p50
        $region26: #{vae_forward.7} parent=23 // pred_check_branch
          %130 = sbr.rel (%p128) target = $region28
        $region27: #{vae_forward.7} parent=23 // pred_region
          %s131 = sand.u32 %s40, 1
          %s132 = sand.u32 %s40, 1
          %s133 = smul.addr %s132, 16
          %s134 = scalar_lea.vmem [#allocation2], %s133
          %s135 = smul.u32 2, %s9
          %s136 = smul.addr %s135, 4
          %s137 = scalar_lea.vmem %s1, %s136
          // Predicated region
          $region29: #{vae_forward.7} parent=27 // pred_check
            _
          $region30: #{vae_forward.7} parent=27 // pred_check_branch
            %139 = sbr.rel (0) target = $region32
          $region31: #{vae_forward.7} parent=27 // pred_region
            // Predicated region
            $region33: #{vae_forward.7} parent=31 // pred_check
              _
            $region34: #{vae_forward.7} parent=31 // pred_check_branch
              %141 = sbr.rel (0) target = $region36
            $region35: #{vae_forward.7} parent=31 // pred_region
              // Predicated region
              $region48: #{vae_forward.7} parent=35 // pred_check
                _
              $region49: #{vae_forward.7} parent=35 // pred_check_branch
                %159 = sbr.rel (0) target = $region51
              $region50: #{vae_forward.7} parent=35 // pred_region
                loop: start=0, step=1, limit=1
                $region52: #{vae_forward.7} parent=50 // loop_pre_header
                  _
                $region53: #{vae_forward.7} parent=50 // loop_header
                  %s161 = sphi 0, %s165
                  %p162 = scmp.ge.s32.totalorder %s161, 1
                  %s166 = sphi %s137, %s137
                  %s167 = sphi %s134, %s134
                $region54: #{vae_forward.7} parent=50 // loop_header_branch
                  %164 = sbr.rel (%p162) target = $region58
                $region55: #{vae_forward.7} parent=50 // loop_body
                  %v168 = vld [vmem:[%s166] sm:$0xff]
                  %169 = vst [vmem:[%s167] sm:$0xff] %v168
                  %v170 = vld [vmem:[%s166 + $0x10] sm:$0xff]
                  %171 = vst [vmem:[%s167 + $0x8] sm:$0xff] %v170
                $region56: #{vae_forward.7} parent=50 // loop_footer
                  %s165 = sadd.s32 1, %s161
                $region57: #{vae_forward.7} parent=50 // loop_footer_branch
                  %160 = sbr.rel target = $region53
                $region58: #{vae_forward.7} parent=50 // loop_exit
                  _
              $region51: #{vae_forward.7} parent=35 // pred_fallthru
                _
              // Predicated region
              $region59: #{vae_forward.7} parent=35 // pred_check
                _
              $region60: #{vae_forward.7} parent=35 // pred_check_branch
                %173 = sbr.rel target = $region62
              $region61: #{vae_forward.7} parent=35 // pred_region
                _
              $region62: #{vae_forward.7} parent=35 // pred_fallthru
                _
            $region36: #{vae_forward.7} parent=31 // pred_fallthru
              _
            // Predicated region
            $region37: #{vae_forward.7} parent=31 // pred_check
              _
            $region38: #{vae_forward.7} parent=31 // pred_check_branch
              %143 = sbr.rel target = $region40
            $region39: #{vae_forward.7} parent=31 // pred_region
              %s145 = ssub.s32 256, 1
              loop: start=0, step=1, limit=1
              $region41: #{vae_forward.7} parent=39 // loop_pre_header
                _
              $region42: #{vae_forward.7} parent=39 // loop_header
                %s147 = sphi 0, %s151
                %p148 = scmp.ge.s32.totalorder %s147, 1
                %s152 = sphi %s137, %s137
                %s153 = sphi %s134, %s134
              $region43: #{vae_forward.7} parent=39 // loop_header_branch
                %150 = sbr.rel (%p148) target = $region47
              $region44: #{vae_forward.7} parent=39 // loop_body
                %v154 = vld [vmem:[%s152] sm:%s145]
                %155 = vst [vmem:[%s153] sm:%s145] %v154
                %v156 = vld [vmem:[%s152 + $0x10] sm:%s145]
                %157 = vst [vmem:[%s153 + $0x8] sm:%s145] %v156
              $region45: #{vae_forward.7} parent=39 // loop_footer
                %s151 = sadd.s32 1, %s147
              $region46: #{vae_forward.7} parent=39 // loop_footer_branch
                %146 = sbr.rel target = $region42
              $region47: #{vae_forward.7} parent=39 // loop_exit
                _
            $region40: #{vae_forward.7} parent=31 // pred_fallthru
              _
          $region32: #{vae_forward.7} parent=27 // pred_fallthru
            _
          %174 = vnop
        $region28: #{vae_forward.7} parent=23 // pred_fallthru
          _
      $region24: #{vae_forward.7} parent=5 // pred_fallthru
        _
      %p175 = scmp.le.s32.totalorder 1, %s9
      %p176 = scmp.lt.s32.totalorder %s9, 3
      %p177 = pnand %p175, %p176
      %p178 = pneg %p177
      // Predicated region
      $region63: #{vae_forward.7} parent=5 // pred_check
        _
      $region64: #{vae_forward.7} parent=5 // pred_check_branch
        %180 = sbr.rel (%p177) target = $region66
      $region65: #{vae_forward.7} parent=5 // pred_region
        %s181 = ssub.s32 %s9, 1
        %s182 = sand.u32 %s43, 1
        %s183 = sand.u32 %s43, 1
        %s184 = smul.addr %s183, 16
        %s185 = scalar_lea.vmem [#allocation2], %s184
        // Predicated region
        $region67: #{vae_forward.7} parent=65 // pred_check
          %p186 = pneg %p56
        $region68: #{vae_forward.7} parent=65 // pred_check_branch
          %188 = sbr.rel (%p186) target = $region70
        $region69: #{vae_forward.7} parent=65 // pred_region
          _
        $region70: #{vae_forward.7} parent=65 // pred_fallthru
          _
        %p189 = pneg %p30
        %p190 = pneg %p27
        %s191 = sand.u32 %s43, 1
        %s192 = sand.u32 %s43, 1
        %s193 = smul.addr %s192, 16
        %s194 = scalar_lea.vmem [#allocation2], %s193
        %p195 = pneg %p56
        %p196 = pneg %p53
        %p197 = pneg %p77
        %p198 = pneg %p74
        %p199 = pneg %p103
        %p200 = pneg %p100
        %s201 = smul.u32 2, %s14
        %p202 = scmp.lt.s32.totalorder %s201, 3
        %s203 = scalar_select %p202, %s201, 3
        %s204 = smul.addr %s203, 8
        %s205 = scalar_lea.vmem %s3, %s204
        %s206 = smul.u32 2, %s14
        %s207 = smul.u32 2, %s14
        %p208 = scmp.lt.s32.totalorder %s207, 3
        %s209 = scalar_select %p208, %s207, 3
        %s210 = smul.addr %s209, 8
        %s211 = scalar_lea.vmem %s3, %s210
        %s212 = smul.u32 2, %s14
        %v214 = vld [vmem:[%s0] sm:$0xf]
        %v215 = vld [vmem:[%s185] sm:$0xff]
        %v216 = vld [vmem:[%s185 + $0x8] sm:$0xff]
        %v217 = vld [vmem:[%s2] sm:$0xff]
        %219 = vset.pattern.permute.xlu0 0
        %220 = vperm.xlu0 %219, %v217
        %v221 = vpop.permute.xlu0 %220
        %v225 = vunpack.c.l.b16 %v215
        %v226 = vunpack.c.h.b16 %v215
        %v227 = vunpack.c.l.b16 %v216
        %v228 = vunpack.c.h.b16 %v216
        %v229 = vpack.c.b16 %v227, %v225
        %v230 = vpack.c.b16 %v228, %v226
        %vm233 = vcmask 130048
        %v235 = vsel %vm233, %v214, 0
        %237 = vmatprep.subr.bf16.mxu0 0
        %238 = vmatpush1.bf16.msra.mxu0 0
        %239 = vmatprep.subr.bf16.mxu0 0
        %240 = vmatpush1.bf16.msra.mxu0 0
        %241 = vmatprep.subr.bf16.mxu0 0
        %242 = vmatpush1.bf16.msra.mxu0 0
        %243 = vmatprep.subr.bf16.mxu0 0
        %244 = vmatpush1.bf16.msra.mxu0 0
        %245 = vmatprep.subr.bf16.mxu0 0
        %246 = vmatpush1.bf16.msra.mxu0 0
        %247 = vmatprep.subr.bf16.mxu0 0
        %248 = vmatpush1.bf16.msra.mxu0 0
        %249 = vmatprep.subr.bf16.mxu0 0
        %250 = vmatpush1.bf16.msra.mxu0 0
        %251 = vmatprep.subr.bf16.mxu0 %v230
        %252 = vmatpush1.bf16.msra.mxu0 %v229
        %253 = vmatprep.subr.bf16.mxu0 0
        %254 = vmatpush2.bf16.msra.mxu0 0
        %255 = vmatprep.subr.bf16.mxu0 0
        %256 = vmatpush2.bf16.msra.mxu0 0
        %257 = vmatprep.subr.bf16.mxu0 0
        %258 = vmatpush2.bf16.msra.mxu0 0
        %259 = vmatprep.subr.bf16.mxu0 0
        %260 = vmatpush2.bf16.msra.mxu0 0
        %261 = vmatprep.subr.bf16.mxu0 0
        %262 = vmatpush2.bf16.msra.mxu0 0
        %263 = vmatprep.subr.bf16.mxu0 0
        %264 = vmatpush2.bf16.msra.mxu0 0
        %265 = vmatprep.subr.bf16.mxu0 0
        %266 = vmatpush2.bf16.msra.mxu0 0
        %267 = vmatprep.subr.bf16.mxu0 0
        %268 = vmatpush2.bf16.msra.mxu0 0
        %269 = vmatprep.mubr.bf16.mxu0 0
        %270 = vmatmul.mubr.bf16.gmra.mxu0 %v235
        %v271 = vpop.f32.mrf.mxu0
        %v272 = vadd.f32 %v221, %v271
        %v273 = vpop.f32.mrf.mxu0
        %v274 = vadd.f32 %v221, %v273
        %v275 = vpop.f32.mrf.mxu0
        %v276 = vpop.f32.mrf.mxu0
        %277 = vdwg.mxu0
        %v278 = vmax.f32 %v272, 0.0
        %v279 = vmax.f32 %v274, 0.0
        %280 = vst [vmem:[%s211] sm:$0xff] %v278
        %281 = vst [vmem:[%s211 + $0x8] sm:$0xff] %v279
        %s282 = smul.u32 2, %s14
        %p283 = scmp.lt.s32.totalorder %s282, 3
        %s284 = scalar_select %p283, %s282, 3
        %s285 = smul.addr %s284, 8
        %s286 = scalar_lea.vmem %s3, %s285
        // Predicated region
        $region71: #{vae_forward.7} parent=65 // pred_check
          %p287 = pneg %p100
        $region72: #{vae_forward.7} parent=65 // pred_check_branch
          %289 = sbr.rel (%p287) target = $region74
        $region73: #{vae_forward.7} parent=65 // pred_region
          %s290 = smul.u32 2, %s14
        $region74: #{vae_forward.7} parent=65 // pred_fallthru
          _
      $region66: #{vae_forward.7} parent=5 // pred_fallthru
        _
      %p291 = scmp.le.s32.totalorder 2, %s9
      // Predicated region
      $region75: #{vae_forward.7} parent=5 // pred_check
        %p292 = pneg %p291
      $region76: #{vae_forward.7} parent=5 // pred_check_branch
        %294 = sbr.rel (%p292) target = $region78
      $region77: #{vae_forward.7} parent=5 // pred_region
        %s295 = ssub.s32 %s9, 2
        // Predicated region
        $region79: #{vae_forward.7} parent=77 // pred_check
          %p296 = pneg %p106
        $region80: #{vae_forward.7} parent=77 // pred_check_branch
          %298 = sbr.rel (%p296) target = $region82
        $region81: #{vae_forward.7} parent=77 // pred_region
          %s299 = smul.u32 2, %s15
          %p300 = scmp.lt.s32.totalorder %s299, 3
          %s301 = scalar_select %p300, %s299, 3
          %s302 = smul.addr %s301, 8
          %s303 = scalar_lea.vmem %s3, %s302
        $region82: #{vae_forward.7} parent=77 // pred_fallthru
          _
      $region78: #{vae_forward.7} parent=5 // pred_fallthru
        _
    $region6: #{vae_forward.7} parent=1 // loop_footer
      %s13 = sadd.s32 1, %s9
    $region7: #{vae_forward.7} parent=1 // loop_footer_branch
      %8 = sbr.rel target = $region3
    $region8: #{vae_forward.7} parent=1 // loop_exit
      _

// kernel: vae_forward.8
$region0: #{vae_forward.8}
  #allocation0 [shape = 'u32[]', space=smem, size = 0x4, offset = 0x4, fixed_abs, tag = 'smem constant byte address 0x4 - core index']
  #allocation1 [shape = 'u32[144,128]{1,0:T(1,128)}', space=vmem, size = 0x12000, scoped, tag = 'internal scratch']
  %s0 = inlined_call_operand.vmem [shape: bf16[128,128], index: 0, kind: input, shape index: {}]
  %s1 = inlined_call_operand.vmem [shape: bf16[128,16], index: 1, kind: input, shape index: {}]
  %s2 = inlined_call_operand.vmem [shape: f32[1,16], index: 2, kind: input, shape index: {}]
  %s3 = inlined_call_operand.vmem [shape: f32[128,16], index: 3, kind: output, shape index: {}]
  %s4 = sld [smem:[#allocation0]]
  $region22: #{vae_forward.8} parent=0
    _
  %s6 = ssub.s32 1, %s4
  %s7 = scalar_select 0, %s6, %s4
  // Predicated region
  $region2: #{vae_forward.8} parent=0 // pred_check
    _
  $region3: #{vae_forward.8} parent=0 // pred_check_branch
    %9 = sbr.rel (0) target = $region5
  $region4: #{vae_forward.8} parent=0 // pred_region
    _
  $region5: #{vae_forward.8} parent=0 // pred_fallthru
    _
  // Predicated region
  $region6: #{vae_forward.8} parent=0 // pred_check
    _
  $region7: #{vae_forward.8} parent=0 // pred_check_branch
    %11 = sbr.rel (0) target = $region9
  $region8: #{vae_forward.8} parent=0 // pred_region
    _
  $region9: #{vae_forward.8} parent=0 // pred_fallthru
    _
  // Predicated region
  $region10: #{vae_forward.8} parent=0 // pred_check
    _
  $region11: #{vae_forward.8} parent=0 // pred_check_branch
    %13 = sbr.rel (0) target = $region13
  $region12: #{vae_forward.8} parent=0 // pred_region
    _
  $region13: #{vae_forward.8} parent=0 // pred_fallthru
    _
  %v15 = vld [vmem:[%s0] sm:$0xf]
  %v16 = vld [vmem:[%s0 + $0x4] sm:$0xf]
  %v17 = vld [vmem:[%s0 + $0x8] sm:$0xf]
  %v18 = vld [vmem:[%s0 + $0xc] sm:$0xf]
  %v19 = vld [vmem:[%s0 + $0x10] sm:$0xf]
  %v20 = vld [vmem:[%s0 + $0x14] sm:$0xf]
  %v21 = vld [vmem:[%s0 + $0x18] sm:$0xf]
  %v22 = vld [vmem:[%s0 + $0x1c] sm:$0xf]
  %v23 = vld [vmem:[%s0 + $0x20] sm:$0xf]
  %v24 = vld [vmem:[%s0 + $0x24] sm:$0xf]
  %v25 = vld [vmem:[%s0 + $0x28] sm:$0xf]
  %v26 = vld [vmem:[%s0 + $0x2c] sm:$0xf]
  %v27 = vld [vmem:[%s0 + $0x30] sm:$0xf]
  %v28 = vld [vmem:[%s0 + $0x34] sm:$0xf]
  %v29 = vld [vmem:[%s0 + $0x38] sm:$0xf]
  %v30 = vld [vmem:[%s0 + $0x3c] sm:$0xf]
  %v31 = vld [vmem:[%s1] sm:$0xf]
  %v32 = vld [vmem:[%s1 + $0x4] sm:$0xf]
  %v33 = vld [vmem:[%s1 + $0x8] sm:$0xf]
  %v34 = vld [vmem:[%s1 + $0xc] sm:$0xf]
  %v35 = vld [vmem:[%s1 + $0x10] sm:$0xf]
  %v36 = vld [vmem:[%s1 + $0x14] sm:$0xf]
  %v37 = vld [vmem:[%s1 + $0x18] sm:$0xf]
  %v38 = vld [vmem:[%s1 + $0x1c] sm:$0xf]
  %v39 = vld [vmem:[%s1 + $0x20] sm:$0xf]
  %v40 = vld [vmem:[%s1 + $0x24] sm:$0xf]
  %v41 = vld [vmem:[%s1 + $0x28] sm:$0xf]
  %v42 = vld [vmem:[%s1 + $0x2c] sm:$0xf]
  %v43 = vld [vmem:[%s1 + $0x30] sm:$0xf]
  %v44 = vld [vmem:[%s1 + $0x34] sm:$0xf]
  %v45 = vld [vmem:[%s1 + $0x38] sm:$0xf]
  %v46 = vld [vmem:[%s1 + $0x3c] sm:$0xf]
  %v47 = vld [vmem:[%s2] sm:$0x1]
  %v49 = vlaneseq
  %v50 = vshrl.u32 %v49, 7
  %v51 = vsub.s32 0, %v50
  %v52 = vrot.slane %v47, %v51
  %v70 = vunpack.c.l.b16 %v15
  %v71 = vunpack.c.l.b16 %v16
  %v72 = vunpack.c.l.b16 %v17
  %v73 = vunpack.c.l.b16 %v18
  %v74 = vunpack.c.l.b16 %v19
  %v75 = vunpack.c.l.b16 %v20
  %v76 = vunpack.c.l.b16 %v21
  %v77 = vunpack.c.l.b16 %v22
  %v78 = vunpack.c.l.b16 %v23
  %v79 = vunpack.c.l.b16 %v24
  %v80 = vunpack.c.l.b16 %v25
  %v81 = vunpack.c.l.b16 %v26
  %v82 = vunpack.c.l.b16 %v27
  %v83 = vunpack.c.l.b16 %v28
  %v84 = vunpack.c.l.b16 %v29
  %v85 = vunpack.c.l.b16 %v30
  %v86 = vpack.c.b16 %v71, %v70
  %v87 = vpack.c.b16 %v73, %v72
  %v88 = vpack.c.b16 %v75, %v74
  %v89 = vpack.c.b16 %v77, %v76
  %v90 = vpack.c.b16 %v79, %v78
  %v91 = vpack.c.b16 %v81, %v80
  %v92 = vpack.c.b16 %v83, %v82
  %v93 = vpack.c.b16 %v85, %v84
  %v118 = vunpack.c.l.b16 %v31
  %v119 = vunpack.c.l.b16 %v32
  %v120 = vunpack.c.l.b16 %v33
  %v121 = vunpack.c.l.b16 %v34
  %v122 = vunpack.c.l.b16 %v35
  %v123 = vunpack.c.l.b16 %v36
  %v124 = vunpack.c.l.b16 %v37
  %v125 = vunpack.c.l.b16 %v38
  %v126 = vunpack.c.l.b16 %v39
  %v127 = vunpack.c.l.b16 %v40
  %v128 = vunpack.c.l.b16 %v41
  %v129 = vunpack.c.l.b16 %v42
  %v130 = vunpack.c.l.b16 %v43
  %v131 = vunpack.c.l.b16 %v44
  %v132 = vunpack.c.l.b16 %v45
  %v133 = vunpack.c.l.b16 %v46
  %v134 = vpack.c.b16 %v119, %v118
  %v135 = vpack.c.b16 %v121, %v120
  %v136 = vpack.c.b16 %v123, %v122
  %v137 = vpack.c.b16 %v125, %v124
  %v138 = vpack.c.b16 %v127, %v126
  %v139 = vpack.c.b16 %v129, %v128
  %v140 = vpack.c.b16 %v131, %v130
  %v141 = vpack.c.b16 %v133, %v132
  %150 = vmatprep.subr.bf16.mxu0 0
  %151 = vmatpush1.bf16.msra.mxu0 %v141
  %152 = vmatprep.subr.bf16.mxu0 0
  %153 = vmatpush1.bf16.msra.mxu0 %v140
  %154 = vmatprep.subr.bf16.mxu0 0
  %155 = vmatpush1.bf16.msra.mxu0 %v139
  %156 = vmatprep.subr.bf16.mxu0 0
  %157 = vmatpush1.bf16.msra.mxu0 %v138
  %158 = vmatprep.subr.bf16.mxu0 0
  %159 = vmatpush1.bf16.msra.mxu0 %v137
  %160 = vmatprep.subr.bf16.mxu0 0
  %161 = vmatpush1.bf16.msra.mxu0 %v136
  %162 = vmatprep.subr.bf16.mxu0 0
  %163 = vmatpush1.bf16.msra.mxu0 %v135
  %164 = vmatprep.subr.bf16.mxu0 0
  %165 = vmatpush1.bf16.msra.mxu0 %v134
  %166 = vmatprep.subr.bf16.mxu0 0
  %167 = vmatpush2.bf16.msra.mxu0 0
  %168 = vmatprep.subr.bf16.mxu0 0
  %169 = vmatpush2.bf16.msra.mxu0 0
  %170 = vmatprep.subr.bf16.mxu0 0
  %171 = vmatpush2.bf16.msra.mxu0 0
  %172 = vmatprep.subr.bf16.mxu0 0
  %173 = vmatpush2.bf16.msra.mxu0 0
  %174 = vmatprep.subr.bf16.mxu0 0
  %175 = vmatpush2.bf16.msra.mxu0 0
  %176 = vmatprep.subr.bf16.mxu0 0
  %177 = vmatpush2.bf16.msra.mxu0 0
  %178 = vmatprep.subr.bf16.mxu0 0
  %179 = vmatpush2.bf16.msra.mxu0 0
  %180 = vmatprep.subr.bf16.mxu0 0
  %181 = vmatpush2.bf16.msra.mxu0 0
  %182 = vmatprep.mubr.bf16.mxu0 0
  %183 = vmatmul.mubr.bf16.gmra.mxu0 %v86
  %v184 = vpop.f32.mrf.mxu0
  %v185 = vadd.f32 %v52, %v184
  %v186 = vpop.f32.mrf.mxu0
  %v187 = vpop.f32.mrf.mxu0
  %v188 = vadd.f32 %v52, %v187
  %v189 = vpop.f32.mrf.mxu0
  %190 = vmatprep.mubr.bf16.mxu0 0
  %191 = vmatmul.mubr.bf16.gmra.mxu0 %v87
  %v192 = vpop.f32.mrf.mxu0
  %v193 = vadd.f32 %v52, %v192
  %v194 = vpop.f32.mrf.mxu0
  %v195 = vpop.f32.mrf.mxu0
  %v196 = vadd.f32 %v52, %v195
  %v197 = vpop.f32.mrf.mxu0
  %198 = vmatprep.mubr.bf16.mxu0 0
  %199 = vmatmul.mubr.bf16.gmra.mxu0 %v88
  %v200 = vpop.f32.mrf.mxu0
  %v201 = vadd.f32 %v52, %v200
  %v202 = vpop.f32.mrf.mxu0
  %v203 = vpop.f32.mrf.mxu0
  %v204 = vadd.f32 %v52, %v203
  %v205 = vpop.f32.mrf.mxu0
  %206 = vmatprep.mubr.bf16.mxu0 0
  %207 = vmatmul.mubr.bf16.gmra.mxu0 %v89
  %v208 = vpop.f32.mrf.mxu0
  %v209 = vadd.f32 %v52, %v208
  %v210 = vpop.f32.mrf.mxu0
  %v211 = vpop.f32.mrf.mxu0
  %v212 = vadd.f32 %v52, %v211
  %v213 = vpop.f32.mrf.mxu0
  %214 = vmatprep.mubr.bf16.mxu0 0
  %215 = vmatmul.mubr.bf16.gmra.mxu0 %v90
  %v216 = vpop.f32.mrf.mxu0
  %v217 = vadd.f32 %v52, %v216
  %v218 = vpop.f32.mrf.mxu0
  %v219 = vpop.f32.mrf.mxu0
  %v220 = vadd.f32 %v52, %v219
  %v221 = vpop.f32.mrf.mxu0
  %222 = vmatprep.mubr.bf16.mxu0 0
  %223 = vmatmul.mubr.bf16.gmra.mxu0 %v91
  %v224 = vpop.f32.mrf.mxu0
  %v225 = vadd.f32 %v52, %v224
  %v226 = vpop.f32.mrf.mxu0
  %v227 = vpop.f32.mrf.mxu0
  %v228 = vadd.f32 %v52, %v227
  %v229 = vpop.f32.mrf.mxu0
  %230 = vmatprep.mubr.bf16.mxu0 0
  %231 = vmatmul.mubr.bf16.gmra.mxu0 %v92
  %v232 = vpop.f32.mrf.mxu0
  %v233 = vadd.f32 %v52, %v232
  %v234 = vpop.f32.mrf.mxu0
  %v235 = vpop.f32.mrf.mxu0
  %v236 = vadd.f32 %v52, %v235
  %v237 = vpop.f32.mrf.mxu0
  %238 = vmatprep.mubr.bf16.mxu0 0
  %239 = vmatmul.mubr.bf16.gmra.mxu0 %v93
  %v240 = vpop.f32.mrf.mxu0
  %v241 = vadd.f32 %v52, %v240
  %v242 = vpop.f32.mrf.mxu0
  %v243 = vpop.f32.mrf.mxu0
  %v244 = vadd.f32 %v52, %v243
  %v245 = vpop.f32.mrf.mxu0
  %246 = vdwg.mxu0
  %v247 = vmax.f32 %v185, 0.0
  %v248 = vmax.f32 %v188, 0.0
  %v249 = vmax.f32 %v193, 0.0
  %v250 = vmax.f32 %v196, 0.0
  %v251 = vmax.f32 %v201, 0.0
  %v252 = vmax.f32 %v204, 0.0
  %v253 = vmax.f32 %v209, 0.0
  %v254 = vmax.f32 %v212, 0.0
  %v255 = vmax.f32 %v217, 0.0
  %v256 = vmax.f32 %v220, 0.0
  %v257 = vmax.f32 %v225, 0.0
  %v258 = vmax.f32 %v228, 0.0
  %v259 = vmax.f32 %v233, 0.0
  %v260 = vmax.f32 %v236, 0.0
  %v261 = vmax.f32 %v241, 0.0
  %v262 = vmax.f32 %v244, 0.0
  %vm263 = vcmask 130048
  %264 = vst.msk [vmem:[%s3] sm:$0xff] %vm263, %v247
  %265 = vst.msk [vmem:[%s3 + $0x8] sm:$0xff] %vm263, %v248
  %266 = vst.msk [vmem:[%s3 + $0x10] sm:$0xff] %vm263, %v249
  %267 = vst.msk [vmem:[%s3 + $0x18] sm:$0xff] %vm263, %v250
  %268 = vst.msk [vmem:[%s3 + $0x20] sm:$0xff] %vm263, %v251
  %269 = vst.msk [vmem:[%s3 + $0x28] sm:$0xff] %vm263, %v252
  %270 = vst.msk [vmem:[%s3 + $0x30] sm:$0xff] %vm263, %v253
  %271 = vst.msk [vmem:[%s3 + $0x38] sm:$0xff] %vm263, %v254
  %272 = vst.msk [vmem:[%s3 + $0x40] sm:$0xff] %vm263, %v255
  %273 = vst.msk [vmem:[%s3 + $0x48] sm:$0xff] %vm263, %v256
  %274 = vst.msk [vmem:[%s3 + $0x50] sm:$0xff] %vm263, %v257
  %275 = vst.msk [vmem:[%s3 + $0x58] sm:$0xff] %vm263, %v258
  %276 = vst.msk [vmem:[%s3 + $0x60] sm:$0xff] %vm263, %v259
  %277 = vst.msk [vmem:[%s3 + $0x68] sm:$0xff] %vm263, %v260
  %278 = vst.msk [vmem:[%s3 + $0x70] sm:$0xff] %vm263, %v261
  %279 = vst.msk [vmem:[%s3 + $0x78] sm:$0xff] %vm263, %v262
  // Predicated region
  $region14: #{vae_forward.8} parent=0 // pred_check
    _
  $region15: #{vae_forward.8} parent=0 // pred_check_branch
    %281 = sbr.rel (0) target = $region17
  $region16: #{vae_forward.8} parent=0 // pred_region
    _
  $region17: #{vae_forward.8} parent=0 // pred_fallthru
    _
  // Predicated region
  $region18: #{vae_forward.8} parent=0 // pred_check
    _
  $region19: #{vae_forward.8} parent=0 // pred_check_branch
    %283 = sbr.rel (0) target = $region21
  $region20: #{vae_forward.8} parent=0 // pred_region
    _
  $region21: #{vae_forward.8} parent=0 // pred_fallthru
    _

// kernel: vae_forward.9
$region0: #{vae_forward.9}
  #allocation0 [shape = 'u32[]', space=smem, size = 0x4, offset = 0x4, fixed_abs, tag = 'smem constant byte address 0x4 - core index']
  #allocation1 [shape = 'u32[144,128]{1,0:T(1,128)}', space=vmem, size = 0x12000, scoped, tag = 'internal scratch']
  %s0 = inlined_call_operand.vmem [shape: bf16[32,256], index: 0, kind: input, shape index: {}]
  %s1 = inlined_call_operand.vmem [shape: bf16[256,32], index: 1, kind: input, shape index: {}]
  %s2 = inlined_call_operand.vmem [shape: f32[1,32], index: 2, kind: input, shape index: {}]
  %s3 = inlined_call_operand.vmem [shape: f32[32,32], index: 3, kind: output, shape index: {}]
  %s4 = sld [smem:[#allocation0]]
  $region22: #{vae_forward.9} parent=0
    _
  %s6 = ssub.s32 1, %s4
  %s7 = scalar_select 0, %s6, %s4
  // Predicated region
  $region2: #{vae_forward.9} parent=0 // pred_check
    _
  $region3: #{vae_forward.9} parent=0 // pred_check_branch
    %9 = sbr.rel (0) target = $region5
  $region4: #{vae_forward.9} parent=0 // pred_region
    _
  $region5: #{vae_forward.9} parent=0 // pred_fallthru
    _
  // Predicated region
  $region6: #{vae_forward.9} parent=0 // pred_check
    _
  $region7: #{vae_forward.9} parent=0 // pred_check_branch
    %11 = sbr.rel (0) target = $region9
  $region8: #{vae_forward.9} parent=0 // pred_region
    _
  $region9: #{vae_forward.9} parent=0 // pred_fallthru
    _
  // Predicated region
  $region10: #{vae_forward.9} parent=0 // pred_check
    _
  $region11: #{vae_forward.9} parent=0 // pred_check_branch
    %13 = sbr.rel (0) target = $region13
  $region12: #{vae_forward.9} parent=0 // pred_region
    _
  $region13: #{vae_forward.9} parent=0 // pred_fallthru
    _
  %v15 = vld [vmem:[%s0] sm:$0xff]
  %v16 = vld [vmem:[%s0 + $0x8] sm:$0xff]
  %v17 = vld [vmem:[%s0 + $0x10] sm:$0xff]
  %v18 = vld [vmem:[%s0 + $0x18] sm:$0xff]
  %v19 = vld [vmem:[%s1] sm:$0xf]
  %v20 = vld [vmem:[%s1 + $0x4] sm:$0xf]
  %v21 = vld [vmem:[%s1 + $0x8] sm:$0xf]
  %v22 = vld [vmem:[%s1 + $0xc] sm:$0xf]
  %v23 = vld [vmem:[%s1 + $0x10] sm:$0xf]
  %v24 = vld [vmem:[%s1 + $0x14] sm:$0xf]
  %v25 = vld [vmem:[%s1 + $0x18] sm:$0xf]
  %v26 = vld [vmem:[%s1 + $0x1c] sm:$0xf]
  %v27 = vld [vmem:[%s1 + $0x20] sm:$0xf]
  %v28 = vld [vmem:[%s1 + $0x24] sm:$0xf]
  %v29 = vld [vmem:[%s1 + $0x28] sm:$0xf]
  %v30 = vld [vmem:[%s1 + $0x2c] sm:$0xf]
  %v31 = vld [vmem:[%s1 + $0x30] sm:$0xf]
  %v32 = vld [vmem:[%s1 + $0x34] sm:$0xf]
  %v33 = vld [vmem:[%s1 + $0x38] sm:$0xf]
  %v34 = vld [vmem:[%s1 + $0x3c] sm:$0xf]
  %v35 = vld [vmem:[%s1 + $0x40] sm:$0xf]
  %v36 = vld [vmem:[%s1 + $0x44] sm:$0xf]
  %v37 = vld [vmem:[%s1 + $0x48] sm:$0xf]
  %v38 = vld [vmem:[%s1 + $0x4c] sm:$0xf]
  %v39 = vld [vmem:[%s1 + $0x50] sm:$0xf]
  %v40 = vld [vmem:[%s1 + $0x54] sm:$0xf]
  %v41 = vld [vmem:[%s1 + $0x58] sm:$0xf]
  %v42 = vld [vmem:[%s1 + $0x5c] sm:$0xf]
  %v43 = vld [vmem:[%s1 + $0x60] sm:$0xf]
  %v44 = vld [vmem:[%s1 + $0x64] sm:$0xf]
  %v45 = vld [vmem:[%s1 + $0x68] sm:$0xf]
  %v46 = vld [vmem:[%s1 + $0x6c] sm:$0xf]
  %v47 = vld [vmem:[%s1 + $0x70] sm:$0xf]
  %v48 = vld [vmem:[%s1 + $0x74] sm:$0xf]
  %v49 = vld [vmem:[%s1 + $0x78] sm:$0xf]
  %v50 = vld [vmem:[%s1 + $0x7c] sm:$0xf]
  %v51 = vld [vmem:[%s2] sm:$0x1]
  %v53 = vlaneseq
  %v54 = vshrl.u32 %v53, 7
  %v55 = vsub.s32 0, %v54
  %v56 = vrot.slane %v51, %v55
  %v62 = vunpack.c.l.b16 %v15
  %v63 = vunpack.c.h.b16 %v15
  %v64 = vunpack.c.l.b16 %v16
  %v65 = vunpack.c.h.b16 %v16
  %v66 = vunpack.c.l.b16 %v17
  %v67 = vunpack.c.h.b16 %v17
  %v68 = vunpack.c.l.b16 %v18
  %v69 = vunpack.c.h.b16 %v18
  %v70 = vpack.c.b16 %v64, %v62
  %v71 = vpack.c.b16 %v65, %v63
  %v72 = vpack.c.b16 %v68, %v66
  %v73 = vpack.c.b16 %v69, %v67
  %v110 = vunpack.c.l.b16 %v19
  %v111 = vunpack.c.l.b16 %v20
  %v112 = vunpack.c.l.b16 %v21
  %v113 = vunpack.c.l.b16 %v22
  %v114 = vunpack.c.l.b16 %v23
  %v115 = vunpack.c.l.b16 %v24
  %v116 = vunpack.c.l.b16 %v25
  %v117 = vunpack.c.l.b16 %v26
  %v118 = vunpack.c.l.b16 %v27
  %v119 = vunpack.c.l.b16 %v28
  %v120 = vunpack.c.l.b16 %v29
  %v121 = vunpack.c.l.b16 %v30
  %v122 = vunpack.c.l.b16 %v31
  %v123 = vunpack.c.l.b16 %v32
  %v124 = vunpack.c.l.b16 %v33
  %v125 = vunpack.c.l.b16 %v34
  %v126 = vunpack.c.l.b16 %v35
  %v127 = vunpack.c.l.b16 %v36
  %v128 = vunpack.c.l.b16 %v37
  %v129 = vunpack.c.l.b16 %v38
  %v130 = vunpack.c.l.b16 %v39
  %v131 = vunpack.c.l.b16 %v40
  %v132 = vunpack.c.l.b16 %v41
  %v133 = vunpack.c.l.b16 %v42
  %v134 = vunpack.c.l.b16 %v43
  %v135 = vunpack.c.l.b16 %v44
  %v136 = vunpack.c.l.b16 %v45
  %v137 = vunpack.c.l.b16 %v46
  %v138 = vunpack.c.l.b16 %v47
  %v139 = vunpack.c.l.b16 %v48
  %v140 = vunpack.c.l.b16 %v49
  %v141 = vunpack.c.l.b16 %v50
  %v142 = vpack.c.b16 %v111, %v110
  %v143 = vpack.c.b16 %v113, %v112
  %v144 = vpack.c.b16 %v115, %v114
  %v145 = vpack.c.b16 %v117, %v116
  %v146 = vpack.c.b16 %v119, %v118
  %v147 = vpack.c.b16 %v121, %v120
  %v148 = vpack.c.b16 %v123, %v122
  %v149 = vpack.c.b16 %v125, %v124
  %v150 = vpack.c.b16 %v127, %v126
  %v151 = vpack.c.b16 %v129, %v128
  %v152 = vpack.c.b16 %v131, %v130
  %v153 = vpack.c.b16 %v133, %v132
  %v154 = vpack.c.b16 %v135, %v134
  %v155 = vpack.c.b16 %v137, %v136
  %v156 = vpack.c.b16 %v139, %v138
  %v157 = vpack.c.b16 %v141, %v140
  %174 = vmatprep.subr.bf16.mxu0 0
  %175 = vmatpush1.bf16.msra.mxu0 %v149
  %176 = vmatprep.subr.bf16.mxu0 0
  %177 = vmatpush1.bf16.msra.mxu0 %v148
  %178 = vmatprep.subr.bf16.mxu0 0
  %179 = vmatpush1.bf16.msra.mxu0 %v147
  %180 = vmatprep.subr.bf16.mxu0 0
  %181 = vmatpush1.bf16.msra.mxu0 %v146
  %182 = vmatprep.subr.bf16.mxu0 0
  %183 = vmatpush1.bf16.msra.mxu0 %v145
  %184 = vmatprep.subr.bf16.mxu0 0
  %185 = vmatpush1.bf16.msra.mxu0 %v144
  %186 = vmatprep.subr.bf16.mxu0 0
  %187 = vmatpush1.bf16.msra.mxu0 %v143
  %188 = vmatprep.subr.bf16.mxu0 0
  %189 = vmatpush1.bf16.msra.mxu0 %v142
  %190 = vmatprep.subr.bf16.mxu0 0
  %191 = vmatpush2.bf16.msra.mxu0 %v157
  %192 = vmatprep.subr.bf16.mxu0 0
  %193 = vmatpush2.bf16.msra.mxu0 %v156
  %194 = vmatprep.subr.bf16.mxu0 0
  %195 = vmatpush2.bf16.msra.mxu0 %v155
  %196 = vmatprep.subr.bf16.mxu0 0
  %197 = vmatpush2.bf16.msra.mxu0 %v154
  %198 = vmatprep.subr.bf16.mxu0 0
  %199 = vmatpush2.bf16.msra.mxu0 %v153
  %200 = vmatprep.subr.bf16.mxu0 0
  %201 = vmatpush2.bf16.msra.mxu0 %v152
  %202 = vmatprep.subr.bf16.mxu0 0
  %203 = vmatpush2.bf16.msra.mxu0 %v151
  %204 = vmatprep.subr.bf16.mxu0 0
  %205 = vmatpush2.bf16.msra.mxu0 %v150
  %206 = vmatprep.mubr.bf16.mxu0 %v71
  %207 = vmatmul.mubr.bf16.gmra.mxu0 %v70
  %v208 = vpop.f32.mrf.mxu0
  %v209 = vadd.f32 %v56, %v208
  %v210 = vpop.f32.mrf.mxu0
  %v211 = vpop.f32.mrf.mxu0
  %v212 = vadd.f32 %v56, %v211
  %v213 = vpop.f32.mrf.mxu0
  %214 = vmatprep.mubr.bf16.mxu0 %v73
  %215 = vmatmul.mubr.bf16.gmra.mxu0 %v72
  %v216 = vpop.f32.mrf.mxu0
  %v217 = vadd.f32 %v56, %v216
  %v218 = vpop.f32.mrf.mxu0
  %v219 = vpop.f32.mrf.mxu0
  %v220 = vadd.f32 %v56, %v219
  %v221 = vpop.f32.mrf.mxu0
  %222 = vdwg.mxu0
  %v223 = vmax.f32 %v209, 0.0
  %v224 = vmax.f32 %v212, 0.0
  %v225 = vmax.f32 %v217, 0.0
  %v226 = vmax.f32 %v220, 0.0
  %vm227 = vcmask 261120
  %228 = vst.msk [vmem:[%s3] sm:$0xff] %vm227, %v223
  %229 = vst.msk [vmem:[%s3 + $0x8] sm:$0xff] %vm227, %v224
  %230 = vst.msk [vmem:[%s3 + $0x10] sm:$0xff] %vm227, %v225
  %231 = vst.msk [vmem:[%s3 + $0x18] sm:$0xff] %vm227, %v226
  // Predicated region
  $region14: #{vae_forward.9} parent=0 // pred_check
    _
  $region15: #{vae_forward.9} parent=0 // pred_check_branch
    %233 = sbr.rel (0) target = $region17
  $region16: #{vae_forward.9} parent=0 // pred_region
    _
  $region17: #{vae_forward.9} parent=0 // pred_fallthru
    _
  // Predicated region
  $region18: #{vae_forward.9} parent=0 // pred_check
    _
  $region19: #{vae_forward.9} parent=0 // pred_check_branch
    %235 = sbr.rel (0) target = $region21
  $region20: #{vae_forward.9} parent=0 // pred_region
    _
  $region21: #{vae_forward.9} parent=0 // pred_fallthru
    _

// kernel: tile.22
$region0: #{tile.22}
  #allocation0 [shape = 's32[1]{0}', space=sflag, size = 0x4, scoped, tag = 'scoped memory for tile.22']
  %s0 = inlined_call_operand.vmem [shape: f32[64], index: 0, kind: input, shape index: {}]
  %s1 = inlined_call_operand.vmem [shape: f32[16,64], index: 1, kind: output, shape index: {}]
  // Predicated region
  $region2: #{tile.22} parent=0 // pred_check
    _
  $region3: #{tile.22} parent=0 // pred_check_branch
    %3 = sbr.rel (0) target = $region5
  $region4: #{tile.22} parent=0 // pred_region
    _
  $region5: #{tile.22} parent=0 // pred_fallthru
    _
  %v4 = vld [vmem:[%s0] ss:$0 sm:$0xff]
  %5 = vst [vmem:[%s1] sm:$0xff] %v4
  %s6 = scalar_lea.vmem %s1, 8
  %7 = vst [vmem:[%s6] sm:$0xff] %v4

// kernel: tile.23
$region0: #{tile.23}
  %s0 = inlined_call_operand.vmem [shape: f32[16,64], index: 0, kind: input, shape index: {}]
  %s1 = inlined_call_operand.vmem [shape: f32[1,1024], index: 1, kind: output, shape index: {}]
  $region1: #{tile.23} parent=0
    #allocation0 [shape = 'u8[32768]{0}', space=vmem, size = 0x8000, scoped, tag = 'scoped mem for output reshape']
    %v2 = vld [vmem:[%s0] ss:$2 sm:$0xff]
    %vm3 = vcmask 523264
    %4 = vst.msk [vmem:[#allocation0] ss:$8 sm:$0xf] %vm3, %v2
    %5 = vst.msk [vmem:[#allocation0] ss:$8 sm:$0xf0] %vm3, %v2
    %s6 = scalar_lea.vmem %s0, 1
    %v7 = vld [vmem:[%s6] ss:$2 sm:$0xff]
    %8 = vrot.lane.b32.xlu0 %v7, 64
    %v9 = vpop.permute.xlu0 %8
    %vm10 = vcmask 1048064
    %11 = vst.msk [vmem:[#allocation0] ss:$8 sm:$0xf] %vm10, %v9
    %12 = vst.msk [vmem:[#allocation0] ss:$8 sm:$0xf0] %vm10, %v9
    %s14 = sshll.u32 1, 1
    %s15 = ssub.s32 %s14, 1
    %v17 = vld [vmem:[#allocation0] sm:%s15]
    %s18 = sshll.u32 1, 1
    %s19 = ssub.s32 %s18, 1
    %20 = vst [vmem:[%s1] sm:%s19] %v17
    %s21 = scalar_lea.vmem [#allocation0], 8
    %v22 = vld [vmem:[%s21] sm:%s15]
    %s23 = sshll.u32 1, 1
    %s24 = ssub.s32 %s23, 1
    %s25 = scalar_lea.vmem %s1, 1
    %26 = vst [vmem:[%s25] sm:%s24] %v22
    %s27 = scalar_lea.vmem [#allocation0], 16
    %v28 = vld [vmem:[%s27] sm:%s15]
    %s29 = sshll.u32 1, 1
    %s30 = ssub.s32 %s29, 1
    %s31 = smul.addr 1, 2
    %s32 = scalar_lea.vmem %s1, %s31
    %33 = vst [vmem:[%s32] sm:%s30] %v28
    %s34 = scalar_lea.vmem [#allocation0], 24
    %v35 = vld [vmem:[%s34] sm:%s15]
    %s36 = sshll.u32 1, 1
    %s37 = ssub.s32 %s36, 1
    %s38 = smul.addr 1, 3
    %s39 = scalar_lea.vmem %s1, %s38
    %40 = vst [vmem:[%s39] sm:%s37] %v35
    %s41 = scalar_lea.vmem [#allocation0], 32
    %v42 = vld [vmem:[%s41] sm:%s15]
    %s43 = sshll.u32 1, 1
    %s44 = ssub.s32 %s43, 1
    %s45 = smul.addr 1, 4
    %s46 = scalar_lea.vmem %s1, %s45
    %47 = vst [vmem:[%s46] sm:%s44] %v42
    %s48 = scalar_lea.vmem [#allocation0], 40
    %v49 = vld [vmem:[%s48] sm:%s15]
    %s50 = sshll.u32 1, 1
    %s51 = ssub.s32 %s50, 1
    %s52 = smul.addr 1, 5
    %s53 = scalar_lea.vmem %s1, %s52
    %54 = vst [vmem:[%s53] sm:%s51] %v49
    %s55 = scalar_lea.vmem [#allocation0], 48
    %v56 = vld [vmem:[%s55] sm:%s15]
    %s57 = sshll.u32 1, 1
    %s58 = ssub.s32 %s57, 1
    %s59 = smul.addr 1, 6
    %s60 = scalar_lea.vmem %s1, %s59
    %61 = vst [vmem:[%s60] sm:%s58] %v56
    %s62 = scalar_lea.vmem [#allocation0], 56
    %v63 = vld [vmem:[%s62] sm:%s15]
    %s64 = sshll.u32 1, 1
    %s65 = ssub.s32 %s64, 1
    %s66 = smul.addr 1, 7
    %s67 = scalar_lea.vmem %s1, %s66
    %68 = vst [vmem:[%s67] sm:%s65] %v63

// kernel: vae_forward.10
$region0: #{vae_forward.10}
  #allocation0 [shape = 'u32[]', space=smem, size = 0x4, offset = 0x4, fixed_abs, tag = 'smem constant byte address 0x4 - core index']
  #allocation1 [shape = 'u32[144,128]{1,0:T(1,128)}', space=vmem, size = 0x12000, scoped, tag = 'internal scratch']
  %s0 = inlined_call_operand.vmem [shape: f32[2,512], index: 0, kind: input, shape index: {}]
  %s1 = inlined_call_operand.vmem [shape: f32[512,64], index: 1, kind: input, shape index: {}]
  %s2 = inlined_call_operand.vmem [shape: f32[1,64], index: 2, kind: input, shape index: {}]
  %s3 = inlined_call_operand.vmem [shape: f32[2,2], index: 3, kind: input, shape index: {}]
  %s4 = inlined_call_operand.vmem [shape: f32[64,128], index: 4, kind: input, shape index: {}]
  %s5 = inlined_call_operand.vmem [shape: f32[1,128], index: 5, kind: input, shape index: {}]
  %s6 = inlined_call_operand.vmem [shape: f32[128,32], index: 6, kind: input, shape index: {}]
  %s7 = inlined_call_operand.vmem [shape: f32[1,32], index: 7, kind: input, shape index: {}]
  %s8 = inlined_call_operand.vmem [shape: f32[2,16], index: 8, kind: input, shape index: {}]
  %s9 = inlined_call_operand.vmem [shape: f32[16,64], index: 9, kind: input, shape index: {}]
  %s10 = inlined_call_operand.vmem [shape: f32[1,64], index: 10, kind: input, shape index: {}]
  %s11 = inlined_call_operand.vmem [shape: f32[64,1024], index: 11, kind: input, shape index: {}]
  %s12 = inlined_call_operand.vmem [shape: f32[1,1024], index: 12, kind: input, shape index: {}]
  %s13 = inlined_call_operand.vmem [shape: f32[2,1024], index: 13, kind: output, shape index: {0}]
  %s14 = inlined_call_operand.vmem [shape: f32[2,32], index: 14, kind: output, shape index: {1}]
  %15 = xla_tuple %s13, %s14
  %s16 = sld [smem:[#allocation0]]
  $region70: #{vae_forward.10} parent=0
    _
  %s18 = ssub.s32 1, %s16
  %s19 = scalar_select 0, %s18, %s16
  // Predicated region
  $region2: #{vae_forward.10} parent=0 // pred_check
    _
  $region3: #{vae_forward.10} parent=0 // pred_check_branch
    %21 = sbr.rel (0) target = $region5
  $region4: #{vae_forward.10} parent=0 // pred_region
    _
  $region5: #{vae_forward.10} parent=0 // pred_fallthru
    _
  // Predicated region
  $region6: #{vae_forward.10} parent=0 // pred_check
    _
  $region7: #{vae_forward.10} parent=0 // pred_check_branch
    %23 = sbr.rel (0) target = $region9
  $region8: #{vae_forward.10} parent=0 // pred_region
    _
  $region9: #{vae_forward.10} parent=0 // pred_fallthru
    _
  // Predicated region
  $region10: #{vae_forward.10} parent=0 // pred_check
    _
  $region11: #{vae_forward.10} parent=0 // pred_check_branch
    %25 = sbr.rel (0) target = $region13
  $region12: #{vae_forward.10} parent=0 // pred_region
    _
  $region13: #{vae_forward.10} parent=0 // pred_fallthru
    _
  // Predicated region
  $region14: #{vae_forward.10} parent=0 // pred_check
    _
  $region15: #{vae_forward.10} parent=0 // pred_check_branch
    %27 = sbr.rel (0) target = $region17
  $region16: #{vae_forward.10} parent=0 // pred_region
    _
  $region17: #{vae_forward.10} parent=0 // pred_fallthru
    _
  // Predicated region
  $region18: #{vae_forward.10} parent=0 // pred_check
    _
  $region19: #{vae_forward.10} parent=0 // pred_check_branch
    %29 = sbr.rel (0) target = $region21
  $region20: #{vae_forward.10} parent=0 // pred_region
    _
  $region21: #{vae_forward.10} parent=0 // pred_fallthru
    _
  // Predicated region
  $region22: #{vae_forward.10} parent=0 // pred_check
    _
  $region23: #{vae_forward.10} parent=0 // pred_check_branch
    %31 = sbr.rel (0) target = $region25
  $region24: #{vae_forward.10} parent=0 // pred_region
    _
  $region25: #{vae_forward.10} parent=0 // pred_fallthru
    _
  // Predicated region
  $region26: #{vae_forward.10} parent=0 // pred_check
    _
  $region27: #{vae_forward.10} parent=0 // pred_check_branch
    %33 = sbr.rel (0) target = $region29
  $region28: #{vae_forward.10} parent=0 // pred_region
    _
  $region29: #{vae_forward.10} parent=0 // pred_fallthru
    _
  // Predicated region
  $region30: #{vae_forward.10} parent=0 // pred_check
    _
  $region31: #{vae_forward.10} parent=0 // pred_check_branch
    %35 = sbr.rel (0) target = $region33
  $region32: #{vae_forward.10} parent=0 // pred_region
    _
  $region33: #{vae_forward.10} parent=0 // pred_fallthru
    _
  // Predicated region
  $region34: #{vae_forward.10} parent=0 // pred_check
    _
  $region35: #{vae_forward.10} parent=0 // pred_check_branch
    %37 = sbr.rel (0) target = $region37
  $region36: #{vae_forward.10} parent=0 // pred_region
    _
  $region37: #{vae_forward.10} parent=0 // pred_fallthru
    _
  // Predicated region
  $region38: #{vae_forward.10} parent=0 // pred_check
    _
  $region39: #{vae_forward.10} parent=0 // pred_check_branch
    %39 = sbr.rel (0) target = $region41
  $region40: #{vae_forward.10} parent=0 // pred_region
    _
  $region41: #{vae_forward.10} parent=0 // pred_fallthru
    _
  // Predicated region
  $region42: #{vae_forward.10} parent=0 // pred_check
    _
  $region43: #{vae_forward.10} parent=0 // pred_check_branch
    %41 = sbr.rel (0) target = $region45
  $region44: #{vae_forward.10} parent=0 // pred_region
    _
  $region45: #{vae_forward.10} parent=0 // pred_fallthru
    _
  // Predicated region
  $region46: #{vae_forward.10} parent=0 // pred_check
    _
  $region47: #{vae_forward.10} parent=0 // pred_check_branch
    %43 = sbr.rel (0) target = $region49
  $region48: #{vae_forward.10} parent=0 // pred_region
    _
  $region49: #{vae_forward.10} parent=0 // pred_fallthru
    _
  // Predicated region
  $region50: #{vae_forward.10} parent=0 // pred_check
    _
  $region51: #{vae_forward.10} parent=0 // pred_check_branch
    %45 = sbr.rel (0) target = $region53
  $region52: #{vae_forward.10} parent=0 // pred_region
    _
  $region53: #{vae_forward.10} parent=0 // pred_fallthru
    _
  %v46 = vld [vmem:[%s0] sm:$0xff]
  %v47 = vld [vmem:[%s1] sm:$0xff]
  %v48 = vld [vmem:[%s1 + $0x8] sm:$0xff]
  %v49 = vld [vmem:[%s1 + $0x10] sm:$0xff]
  %v50 = vld [vmem:[%s1 + $0x18] sm:$0xff]
  %v51 = vld [vmem:[%s1 + $0x20] sm:$0xff]
  %v52 = vld [vmem:[%s1 + $0x28] sm:$0xff]
  %v53 = vld [vmem:[%s1 + $0x30] sm:$0xff]
  %v54 = vld [vmem:[%s1 + $0x38] sm:$0xff]
  %v55 = vld [vmem:[%s1 + $0x40] sm:$0xff]
  %v56 = vld [vmem:[%s1 + $0x48] sm:$0xff]
  %v57 = vld [vmem:[%s1 + $0x50] sm:$0xff]
  %v58 = vld [vmem:[%s1 + $0x58] sm:$0xff]
  %v59 = vld [vmem:[%s1 + $0x60] sm:$0xff]
  %v60 = vld [vmem:[%s1 + $0x68] sm:$0xff]
  %v61 = vld [vmem:[%s1 + $0x70] sm:$0xff]
  %v62 = vld [vmem:[%s1 + $0x78] sm:$0xff]
  %v63 = vld [vmem:[%s1 + $0x80] sm:$0xff]
  %v64 = vld [vmem:[%s1 + $0x88] sm:$0xff]
  %v65 = vld [vmem:[%s1 + $0x90] sm:$0xff]
  %v66 = vld [vmem:[%s1 + $0x98] sm:$0xff]
  %v67 = vld [vmem:[%s1 + $0xa0] sm:$0xff]
  %v68 = vld [vmem:[%s1 + $0xa8] sm:$0xff]
  %v69 = vld [vmem:[%s1 + $0xb0] sm:$0xff]
  %v70 = vld [vmem:[%s1 + $0xb8] sm:$0xff]
  %v71 = vld [vmem:[%s1 + $0xc0] sm:$0xff]
  %v72 = vld [vmem:[%s1 + $0xc8] sm:$0xff]
  %v73 = vld [vmem:[%s1 + $0xd0] sm:$0xff]
  %v74 = vld [vmem:[%s1 + $0xd8] sm:$0xff]
  %v75 = vld [vmem:[%s1 + $0xe0] sm:$0xff]
  %v76 = vld [vmem:[%s1 + $0xe8] sm:$0xff]
  %v77 = vld [vmem:[%s1 + $0xf0] sm:$0xff]
  %v78 = vld [vmem:[%s1 + $0xf8] sm:$0xff]
  %v79 = vld [vmem:[%s1 + $0x100] sm:$0xff]
  %v80 = vld [vmem:[%s1 + $0x108] sm:$0xff]
  %v81 = vld [vmem:[%s1 + $0x110] sm:$0xff]
  %v82 = vld [vmem:[%s1 + $0x118] sm:$0xff]
  %v83 = vld [vmem:[%s1 + $0x120] sm:$0xff]
  %v84 = vld [vmem:[%s1 + $0x128] sm:$0xff]
  %v85 = vld [vmem:[%s1 + $0x130] sm:$0xff]
  %v86 = vld [vmem:[%s1 + $0x138] sm:$0xff]
  %v87 = vld [vmem:[%s1 + $0x140] sm:$0xff]
  %v88 = vld [vmem:[%s1 + $0x148] sm:$0xff]
  %v89 = vld [vmem:[%s1 + $0x150] sm:$0xff]
  %v90 = vld [vmem:[%s1 + $0x158] sm:$0xff]
  %v91 = vld [vmem:[%s1 + $0x160] sm:$0xff]
  %v92 = vld [vmem:[%s1 + $0x168] sm:$0xff]
  %v93 = vld [vmem:[%s1 + $0x170] sm:$0xff]
  %v94 = vld [vmem:[%s1 + $0x178] sm:$0xff]
  %v95 = vld [vmem:[%s1 + $0x180] sm:$0xff]
  %v96 = vld [vmem:[%s1 + $0x188] sm:$0xff]
  %v97 = vld [vmem:[%s1 + $0x190] sm:$0xff]
  %v98 = vld [vmem:[%s1 + $0x198] sm:$0xff]
  %v99 = vld [vmem:[%s1 + $0x1a0] sm:$0xff]
  %v100 = vld [vmem:[%s1 + $0x1a8] sm:$0xff]
  %v101 = vld [vmem:[%s1 + $0x1b0] sm:$0xff]
  %v102 = vld [vmem:[%s1 + $0x1b8] sm:$0xff]
  %v103 = vld [vmem:[%s1 + $0x1c0] sm:$0xff]
  %v104 = vld [vmem:[%s1 + $0x1c8] sm:$0xff]
  %v105 = vld [vmem:[%s1 + $0x1d0] sm:$0xff]
  %v106 = vld [vmem:[%s1 + $0x1d8] sm:$0xff]
  %v107 = vld [vmem:[%s1 + $0x1e0] sm:$0xff]
  %v108 = vld [vmem:[%s1 + $0x1e8] sm:$0xff]
  %v109 = vld [vmem:[%s1 + $0x1f0] sm:$0xff]
  %v110 = vld [vmem:[%s1 + $0x1f8] sm:$0xff]
  %v111 = vld [vmem:[%s2] sm:$0x1]
  %v113 = vlaneseq
  %v114 = vshrl.u32 %v113, 7
  %v115 = vsub.s32 0, %v114
  %v116 = vrot.slane %v111, %v115
  %v119 = vcombine.high %v46, %v46
  %v121 = vunpack.c.l.s4 1983009808
  %v122 = vunpack.c.0.s8 %v121
  %v123 = vlaneseq
  %v124 = vshrl.u32 %v123, 7
  %v125 = vsub.s32 %v122, %v124
  %v126 = vrot.slane %v46, %v125
  %v128 = vunpack.c.l.s4 1983009808
  %v129 = vunpack.c.0.s8 %v128
  %v130 = vlaneseq
  %v131 = vshrl.u32 %v130, 7
  %v132 = vsub.s32 %v129, %v131
  %v133 = vrot.slane %v119, %v132
  %v134 = vcombine.high %v126, %v126
  %v135 = vcombine.high %v133, %v133
  %140 = vmatprep.subr.mxu0 0.0
  %141 = vmatpush1.msra.mxu0 %v62
  %142 = vmatprep.subr.mxu0 0.0
  %143 = vmatpush1.msra.mxu0 %v61
  %144 = vmatprep.subr.mxu0 0.0
  %145 = vmatpush1.msra.mxu0 %v60
  %146 = vmatprep.subr.mxu0 0.0
  %147 = vmatpush1.msra.mxu0 %v59
  %148 = vmatprep.subr.mxu0 0.0
  %149 = vmatpush1.msra.mxu0 %v58
  %150 = vmatprep.subr.mxu0 0.0
  %151 = vmatpush1.msra.mxu0 %v57
  %152 = vmatprep.subr.mxu0 0.0
  %153 = vmatpush1.msra.mxu0 %v56
  %154 = vmatprep.subr.mxu0 0.0
  %155 = vmatpush1.msra.mxu0 %v55
  %156 = vmatprep.subr.mxu0 0.0
  %157 = vmatpush1.msra.mxu0 %v54
  %158 = vmatprep.subr.mxu0 0.0
  %159 = vmatpush1.msra.mxu0 %v53
  %160 = vmatprep.subr.mxu0 0.0
  %161 = vmatpush1.msra.mxu0 %v52
  %162 = vmatprep.subr.mxu0 0.0
  %163 = vmatpush1.msra.mxu0 %v51
  %164 = vmatprep.subr.mxu0 0.0
  %165 = vmatpush1.msra.mxu0 %v50
  %166 = vmatprep.subr.mxu0 0.0
  %167 = vmatpush1.msra.mxu0 %v49
  %168 = vmatprep.subr.mxu0 0.0
  %169 = vmatpush1.msra.mxu0 %v48
  %170 = vmatprep.subr.mxu0 0.0
  %171 = vmatpush1.msra.mxu0 %v47
  %172 = vmatprep.subr.mxu0 0.0
  %173 = vmatpush2.msra.mxu0 %v78
  %174 = vmatprep.subr.mxu0 0.0
  %175 = vmatpush2.msra.mxu0 %v77
  %176 = vmatprep.subr.mxu0 0.0
  %177 = vmatpush2.msra.mxu0 %v76
  %178 = vmatprep.subr.mxu0 0.0
  %179 = vmatpush2.msra.mxu0 %v75
  %180 = vmatprep.subr.mxu0 0.0
  %181 = vmatpush2.msra.mxu0 %v74
  %182 = vmatprep.subr.mxu0 0.0
  %183 = vmatpush2.msra.mxu0 %v73
  %184 = vmatprep.subr.mxu0 0.0
  %185 = vmatpush2.msra.mxu0 %v72
  %186 = vmatprep.subr.mxu0 0.0
  %187 = vmatpush2.msra.mxu0 %v71
  %188 = vmatprep.subr.mxu0 0.0
  %189 = vmatpush2.msra.mxu0 %v70
  %190 = vmatprep.subr.mxu0 0.0
  %191 = vmatpush2.msra.mxu0 %v69
  %192 = vmatprep.subr.mxu0 0.0
  %193 = vmatpush2.msra.mxu0 %v68
  %194 = vmatprep.subr.mxu0 0.0
  %195 = vmatpush2.msra.mxu0 %v67
  %196 = vmatprep.subr.mxu0 0.0
  %197 = vmatpush2.msra.mxu0 %v66
  %198 = vmatprep.subr.mxu0 0.0
  %199 = vmatpush2.msra.mxu0 %v65
  %200 = vmatprep.subr.mxu0 0.0
  %201 = vmatpush2.msra.mxu0 %v64
  %202 = vmatprep.subr.mxu0 0.0
  %203 = vmatpush2.msra.mxu0 %v63
  %204 = vmatprep.mubr.f32.mxu0 %v134
  %205 = vmatmul.mubr.f32.gmra.mxu0 %v126
  %v206 = vpop.f32.mrf.mxu0
  %v207 = vadd.f32 %v116, %v206
  %v208 = vpop.f32.mrf.mxu0
  %209 = vdwg.mxu0
  %210 = vmatprep.subr.mxu0 0.0
  %211 = vmatpush1.msra.mxu0 %v94
  %212 = vmatprep.subr.mxu0 0.0
  %213 = vmatpush1.msra.mxu0 %v93
  %214 = vmatprep.subr.mxu0 0.0
  %215 = vmatpush1.msra.mxu0 %v92
  %216 = vmatprep.subr.mxu0 0.0
  %217 = vmatpush1.msra.mxu0 %v91
  %218 = vmatprep.subr.mxu0 0.0
  %219 = vmatpush1.msra.mxu0 %v90
  %220 = vmatprep.subr.mxu0 0.0
  %221 = vmatpush1.msra.mxu0 %v89
  %222 = vmatprep.subr.mxu0 0.0
  %223 = vmatpush1.msra.mxu0 %v88
  %224 = vmatprep.subr.mxu0 0.0
  %225 = vmatpush1.msra.mxu0 %v87
  %226 = vmatprep.subr.mxu0 0.0
  %227 = vmatpush1.msra.mxu0 %v86
  %228 = vmatprep.subr.mxu0 0.0
  %229 = vmatpush1.msra.mxu0 %v85
  %230 = vmatprep.subr.mxu0 0.0
  %231 = vmatpush1.msra.mxu0 %v84
  %232 = vmatprep.subr.mxu0 0.0
  %233 = vmatpush1.msra.mxu0 %v83
  %234 = vmatprep.subr.mxu0 0.0
  %235 = vmatpush1.msra.mxu0 %v82
  %236 = vmatprep.subr.mxu0 0.0
  %237 = vmatpush1.msra.mxu0 %v81
  %238 = vmatprep.subr.mxu0 0.0
  %239 = vmatpush1.msra.mxu0 %v80
  %240 = vmatprep.subr.mxu0 0.0
  %241 = vmatpush1.msra.mxu0 %v79
  %242 = vmatprep.subr.mxu0 0.0
  %243 = vmatpush2.msra.mxu0 %v110
  %244 = vmatprep.subr.mxu0 0.0
  %245 = vmatpush2.msra.mxu0 %v109
  %246 = vmatprep.subr.mxu0 0.0
  %247 = vmatpush2.msra.mxu0 %v108
  %248 = vmatprep.subr.mxu0 0.0
  %249 = vmatpush2.msra.mxu0 %v107
  %250 = vmatprep.subr.mxu0 0.0
  %251 = vmatpush2.msra.mxu0 %v106
  %252 = vmatprep.subr.mxu0 0.0
  %253 = vmatpush2.msra.mxu0 %v105
  %254 = vmatprep.subr.mxu0 0.0
  %255 = vmatpush2.msra.mxu0 %v104
  %256 = vmatprep.subr.mxu0 0.0
  %257 = vmatpush2.msra.mxu0 %v103
  %258 = vmatprep.subr.mxu0 0.0
  %259 = vmatpush2.msra.mxu0 %v102
  %260 = vmatprep.subr.mxu0 0.0
  %261 = vmatpush2.msra.mxu0 %v101
  %262 = vmatprep.subr.mxu0 0.0
  %263 = vmatpush2.msra.mxu0 %v100
  %264 = vmatprep.subr.mxu0 0.0
  %265 = vmatpush2.msra.mxu0 %v99
  %266 = vmatprep.subr.mxu0 0.0
  %267 = vmatpush2.msra.mxu0 %v98
  %268 = vmatprep.subr.mxu0 0.0
  %269 = vmatpush2.msra.mxu0 %v97
  %270 = vmatprep.subr.mxu0 0.0
  %271 = vmatpush2.msra.mxu0 %v96
  %272 = vmatprep.subr.mxu0 0.0
  %273 = vmatpush2.msra.mxu0 %v95
  %274 = vmatprep.mubr.f32.mxu0 %v135
  %275 = vmatmul.mubr.f32.gmra.mxu0 %v133
  %v276 = vpop.f32.mrf.mxu0
  %v277 = vadd.f32 %v207, %v276
  %v278 = vpop.f32.mrf.mxu0
  %279 = vdwg.mxu0
  %v280 = vmax.f32 %v277, 0.0
  %v281 = vld [vmem:[%s3] sm:$0x3]
  %vm282 = vcmask 15360
  %v284 = vsel %vm282, %v281, 0
  %vm286 = vcmask 1041408
  %v288 = vsel %vm286, %v280, 0
  %290 = vmatprep.subr.mxu0 0.0
  %291 = vmatpush1.msra.mxu0 0.0
  %292 = vmatprep.subr.mxu0 0.0
  %293 = vmatpush1.msra.mxu0 0.0
  %294 = vmatprep.subr.mxu0 0.0
  %295 = vmatpush1.msra.mxu0 0.0
  %296 = vmatprep.subr.mxu0 0.0
  %297 = vmatpush1.msra.mxu0 0.0
  %298 = vmatprep.subr.mxu0 0.0
  %299 = vmatpush1.msra.mxu0 0.0
  %300 = vmatprep.subr.mxu0 0.0
  %301 = vmatpush1.msra.mxu0 0.0
  %302 = vmatprep.subr.mxu0 0.0
  %303 = vmatpush1.msra.mxu0 0.0
  %304 = vmatprep.subr.mxu0 0.0
  %305 = vmatpush1.msra.mxu0 0.0
  %306 = vmatprep.subr.mxu0 0.0
  %307 = vmatpush1.msra.mxu0 0.0
  %308 = vmatprep.subr.mxu0 0.0
  %309 = vmatpush1.msra.mxu0 0.0
  %310 = vmatprep.subr.mxu0 0.0
  %311 = vmatpush1.msra.mxu0 0.0
  %312 = vmatprep.subr.mxu0 0.0
  %313 = vmatpush1.msra.mxu0 0.0
  %314 = vmatprep.subr.mxu0 0.0
  %315 = vmatpush1.msra.mxu0 0.0
  %316 = vmatprep.subr.mxu0 0.0
  %317 = vmatpush1.msra.mxu0 0.0
  %318 = vmatprep.subr.mxu0 0.0
  %319 = vmatpush1.msra.mxu0 0.0
  %320 = vmatprep.subr.mxu0 0.0
  %321 = vmatpush1.msra.mxu0 %v288
  %322 = vmatprep.subr.mxu0 0.0
  %323 = vmatpush2.msra.mxu0 0.0
  %324 = vmatprep.subr.mxu0 0.0
  %325 = vmatpush2.msra.mxu0 0.0
  %326 = vmatprep.subr.mxu0 0.0
  %327 = vmatpush2.msra.mxu0 0.0
  %328 = vmatprep.subr.mxu0 0.0
  %329 = vmatpush2.msra.mxu0 0.0
  %330 = vmatprep.subr.mxu0 0.0
  %331 = vmatpush2.msra.mxu0 0.0
  %332 = vmatprep.subr.mxu0 0.0
  %333 = vmatpush2.msra.mxu0 0.0
  %334 = vmatprep.subr.mxu0 0.0
  %335 = vmatpush2.msra.mxu0 0.0
  %336 = vmatprep.subr.mxu0 0.0
  %337 = vmatpush2.msra.mxu0 0.0
  %338 = vmatprep.subr.mxu0 0.0
  %339 = vmatpush2.msra.mxu0 0.0
  %340 = vmatprep.subr.mxu0 0.0
  %341 = vmatpush2.msra.mxu0 0.0
  %342 = vmatprep.subr.mxu0 0.0
  %343 = vmatpush2.msra.mxu0 0.0
  %344 = vmatprep.subr.mxu0 0.0
  %345 = vmatpush2.msra.mxu0 0.0
  %346 = vmatprep.subr.mxu0 0.0
  %347 = vmatpush2.msra.mxu0 0.0
  %348 = vmatprep.subr.mxu0 0.0
  %349 = vmatpush2.msra.mxu0 0.0
  %350 = vmatprep.subr.mxu0 0.0
  %351 = vmatpush2.msra.mxu0 0.0
  %352 = vmatprep.subr.mxu0 0.0
  %353 = vmatpush2.msra.mxu0 0.0
  %354 = vmatprep.mubr.f32.mxu0 0.0
  %355 = vmatmul.mubr.f32.gmra.mxu0 %v284
  %v356 = vpop.f32.mrf.mxu0
  %v357 = vadd.f32 0.0, %v356
  %v358 = vpop.f32.mrf.mxu0
  %359 = vdwg.mxu0
  %v360 = vld [vmem:[%s4] sm:$0xff]
  %v361 = vld [vmem:[%s4 + $0x8] sm:$0xff]
  %v362 = vld [vmem:[%s4 + $0x10] sm:$0xff]
  %v363 = vld [vmem:[%s4 + $0x18] sm:$0xff]
  %v364 = vld [vmem:[%s4 + $0x20] sm:$0xff]
  %v365 = vld [vmem:[%s4 + $0x28] sm:$0xff]
  %v366 = vld [vmem:[%s4 + $0x30] sm:$0xff]
  %v367 = vld [vmem:[%s4 + $0x38] sm:$0xff]
  %v368 = vld [vmem:[%s5] sm:$0x1]
  %v370 = vlaneseq
  %v371 = vshrl.u32 %v370, 7
  %v372 = vsub.s32 0, %v371
  %v373 = vrot.slane %v368, %v372
  %vm375 = vcmask 523264
  %v377 = vsel %vm375, %v357, 0
  %379 = vmatprep.subr.mxu0 0.0
  %380 = vmatpush1.msra.mxu0 0.0
  %381 = vmatprep.subr.mxu0 0.0
  %382 = vmatpush1.msra.mxu0 0.0
  %383 = vmatprep.subr.mxu0 0.0
  %384 = vmatpush1.msra.mxu0 0.0
  %385 = vmatprep.subr.mxu0 0.0
  %386 = vmatpush1.msra.mxu0 0.0
  %387 = vmatprep.subr.mxu0 0.0
  %388 = vmatpush1.msra.mxu0 0.0
  %389 = vmatprep.subr.mxu0 0.0
  %390 = vmatpush1.msra.mxu0 0.0
  %391 = vmatprep.subr.mxu0 0.0
  %392 = vmatpush1.msra.mxu0 0.0
  %393 = vmatprep.subr.mxu0 0.0
  %394 = vmatpush1.msra.mxu0 0.0
  %395 = vmatprep.subr.mxu0 0.0
  %396 = vmatpush1.msra.mxu0 %v367
  %397 = vmatprep.subr.mxu0 0.0
  %398 = vmatpush1.msra.mxu0 %v366
  %399 = vmatprep.subr.mxu0 0.0
  %400 = vmatpush1.msra.mxu0 %v365
  %401 = vmatprep.subr.mxu0 0.0
  %402 = vmatpush1.msra.mxu0 %v364
  %403 = vmatprep.subr.mxu0 0.0
  %404 = vmatpush1.msra.mxu0 %v363
  %405 = vmatprep.subr.mxu0 0.0
  %406 = vmatpush1.msra.mxu0 %v362
  %407 = vmatprep.subr.mxu0 0.0
  %408 = vmatpush1.msra.mxu0 %v361
  %409 = vmatprep.subr.mxu0 0.0
  %410 = vmatpush1.msra.mxu0 %v360
  %411 = vmatprep.subr.mxu0 0.0
  %412 = vmatpush2.msra.mxu0 0.0
  %413 = vmatprep.subr.mxu0 0.0
  %414 = vmatpush2.msra.mxu0 0.0
  %415 = vmatprep.subr.mxu0 0.0
  %416 = vmatpush2.msra.mxu0 0.0
  %417 = vmatprep.subr.mxu0 0.0
  %418 = vmatpush2.msra.mxu0 0.0
  %419 = vmatprep.subr.mxu0 0.0
  %420 = vmatpush2.msra.mxu0 0.0
  %421 = vmatprep.subr.mxu0 0.0
  %422 = vmatpush2.msra.mxu0 0.0
  %423 = vmatprep.subr.mxu0 0.0
  %424 = vmatpush2.msra.mxu0 0.0
  %425 = vmatprep.subr.mxu0 0.0
  %426 = vmatpush2.msra.mxu0 0.0
  %427 = vmatprep.subr.mxu0 0.0
  %428 = vmatpush2.msra.mxu0 0.0
  %429 = vmatprep.subr.mxu0 0.0
  %430 = vmatpush2.msra.mxu0 0.0
  %431 = vmatprep.subr.mxu0 0.0
  %432 = vmatpush2.msra.mxu0 0.0
  %433 = vmatprep.subr.mxu0 0.0
  %434 = vmatpush2.msra.mxu0 0.0
  %435 = vmatprep.subr.mxu0 0.0
  %436 = vmatpush2.msra.mxu0 0.0
  %437 = vmatprep.subr.mxu0 0.0
  %438 = vmatpush2.msra.mxu0 0.0
  %439 = vmatprep.subr.mxu0 0.0
  %440 = vmatpush2.msra.mxu0 0.0
  %441 = vmatprep.subr.mxu0 0.0
  %442 = vmatpush2.msra.mxu0 0.0
  %443 = vmatprep.mubr.f32.mxu0 0.0
  %444 = vmatmul.mubr.f32.gmra.mxu0 %v377
  %v445 = vpop.f32.mrf.mxu0
  %v446 = vadd.f32 %v373, %v445
  %v447 = vpop.f32.mrf.mxu0
  %448 = vdwg.mxu0
  %v449 = vld [vmem:[%s6] sm:$0xff]
  %v450 = vld [vmem:[%s6 + $0x8] sm:$0xff]
  %v451 = vld [vmem:[%s6 + $0x10] sm:$0xff]
  %v452 = vld [vmem:[%s6 + $0x18] sm:$0xff]
  %v453 = vld [vmem:[%s6 + $0x20] sm:$0xff]
  %v454 = vld [vmem:[%s6 + $0x28] sm:$0xff]
  %v455 = vld [vmem:[%s6 + $0x30] sm:$0xff]
  %v456 = vld [vmem:[%s6 + $0x38] sm:$0xff]
  %v457 = vld [vmem:[%s6 + $0x40] sm:$0xff]
  %v458 = vld [vmem:[%s6 + $0x48] sm:$0xff]
  %v459 = vld [vmem:[%s6 + $0x50] sm:$0xff]
  %v460 = vld [vmem:[%s6 + $0x58] sm:$0xff]
  %v461 = vld [vmem:[%s6 + $0x60] sm:$0xff]
  %v462 = vld [vmem:[%s6 + $0x68] sm:$0xff]
  %v463 = vld [vmem:[%s6 + $0x70] sm:$0xff]
  %v464 = vld [vmem:[%s6 + $0x78] sm:$0xff]
  %v465 = vld [vmem:[%s7] sm:$0x1]
  %v467 = vlaneseq
  %v468 = vshrl.u32 %v467, 7
  %v469 = vsub.s32 0, %v468
  %v470 = vrot.slane %v465, %v469
  %472 = vmatprep.subr.mxu0 0.0
  %473 = vmatpush1.msra.mxu0 %v464
  %474 = vmatprep.subr.mxu0 0.0
  %475 = vmatpush1.msra.mxu0 %v463
  %476 = vmatprep.subr.mxu0 0.0
  %477 = vmatpush1.msra.mxu0 %v462
  %478 = vmatprep.subr.mxu0 0.0
  %479 = vmatpush1.msra.mxu0 %v461
  %480 = vmatprep.subr.mxu0 0.0
  %481 = vmatpush1.msra.mxu0 %v460
  %482 = vmatprep.subr.mxu0 0.0
  %483 = vmatpush1.msra.mxu0 %v459
  %484 = vmatprep.subr.mxu0 0.0
  %485 = vmatpush1.msra.mxu0 %v458
  %486 = vmatprep.subr.mxu0 0.0
  %487 = vmatpush1.msra.mxu0 %v457
  %488 = vmatprep.subr.mxu0 0.0
  %489 = vmatpush1.msra.mxu0 %v456
  %490 = vmatprep.subr.mxu0 0.0
  %491 = vmatpush1.msra.mxu0 %v455
  %492 = vmatprep.subr.mxu0 0.0
  %493 = vmatpush1.msra.mxu0 %v454
  %494 = vmatprep.subr.mxu0 0.0
  %495 = vmatpush1.msra.mxu0 %v453
  %496 = vmatprep.subr.mxu0 0.0
  %497 = vmatpush1.msra.mxu0 %v452
  %498 = vmatprep.subr.mxu0 0.0
  %499 = vmatpush1.msra.mxu0 %v451
  %500 = vmatprep.subr.mxu0 0.0
  %501 = vmatpush1.msra.mxu0 %v450
  %502 = vmatprep.subr.mxu0 0.0
  %503 = vmatpush1.msra.mxu0 %v449
  %504 = vmatprep.subr.mxu0 0.0
  %505 = vmatpush2.msra.mxu0 0.0
  %506 = vmatprep.subr.mxu0 0.0
  %507 = vmatpush2.msra.mxu0 0.0
  %508 = vmatprep.subr.mxu0 0.0
  %509 = vmatpush2.msra.mxu0 0.0
  %510 = vmatprep.subr.mxu0 0.0
  %511 = vmatpush2.msra.mxu0 0.0
  %512 = vmatprep.subr.mxu0 0.0
  %513 = vmatpush2.msra.mxu0 0.0
  %514 = vmatprep.subr.mxu0 0.0
  %515 = vmatpush2.msra.mxu0 0.0
  %516 = vmatprep.subr.mxu0 0.0
  %517 = vmatpush2.msra.mxu0 0.0
  %518 = vmatprep.subr.mxu0 0.0
  %519 = vmatpush2.msra.mxu0 0.0
  %520 = vmatprep.subr.mxu0 0.0
  %521 = vmatpush2.msra.mxu0 0.0
  %522 = vmatprep.subr.mxu0 0.0
  %523 = vmatpush2.msra.mxu0 0.0
  %524 = vmatprep.subr.mxu0 0.0
  %525 = vmatpush2.msra.mxu0 0.0
  %526 = vmatprep.subr.mxu0 0.0
  %527 = vmatpush2.msra.mxu0 0.0
  %528 = vmatprep.subr.mxu0 0.0
  %529 = vmatpush2.msra.mxu0 0.0
  %530 = vmatprep.subr.mxu0 0.0
  %531 = vmatpush2.msra.mxu0 0.0
  %532 = vmatprep.subr.mxu0 0.0
  %533 = vmatpush2.msra.mxu0 0.0
  %534 = vmatprep.subr.mxu0 0.0
  %535 = vmatpush2.msra.mxu0 0.0
  %536 = vmatprep.mubr.f32.mxu0 0.0
  %537 = vmatmul.mubr.f32.gmra.mxu0 %v446
  %v538 = vpop.f32.mrf.mxu0
  %v539 = vadd.f32 %v470, %v538
  %v540 = vpop.f32.mrf.mxu0
  %541 = vdwg.mxu0
  %v542 = vld [vmem:[%s8] sm:$0x3]
  %v543 = vmul.f32 %v539, 0.5
  %v544 = vmul.f32 %v543, 1.442695
  %v545 = vpow.pop %v544
  %547 = vrot.lane.b32.xlu0 %v545, 112
  %v548 = vpop.permute.xlu0 %547
  %v550 = vmul.f32 %v542, %v548
  %v551 = vadd.f32 %v539, %v550
  %v552 = vld [vmem:[%s9] sm:$0xff]
  %v553 = vld [vmem:[%s9 + $0x8] sm:$0xff]
  %v554 = vld [vmem:[%s10] sm:$0x1]
  %v556 = vlaneseq
  %v557 = vshrl.u32 %v556, 7
  %v558 = vsub.s32 0, %v557
  %v559 = vrot.slane %v554, %v558
  %vm561 = vcmask 130048
  %v563 = vsel %vm561, %v551, 0
  %565 = vmatprep.subr.mxu0 0.0
  %566 = vmatpush1.msra.mxu0 0.0
  %567 = vmatprep.subr.mxu0 0.0
  %568 = vmatpush1.msra.mxu0 0.0
  %569 = vmatprep.subr.mxu0 0.0
  %570 = vmatpush1.msra.mxu0 0.0
  %571 = vmatprep.subr.mxu0 0.0
  %572 = vmatpush1.msra.mxu0 0.0
  %573 = vmatprep.subr.mxu0 0.0
  %574 = vmatpush1.msra.mxu0 0.0
  %575 = vmatprep.subr.mxu0 0.0
  %576 = vmatpush1.msra.mxu0 0.0
  %577 = vmatprep.subr.mxu0 0.0
  %578 = vmatpush1.msra.mxu0 0.0
  %579 = vmatprep.subr.mxu0 0.0
  %580 = vmatpush1.msra.mxu0 0.0
  %581 = vmatprep.subr.mxu0 0.0
  %582 = vmatpush1.msra.mxu0 0.0
  %583 = vmatprep.subr.mxu0 0.0
  %584 = vmatpush1.msra.mxu0 0.0
  %585 = vmatprep.subr.mxu0 0.0
  %586 = vmatpush1.msra.mxu0 0.0
  %587 = vmatprep.subr.mxu0 0.0
  %588 = vmatpush1.msra.mxu0 0.0
  %589 = vmatprep.subr.mxu0 0.0
  %590 = vmatpush1.msra.mxu0 0.0
  %591 = vmatprep.subr.mxu0 0.0
  %592 = vmatpush1.msra.mxu0 0.0
  %593 = vmatprep.subr.mxu0 0.0
  %594 = vmatpush1.msra.mxu0 %v553
  %595 = vmatprep.subr.mxu0 0.0
  %596 = vmatpush1.msra.mxu0 %v552
  %597 = vmatprep.subr.mxu0 0.0
  %598 = vmatpush2.msra.mxu0 0.0
  %599 = vmatprep.subr.mxu0 0.0
  %600 = vmatpush2.msra.mxu0 0.0
  %601 = vmatprep.subr.mxu0 0.0
  %602 = vmatpush2.msra.mxu0 0.0
  %603 = vmatprep.subr.mxu0 0.0
  %604 = vmatpush2.msra.mxu0 0.0
  %605 = vmatprep.subr.mxu0 0.0
  %606 = vmatpush2.msra.mxu0 0.0
  %607 = vmatprep.subr.mxu0 0.0
  %608 = vmatpush2.msra.mxu0 0.0
  %609 = vmatprep.subr.mxu0 0.0
  %610 = vmatpush2.msra.mxu0 0.0
  %611 = vmatprep.subr.mxu0 0.0
  %612 = vmatpush2.msra.mxu0 0.0
  %613 = vmatprep.subr.mxu0 0.0
  %614 = vmatpush2.msra.mxu0 0.0
  %615 = vmatprep.subr.mxu0 0.0
  %616 = vmatpush2.msra.mxu0 0.0
  %617 = vmatprep.subr.mxu0 0.0
  %618 = vmatpush2.msra.mxu0 0.0
  %619 = vmatprep.subr.mxu0 0.0
  %620 = vmatpush2.msra.mxu0 0.0
  %621 = vmatprep.subr.mxu0 0.0
  %622 = vmatpush2.msra.mxu0 0.0
  %623 = vmatprep.subr.mxu0 0.0
  %624 = vmatpush2.msra.mxu0 0.0
  %625 = vmatprep.subr.mxu0 0.0
  %626 = vmatpush2.msra.mxu0 0.0
  %627 = vmatprep.subr.mxu0 0.0
  %628 = vmatpush2.msra.mxu0 0.0
  %629 = vmatprep.mubr.f32.mxu0 0.0
  %630 = vmatmul.mubr.f32.gmra.mxu0 %v563
  %v631 = vpop.f32.mrf.mxu0
  %v632 = vadd.f32 %v559, %v631
  %v633 = vpop.f32.mrf.mxu0
  %634 = vdwg.mxu0
  %v635 = vld [vmem:[%s11] sm:$0xff]
  %v636 = vld [vmem:[%s11 + $0x8] sm:$0xff]
  %v637 = vld [vmem:[%s11 + $0x10] sm:$0xff]
  %v638 = vld [vmem:[%s11 + $0x18] sm:$0xff]
  %v639 = vld [vmem:[%s11 + $0x20] sm:$0xff]
  %v640 = vld [vmem:[%s11 + $0x28] sm:$0xff]
  %v641 = vld [vmem:[%s11 + $0x30] sm:$0xff]
  %v642 = vld [vmem:[%s11 + $0x38] sm:$0xff]
  %v643 = vld [vmem:[%s11 + $0x40] sm:$0xff]
  %v644 = vld [vmem:[%s11 + $0x48] sm:$0xff]
  %v645 = vld [vmem:[%s11 + $0x50] sm:$0xff]
  %v646 = vld [vmem:[%s11 + $0x58] sm:$0xff]
  %v647 = vld [vmem:[%s11 + $0x60] sm:$0xff]
  %v648 = vld [vmem:[%s11 + $0x68] sm:$0xff]
  %v649 = vld [vmem:[%s11 + $0x70] sm:$0xff]
  %v650 = vld [vmem:[%s11 + $0x78] sm:$0xff]
  %v651 = vld [vmem:[%s11 + $0x80] sm:$0xff]
  %v652 = vld [vmem:[%s11 + $0x88] sm:$0xff]
  %v653 = vld [vmem:[%s11 + $0x90] sm:$0xff]
  %v654 = vld [vmem:[%s11 + $0x98] sm:$0xff]
  %v655 = vld [vmem:[%s11 + $0xa0] sm:$0xff]
  %v656 = vld [vmem:[%s11 + $0xa8] sm:$0xff]
  %v657 = vld [vmem:[%s11 + $0xb0] sm:$0xff]
  %v658 = vld [vmem:[%s11 + $0xb8] sm:$0xff]
  %v659 = vld [vmem:[%s11 + $0xc0] sm:$0xff]
  %v660 = vld [vmem:[%s11 + $0xc8] sm:$0xff]
  %v661 = vld [vmem:[%s11 + $0xd0] sm:$0xff]
  %v662 = vld [vmem:[%s11 + $0xd8] sm:$0xff]
  %v663 = vld [vmem:[%s11 + $0xe0] sm:$0xff]
  %v664 = vld [vmem:[%s11 + $0xe8] sm:$0xff]
  %v665 = vld [vmem:[%s11 + $0xf0] sm:$0xff]
  %v666 = vld [vmem:[%s11 + $0xf8] sm:$0xff]
  %v667 = vld [vmem:[%s11 + $0x100] sm:$0xff]
  %v668 = vld [vmem:[%s11 + $0x108] sm:$0xff]
  %v669 = vld [vmem:[%s11 + $0x110] sm:$0xff]
  %v670 = vld [vmem:[%s11 + $0x118] sm:$0xff]
  %v671 = vld [vmem:[%s11 + $0x120] sm:$0xff]
  %v672 = vld [vmem:[%s11 + $0x128] sm:$0xff]
  %v673 = vld [vmem:[%s11 + $0x130] sm:$0xff]
  %v674 = vld [vmem:[%s11 + $0x138] sm:$0xff]
  %v675 = vld [vmem:[%s11 + $0x140] sm:$0xff]
  %v676 = vld [vmem:[%s11 + $0x148] sm:$0xff]
  %v677 = vld [vmem:[%s11 + $0x150] sm:$0xff]
  %v678 = vld [vmem:[%s11 + $0x158] sm:$0xff]
  %v679 = vld [vmem:[%s11 + $0x160] sm:$0xff]
  %v680 = vld [vmem:[%s11 + $0x168] sm:$0xff]
  %v681 = vld [vmem:[%s11 + $0x170] sm:$0xff]
  %v682 = vld [vmem:[%s11 + $0x178] sm:$0xff]
  %v683 = vld [vmem:[%s11 + $0x180] sm:$0xff]
  %v684 = vld [vmem:[%s11 + $0x188] sm:$0xff]
  %v685 = vld [vmem:[%s11 + $0x190] sm:$0xff]
  %v686 = vld [vmem:[%s11 + $0x198] sm:$0xff]
  %v687 = vld [vmem:[%s11 + $0x1a0] sm:$0xff]
  %v688 = vld [vmem:[%s11 + $0x1a8] sm:$0xff]
  %v689 = vld [vmem:[%s11 + $0x1b0] sm:$0xff]
  %v690 = vld [vmem:[%s11 + $0x1b8] sm:$0xff]
  %v691 = vld [vmem:[%s11 + $0x1c0] sm:$0xff]
  %v692 = vld [vmem:[%s11 + $0x1c8] sm:$0xff]
  %v693 = vld [vmem:[%s11 + $0x1d0] sm:$0xff]
  %v694 = vld [vmem:[%s11 + $0x1d8] sm:$0xff]
  %v695 = vld [vmem:[%s11 + $0x1e0] sm:$0xff]
  %v696 = vld [vmem:[%s11 + $0x1e8] sm:$0xff]
  %v697 = vld [vmem:[%s11 + $0x1f0] sm:$0xff]
  %v698 = vld [vmem:[%s11 + $0x1f8] sm:$0xff]
  %v699 = vld [vmem:[%s12] sm:$0xff]
  %v701 = vlaneseq
  %v702 = vshrl.u32 %v701, 7
  %v703 = vsub.s32 0, %v702
  %v704 = vrot.slane %v699, %v703
  %v705 = vlaneseq
  %v706 = vshrl.u32 %v705, 7
  %v707 = vsub.s32 1, %v706
  %v708 = vrot.slane %v699, %v707
  %v709 = vlaneseq
  %v710 = vshrl.u32 %v709, 7
  %v711 = vsub.s32 2, %v710
  %v712 = vrot.slane %v699, %v711
  %v713 = vlaneseq
  %v714 = vshrl.u32 %v713, 7
  %v715 = vsub.s32 3, %v714
  %v716 = vrot.slane %v699, %v715
  %v717 = vlaneseq
  %v718 = vshrl.u32 %v717, 7
  %v719 = vsub.s32 4, %v718
  %v720 = vrot.slane %v699, %v719
  %v721 = vlaneseq
  %v722 = vshrl.u32 %v721, 7
  %v723 = vsub.s32 5, %v722
  %v724 = vrot.slane %v699, %v723
  %v725 = vlaneseq
  %v726 = vshrl.u32 %v725, 7
  %v727 = vsub.s32 6, %v726
  %v728 = vrot.slane %v699, %v727
  %v729 = vlaneseq
  %v730 = vshrl.u32 %v729, 7
  %v731 = vsub.s32 7, %v730
  %v732 = vrot.slane %v699, %v731
  %v742 = vsel %vm375, %v632, 0
  %744 = vmatprep.subr.mxu0 0.0
  %745 = vmatpush1.msra.mxu0 0.0
  %746 = vmatprep.subr.mxu0 0.0
  %747 = vmatpush1.msra.mxu0 0.0
  %748 = vmatprep.subr.mxu0 0.0
  %749 = vmatpush1.msra.mxu0 0.0
  %750 = vmatprep.subr.mxu0 0.0
  %751 = vmatpush1.msra.mxu0 0.0
  %752 = vmatprep.subr.mxu0 0.0
  %753 = vmatpush1.msra.mxu0 0.0
  %754 = vmatprep.subr.mxu0 0.0
  %755 = vmatpush1.msra.mxu0 0.0
  %756 = vmatprep.subr.mxu0 0.0
  %757 = vmatpush1.msra.mxu0 0.0
  %758 = vmatprep.subr.mxu0 0.0
  %759 = vmatpush1.msra.mxu0 0.0
  %760 = vmatprep.subr.mxu0 %v692
  %761 = vmatpush1.msra.mxu0 %v691
  %762 = vmatprep.subr.mxu0 %v684
  %763 = vmatpush1.msra.mxu0 %v683
  %764 = vmatprep.subr.mxu0 %v676
  %765 = vmatpush1.msra.mxu0 %v675
  %766 = vmatprep.subr.mxu0 %v668
  %767 = vmatpush1.msra.mxu0 %v667
  %768 = vmatprep.subr.mxu0 %v660
  %769 = vmatpush1.msra.mxu0 %v659
  %770 = vmatprep.subr.mxu0 %v652
  %771 = vmatpush1.msra.mxu0 %v651
  %772 = vmatprep.subr.mxu0 %v644
  %773 = vmatpush1.msra.mxu0 %v643
  %774 = vmatprep.subr.mxu0 %v636
  %775 = vmatpush1.msra.mxu0 %v635
  %776 = vmatprep.subr.mxu0 0.0
  %777 = vmatpush2.msra.mxu0 0.0
  %778 = vmatprep.subr.mxu0 0.0
  %779 = vmatpush2.msra.mxu0 0.0
  %780 = vmatprep.subr.mxu0 0.0
  %781 = vmatpush2.msra.mxu0 0.0
  %782 = vmatprep.subr.mxu0 0.0
  %783 = vmatpush2.msra.mxu0 0.0
  %784 = vmatprep.subr.mxu0 0.0
  %785 = vmatpush2.msra.mxu0 0.0
  %786 = vmatprep.subr.mxu0 0.0
  %787 = vmatpush2.msra.mxu0 0.0
  %788 = vmatprep.subr.mxu0 0.0
  %789 = vmatpush2.msra.mxu0 0.0
  %790 = vmatprep.subr.mxu0 0.0
  %791 = vmatpush2.msra.mxu0 0.0
  %792 = vmatprep.subr.mxu0 0.0
  %793 = vmatpush2.msra.mxu0 0.0
  %794 = vmatprep.subr.mxu0 0.0
  %795 = vmatpush2.msra.mxu0 0.0
  %796 = vmatprep.subr.mxu0 0.0
  %797 = vmatpush2.msra.mxu0 0.0
  %798 = vmatprep.subr.mxu0 0.0
  %799 = vmatpush2.msra.mxu0 0.0
  %800 = vmatprep.subr.mxu0 0.0
  %801 = vmatpush2.msra.mxu0 0.0
  %802 = vmatprep.subr.mxu0 0.0
  %803 = vmatpush2.msra.mxu0 0.0
  %804 = vmatprep.subr.mxu0 0.0
  %805 = vmatpush2.msra.mxu0 0.0
  %806 = vmatprep.subr.mxu0 0.0
  %807 = vmatpush2.msra.mxu0 0.0
  %808 = vmatprep.mubr.f32.mxu0 0.0
  %809 = vmatmul.mubr.f32.gmra.mxu0 %v742
  %v810 = vpop.f32.mrf.mxu0
  %v811 = vadd.f32 %v704, %v810
  %v812 = vpop.f32.mrf.mxu0
  %v813 = vadd.f32 %v708, %v812
  %814 = vdwg.mxu0
  %815 = vmatprep.subr.mxu0 0.0
  %816 = vmatpush1.msra.mxu0 0.0
  %817 = vmatprep.subr.mxu0 0.0
  %818 = vmatpush1.msra.mxu0 0.0
  %819 = vmatprep.subr.mxu0 0.0
  %820 = vmatpush1.msra.mxu0 0.0
  %821 = vmatprep.subr.mxu0 0.0
  %822 = vmatpush1.msra.mxu0 0.0
  %823 = vmatprep.subr.mxu0 0.0
  %824 = vmatpush1.msra.mxu0 0.0
  %825 = vmatprep.subr.mxu0 0.0
  %826 = vmatpush1.msra.mxu0 0.0
  %827 = vmatprep.subr.mxu0 0.0
  %828 = vmatpush1.msra.mxu0 0.0
  %829 = vmatprep.subr.mxu0 0.0
  %830 = vmatpush1.msra.mxu0 0.0
  %831 = vmatprep.subr.mxu0 %v694
  %832 = vmatpush1.msra.mxu0 %v693
  %833 = vmatprep.subr.mxu0 %v686
  %834 = vmatpush1.msra.mxu0 %v685
  %835 = vmatprep.subr.mxu0 %v678
  %836 = vmatpush1.msra.mxu0 %v677
  %837 = vmatprep.subr.mxu0 %v670
  %838 = vmatpush1.msra.mxu0 %v669
  %839 = vmatprep.subr.mxu0 %v662
  %840 = vmatpush1.msra.mxu0 %v661
  %841 = vmatprep.subr.mxu0 %v654
  %842 = vmatpush1.msra.mxu0 %v653
  %843 = vmatprep.subr.mxu0 %v646
  %844 = vmatpush1.msra.mxu0 %v645
  %845 = vmatprep.subr.mxu0 %v638
  %846 = vmatpush1.msra.mxu0 %v637
  %847 = vmatprep.subr.mxu0 0.0
  %848 = vmatpush2.msra.mxu0 0.0
  %849 = vmatprep.subr.mxu0 0.0
  %850 = vmatpush2.msra.mxu0 0.0
  %851 = vmatprep.subr.mxu0 0.0
  %852 = vmatpush2.msra.mxu0 0.0
  %853 = vmatprep.subr.mxu0 0.0
  %854 = vmatpush2.msra.mxu0 0.0
  %855 = vmatprep.subr.mxu0 0.0
  %856 = vmatpush2.msra.mxu0 0.0
  %857 = vmatprep.subr.mxu0 0.0
  %858 = vmatpush2.msra.mxu0 0.0
  %859 = vmatprep.subr.mxu0 0.0
  %860 = vmatpush2.msra.mxu0 0.0
  %861 = vmatprep.subr.mxu0 0.0
  %862 = vmatpush2.msra.mxu0 0.0
  %863 = vmatprep.subr.mxu0 0.0
  %864 = vmatpush2.msra.mxu0 0.0
  %865 = vmatprep.subr.mxu0 0.0
  %866 = vmatpush2.msra.mxu0 0.0
  %867 = vmatprep.subr.mxu0 0.0
  %868 = vmatpush2.msra.mxu0 0.0
  %869 = vmatprep.subr.mxu0 0.0
  %870 = vmatpush2.msra.mxu0 0.0
  %871 = vmatprep.subr.mxu0 0.0
  %872 = vmatpush2.msra.mxu0 0.0
  %873 = vmatprep.subr.mxu0 0.0
  %874 = vmatpush2.msra.mxu0 0.0
  %875 = vmatprep.subr.mxu0 0.0
  %876 = vmatpush2.msra.mxu0 0.0
  %877 = vmatprep.subr.mxu0 0.0
  %878 = vmatpush2.msra.mxu0 0.0
  %879 = vmatprep.mubr.f32.mxu0 0.0
  %880 = vmatmul.mubr.f32.gmra.mxu0 %v742
  %v881 = vpop.f32.mrf.mxu0
  %v882 = vadd.f32 %v712, %v881
  %v883 = vpop.f32.mrf.mxu0
  %v884 = vadd.f32 %v716, %v883
  %885 = vdwg.mxu0
  %886 = vmatprep.subr.mxu0 0.0
  %887 = vmatpush1.msra.mxu0 0.0
  %888 = vmatprep.subr.mxu0 0.0
  %889 = vmatpush1.msra.mxu0 0.0
  %890 = vmatprep.subr.mxu0 0.0
  %891 = vmatpush1.msra.mxu0 0.0
  %892 = vmatprep.subr.mxu0 0.0
  %893 = vmatpush1.msra.mxu0 0.0
  %894 = vmatprep.subr.mxu0 0.0
  %895 = vmatpush1.msra.mxu0 0.0
  %896 = vmatprep.subr.mxu0 0.0
  %897 = vmatpush1.msra.mxu0 0.0
  %898 = vmatprep.subr.mxu0 0.0
  %899 = vmatpush1.msra.mxu0 0.0
  %900 = vmatprep.subr.mxu0 0.0
  %901 = vmatpush1.msra.mxu0 0.0
  %902 = vmatprep.subr.mxu0 %v696
  %903 = vmatpush1.msra.mxu0 %v695
  %904 = vmatprep.subr.mxu0 %v688
  %905 = vmatpush1.msra.mxu0 %v687
  %906 = vmatprep.subr.mxu0 %v680
  %907 = vmatpush1.msra.mxu0 %v679
  %908 = vmatprep.subr.mxu0 %v672
  %909 = vmatpush1.msra.mxu0 %v671
  %910 = vmatprep.subr.mxu0 %v664
  %911 = vmatpush1.msra.mxu0 %v663
  %912 = vmatprep.subr.mxu0 %v656
  %913 = vmatpush1.msra.mxu0 %v655
  %914 = vmatprep.subr.mxu0 %v648
  %915 = vmatpush1.msra.mxu0 %v647
  %916 = vmatprep.subr.mxu0 %v640
  %917 = vmatpush1.msra.mxu0 %v639
  %918 = vmatprep.subr.mxu0 0.0
  %919 = vmatpush2.msra.mxu0 0.0
  %920 = vmatprep.subr.mxu0 0.0
  %921 = vmatpush2.msra.mxu0 0.0
  %922 = vmatprep.subr.mxu0 0.0
  %923 = vmatpush2.msra.mxu0 0.0
  %924 = vmatprep.subr.mxu0 0.0
  %925 = vmatpush2.msra.mxu0 0.0
  %926 = vmatprep.subr.mxu0 0.0
  %927 = vmatpush2.msra.mxu0 0.0
  %928 = vmatprep.subr.mxu0 0.0
  %929 = vmatpush2.msra.mxu0 0.0
  %930 = vmatprep.subr.mxu0 0.0
  %931 = vmatpush2.msra.mxu0 0.0
  %932 = vmatprep.subr.mxu0 0.0
  %933 = vmatpush2.msra.mxu0 0.0
  %934 = vmatprep.subr.mxu0 0.0
  %935 = vmatpush2.msra.mxu0 0.0
  %936 = vmatprep.subr.mxu0 0.0
  %937 = vmatpush2.msra.mxu0 0.0
  %938 = vmatprep.subr.mxu0 0.0
  %939 = vmatpush2.msra.mxu0 0.0
  %940 = vmatprep.subr.mxu0 0.0
  %941 = vmatpush2.msra.mxu0 0.0
  %942 = vmatprep.subr.mxu0 0.0
  %943 = vmatpush2.msra.mxu0 0.0
  %944 = vmatprep.subr.mxu0 0.0
  %945 = vmatpush2.msra.mxu0 0.0
  %946 = vmatprep.subr.mxu0 0.0
  %947 = vmatpush2.msra.mxu0 0.0
  %948 = vmatprep.subr.mxu0 0.0
  %949 = vmatpush2.msra.mxu0 0.0
  %950 = vmatprep.mubr.f32.mxu0 0.0
  %951 = vmatmul.mubr.f32.gmra.mxu0 %v742
  %v952 = vpop.f32.mrf.mxu0
  %v953 = vadd.f32 %v720, %v952
  %v954 = vpop.f32.mrf.mxu0
  %v955 = vadd.f32 %v724, %v954
  %956 = vdwg.mxu0
  %957 = vmatprep.subr.mxu0 0.0
  %958 = vmatpush1.msra.mxu0 0.0
  %959 = vmatprep.subr.mxu0 0.0
  %960 = vmatpush1.msra.mxu0 0.0
  %961 = vmatprep.subr.mxu0 0.0
  %962 = vmatpush1.msra.mxu0 0.0
  %963 = vmatprep.subr.mxu0 0.0
  %964 = vmatpush1.msra.mxu0 0.0
  %965 = vmatprep.subr.mxu0 0.0
  %966 = vmatpush1.msra.mxu0 0.0
  %967 = vmatprep.subr.mxu0 0.0
  %968 = vmatpush1.msra.mxu0 0.0
  %969 = vmatprep.subr.mxu0 0.0
  %970 = vmatpush1.msra.mxu0 0.0
  %971 = vmatprep.subr.mxu0 0.0
  %972 = vmatpush1.msra.mxu0 0.0
  %973 = vmatprep.subr.mxu0 %v698
  %974 = vmatpush1.msra.mxu0 %v697
  %975 = vmatprep.subr.mxu0 %v690
  %976 = vmatpush1.msra.mxu0 %v689
  %977 = vmatprep.subr.mxu0 %v682
  %978 = vmatpush1.msra.mxu0 %v681
  %979 = vmatprep.subr.mxu0 %v674
  %980 = vmatpush1.msra.mxu0 %v673
  %981 = vmatprep.subr.mxu0 %v666
  %982 = vmatpush1.msra.mxu0 %v665
  %983 = vmatprep.subr.mxu0 %v658
  %984 = vmatpush1.msra.mxu0 %v657
  %985 = vmatprep.subr.mxu0 %v650
  %986 = vmatpush1.msra.mxu0 %v649
  %987 = vmatprep.subr.mxu0 %v642
  %988 = vmatpush1.msra.mxu0 %v641
  %989 = vmatprep.subr.mxu0 0.0
  %990 = vmatpush2.msra.mxu0 0.0
  %991 = vmatprep.subr.mxu0 0.0
  %992 = vmatpush2.msra.mxu0 0.0
  %993 = vmatprep.subr.mxu0 0.0
  %994 = vmatpush2.msra.mxu0 0.0
  %995 = vmatprep.subr.mxu0 0.0
  %996 = vmatpush2.msra.mxu0 0.0
  %997 = vmatprep.subr.mxu0 0.0
  %998 = vmatpush2.msra.mxu0 0.0
  %999 = vmatprep.subr.mxu0 0.0
  %1000 = vmatpush2.msra.mxu0 0.0
  %1001 = vmatprep.subr.mxu0 0.0
  %1002 = vmatpush2.msra.mxu0 0.0
  %1003 = vmatprep.subr.mxu0 0.0
  %1004 = vmatpush2.msra.mxu0 0.0
  %1005 = vmatprep.subr.mxu0 0.0
  %1006 = vmatpush2.msra.mxu0 0.0
  %1007 = vmatprep.subr.mxu0 0.0
  %1008 = vmatpush2.msra.mxu0 0.0
  %1009 = vmatprep.subr.mxu0 0.0
  %1010 = vmatpush2.msra.mxu0 0.0
  %1011 = vmatprep.subr.mxu0 0.0
  %1012 = vmatpush2.msra.mxu0 0.0
  %1013 = vmatprep.subr.mxu0 0.0
  %1014 = vmatpush2.msra.mxu0 0.0
  %1015 = vmatprep.subr.mxu0 0.0
  %1016 = vmatpush2.msra.mxu0 0.0
  %1017 = vmatprep.subr.mxu0 0.0
  %1018 = vmatpush2.msra.mxu0 0.0
  %1019 = vmatprep.subr.mxu0 0.0
  %1020 = vmatpush2.msra.mxu0 0.0
  %1021 = vmatprep.mubr.f32.mxu0 0.0
  %1022 = vmatmul.mubr.f32.gmra.mxu0 %v742
  %v1023 = vpop.f32.mrf.mxu0
  %v1024 = vadd.f32 %v728, %v1023
  %v1025 = vpop.f32.mrf.mxu0
  %v1026 = vadd.f32 %v732, %v1025
  %1027 = vdwg.mxu0
  %v1028 = vmax.f32 %v811, 0.0
  %v1029 = vmax.f32 %v813, 0.0
  %v1030 = vmax.f32 %v882, 0.0
  %v1031 = vmax.f32 %v884, 0.0
  %v1032 = vmax.f32 %v953, 0.0
  %v1033 = vmax.f32 %v955, 0.0
  %v1034 = vmax.f32 %v1024, 0.0
  %v1035 = vmax.f32 %v1026, 0.0
  %v1044 = vcombine.low %v1028, %v1029
  %v1045 = vcombine.low %v1030, %v1031
  %v1047 = vunpack.c.l.s4 1983009808
  %v1048 = vunpack.c.0.s8 %v1047
  %v1049 = vlaneseq
  %v1050 = vshrl.u32 %v1049, 7
  %v1051 = vsub.s32 %v1048, %v1050
  %v1052 = vrot.slane %v1044, %v1051
  %v1054 = vunpack.c.l.s4 1983009808
  %v1055 = vunpack.c.0.s8 %v1054
  %v1056 = vlaneseq
  %v1057 = vshrl.u32 %v1056, 7
  %v1058 = vsub.s32 %v1055, %v1057
  %v1059 = vrot.slane %v1045, %v1058
  %v1060 = vcombine.low %v1052, %v1059
  %v1061 = vcombine.low %v1032, %v1033
  %v1062 = vcombine.low %v1034, %v1035
  %v1064 = vunpack.c.l.s4 1983009808
  %v1065 = vunpack.c.0.s8 %v1064
  %v1066 = vlaneseq
  %v1067 = vshrl.u32 %v1066, 7
  %v1068 = vsub.s32 %v1065, %v1067
  %v1069 = vrot.slane %v1061, %v1068
  %v1071 = vunpack.c.l.s4 1983009808
  %v1072 = vunpack.c.0.s8 %v1071
  %v1073 = vlaneseq
  %v1074 = vshrl.u32 %v1073, 7
  %v1075 = vsub.s32 %v1072, %v1074
  %v1076 = vrot.slane %v1062, %v1075
  %v1077 = vcombine.low %v1069, %v1076
  %1080 = vst [vmem:[%s13] sm:$0xff] %v1060
  %1081 = vst [vmem:[%s13 + $0x8] sm:$0xff] %v1077
  %vm1082 = vcmask 254976
  %1083 = vst.msk [vmem:[%s14] sm:$0x3] %vm1082, %v539
  // Predicated region
  $region54: #{vae_forward.10} parent=0 // pred_check
    _
  $region55: #{vae_forward.10} parent=0 // pred_check_branch
    %1085 = sbr.rel (0) target = $region57
  $region56: #{vae_forward.10} parent=0 // pred_region
    _
  $region57: #{vae_forward.10} parent=0 // pred_fallthru
    _
  // Predicated region
  $region58: #{vae_forward.10} parent=0 // pred_check
    _
  $region59: #{vae_forward.10} parent=0 // pred_check_branch
    %1087 = sbr.rel (0) target = $region61
  $region60: #{vae_forward.10} parent=0 // pred_region
    _
  $region61: #{vae_forward.10} parent=0 // pred_fallthru
    _
  // Predicated region
  $region62: #{vae_forward.10} parent=0 // pred_check
    _
  $region63: #{vae_forward.10} parent=0 // pred_check_branch
    %1089 = sbr.rel (0) target = $region65
  $region64: #{vae_forward.10} parent=0 // pred_region
    _
  $region65: #{vae_forward.10} parent=0 // pred_fallthru
    _
  // Predicated region
  $region66: #{vae_forward.10} parent=0 // pred_check
    _
  $region67: #{vae_forward.10} parent=0 // pred_check_branch
    %1091 = sbr.rel (0) target = $region69
  $region68: #{vae_forward.10} parent=0 // pred_region
    _
  $region69: #{vae_forward.10} parent=0 // pred_fallthru
    _

// kernel: tile.27
$region0: #{tile.27}
  #allocation0 [shape = 's32[1]{0}', space=sflag, size = 0x4, scoped, tag = 'scoped memory for tile.27']
  %s0 = inlined_call_operand.vmem [shape: f32[32], index: 0, kind: input, shape index: {}]
  %s1 = inlined_call_operand.vmem [shape: f32[4,32], index: 1, kind: output, shape index: {}]
  // Predicated region
  $region2: #{tile.27} parent=0 // pred_check
    _
  $region3: #{tile.27} parent=0 // pred_check_branch
    %3 = sbr.rel (0) target = $region5
  $region4: #{tile.27} parent=0 // pred_region
    _
  $region5: #{tile.27} parent=0 // pred_fallthru
    _
  %v4 = vld [vmem:[%s0] ss:$0 sm:$0xff]
  %5 = vst [vmem:[%s1] sm:$0xf] %v4

// kernel: tile.28
$region0: #{tile.28}
  %s0 = inlined_call_operand.vmem [shape: f32[4,32], index: 0, kind: input, shape index: {}]
  %s1 = inlined_call_operand.vmem [shape: f32[1,128], index: 1, kind: output, shape index: {}]
  $region1: #{tile.28} parent=0
    #allocation0 [shape = 'u8[4096]{0}', space=vmem, size = 0x1000, scoped, tag = 'scoped mem for output reshape']
    #allocation1 [shape = 'u8[4096]{0}', space=vmem, size = 0x1000, scoped, tag = 'scoped mem for input reshape']
    %s3 = sshll.u32 1, 4
    %s4 = ssub.s32 %s3, 1
    %v5 = vld [vmem:[%s0] sm:%s4]
    %6 = vst [vmem:[#allocation1] sm:%s4] %v5
    %v7 = vld [vmem:[#allocation1] sm:$0x1]
    %vm8 = vcmask 261120
    %9 = vst.msk [vmem:[#allocation0] sm:$0x1] %vm8, %v7
    %s10 = scalar_lea.vmem [#allocation1], 3
    %v11 = vld [vmem:[%s10] sm:$0x1]
    %12 = vrot.lane.b32.xlu0 %v11, 96
    %v13 = vpop.permute.xlu0 %12
    %vm14 = vcmask 1048320
    %15 = vst.msk [vmem:[#allocation0] sm:$0x1] %vm14, %v13
    %s16 = scalar_lea.vmem [#allocation1], 2
    %v17 = vld [vmem:[%s16] sm:$0x1]
    %18 = vrot.lane.b32.xlu0 %v17, 64
    %v19 = vpop.permute.xlu0 %18
    %vm20 = vcmask 785920
    %21 = vst.msk [vmem:[#allocation0] sm:$0x1] %vm20, %v19
    %s22 = scalar_lea.vmem [#allocation1], 1
    %v23 = vld [vmem:[%s22] sm:$0x1]
    %24 = vrot.lane.b32.xlu0 %v23, 32
    %v25 = vpop.permute.xlu0 %24
    %vm26 = vcmask 523520
    %27 = vst.msk [vmem:[#allocation0] sm:$0x1] %vm26, %v25
    %s29 = sshll.u32 1, 1
    %s30 = ssub.s32 %s29, 1
    %v32 = vld [vmem:[#allocation0] sm:%s30]
    %s33 = sshll.u32 1, 1
    %s34 = ssub.s32 %s33, 1
    %35 = vst [vmem:[%s1] sm:%s34] %v32

// kernel: vae_forward.11
$region0: #{vae_forward.11}
  #allocation0 [shape = 'u32[]', space=smem, size = 0x4, offset = 0x4, fixed_abs, tag = 'smem constant byte address 0x4 - core index']
  #allocation1 [shape = 'u32[144,128]{1,0:T(1,128)}', space=vmem, size = 0x12000, scoped, tag = 'internal scratch']
  %s0 = inlined_call_operand.vmem [shape: bf16[32,576], index: 0, kind: input, shape index: {}]
  %s1 = inlined_call_operand.vmem [shape: bf16[576,128], index: 1, kind: input, shape index: {}]
  %s2 = inlined_call_operand.vmem [shape: f32[1,128], index: 2, kind: input, shape index: {}]
  %s3 = inlined_call_operand.vmem [shape: f32[32,128], index: 3, kind: output, shape index: {}]
  %s4 = sld [smem:[#allocation0]]
  $region22: #{vae_forward.11} parent=0
    _
  %s6 = ssub.s32 1, %s4
  %s7 = scalar_select 0, %s6, %s4
  // Predicated region
  $region2: #{vae_forward.11} parent=0 // pred_check
    _
  $region3: #{vae_forward.11} parent=0 // pred_check_branch
    %9 = sbr.rel (0) target = $region5
  $region4: #{vae_forward.11} parent=0 // pred_region
    _
  $region5: #{vae_forward.11} parent=0 // pred_fallthru
    _
  // Predicated region
  $region6: #{vae_forward.11} parent=0 // pred_check
    _
  $region7: #{vae_forward.11} parent=0 // pred_check_branch
    %11 = sbr.rel (0) target = $region9
  $region8: #{vae_forward.11} parent=0 // pred_region
    _
  $region9: #{vae_forward.11} parent=0 // pred_fallthru
    _
  // Predicated region
  $region10: #{vae_forward.11} parent=0 // pred_check
    _
  $region11: #{vae_forward.11} parent=0 // pred_check_branch
    %13 = sbr.rel (0) target = $region13
  $region12: #{vae_forward.11} parent=0 // pred_region
    _
  $region13: #{vae_forward.11} parent=0 // pred_fallthru
    _
  %v15 = vld [vmem:[%s0] sm:$0xff]
  %v16 = vld [vmem:[%s0 + $0x8] sm:$0xff]
  %v17 = vld [vmem:[%s0 + $0x10] sm:$0xf]
  %v18 = vld [vmem:[%s0 + $0x14] sm:$0xff]
  %v19 = vld [vmem:[%s0 + $0x1c] sm:$0xff]
  %v20 = vld [vmem:[%s0 + $0x24] sm:$0xf]
  %v21 = vld [vmem:[%s0 + $0x28] sm:$0xff]
  %v22 = vld [vmem:[%s0 + $0x30] sm:$0xff]
  %v23 = vld [vmem:[%s0 + $0x38] sm:$0xf]
  %v24 = vld [vmem:[%s0 + $0x3c] sm:$0xff]
  %v25 = vld [vmem:[%s0 + $0x44] sm:$0xff]
  %v26 = vld [vmem:[%s0 + $0x4c] sm:$0xf]
  %v27 = vld [vmem:[%s1] sm:$0xf]
  %v28 = vld [vmem:[%s1 + $0x4] sm:$0xf]
  %v29 = vld [vmem:[%s1 + $0x8] sm:$0xf]
  %v30 = vld [vmem:[%s1 + $0xc] sm:$0xf]
  %v31 = vld [vmem:[%s1 + $0x10] sm:$0xf]
  %v32 = vld [vmem:[%s1 + $0x14] sm:$0xf]
  %v33 = vld [vmem:[%s1 + $0x18] sm:$0xf]
  %v34 = vld [vmem:[%s1 + $0x1c] sm:$0xf]
  %v35 = vld [vmem:[%s1 + $0x20] sm:$0xf]
  %v36 = vld [vmem:[%s1 + $0x24] sm:$0xf]
  %v37 = vld [vmem:[%s1 + $0x28] sm:$0xf]
  %v38 = vld [vmem:[%s1 + $0x2c] sm:$0xf]
  %v39 = vld [vmem:[%s1 + $0x30] sm:$0xf]
  %v40 = vld [vmem:[%s1 + $0x34] sm:$0xf]
  %v41 = vld [vmem:[%s1 + $0x38] sm:$0xf]
  %v42 = vld [vmem:[%s1 + $0x3c] sm:$0xf]
  %v43 = vld [vmem:[%s1 + $0x40] sm:$0xf]
  %v44 = vld [vmem:[%s1 + $0x44] sm:$0xf]
  %v45 = vld [vmem:[%s1 + $0x48] sm:$0xf]
  %v46 = vld [vmem:[%s1 + $0x4c] sm:$0xf]
  %v47 = vld [vmem:[%s1 + $0x50] sm:$0xf]
  %v48 = vld [vmem:[%s1 + $0x54] sm:$0xf]
  %v49 = vld [vmem:[%s1 + $0x58] sm:$0xf]
  %v50 = vld [vmem:[%s1 + $0x5c] sm:$0xf]
  %v51 = vld [vmem:[%s1 + $0x60] sm:$0xf]
  %v52 = vld [vmem:[%s1 + $0x64] sm:$0xf]
  %v53 = vld [vmem:[%s1 + $0x68] sm:$0xf]
  %v54 = vld [vmem:[%s1 + $0x6c] sm:$0xf]
  %v55 = vld [vmem:[%s1 + $0x70] sm:$0xf]
  %v56 = vld [vmem:[%s1 + $0x74] sm:$0xf]
  %v57 = vld [vmem:[%s1 + $0x78] sm:$0xf]
  %v58 = vld [vmem:[%s1 + $0x7c] sm:$0xf]
  %v59 = vld [vmem:[%s1 + $0x80] sm:$0xf]
  %v60 = vld [vmem:[%s1 + $0x84] sm:$0xf]
  %v61 = vld [vmem:[%s1 + $0x88] sm:$0xf]
  %v62 = vld [vmem:[%s1 + $0x8c] sm:$0xf]
  %v63 = vld [vmem:[%s1 + $0x90] sm:$0xf]
  %v64 = vld [vmem:[%s1 + $0x94] sm:$0xf]
  %v65 = vld [vmem:[%s1 + $0x98] sm:$0xf]
  %v66 = vld [vmem:[%s1 + $0x9c] sm:$0xf]
  %v67 = vld [vmem:[%s1 + $0xa0] sm:$0xf]
  %v68 = vld [vmem:[%s1 + $0xa4] sm:$0xf]
  %v69 = vld [vmem:[%s1 + $0xa8] sm:$0xf]
  %v70 = vld [vmem:[%s1 + $0xac] sm:$0xf]
  %v71 = vld [vmem:[%s1 + $0xb0] sm:$0xf]
  %v72 = vld [vmem:[%s1 + $0xb4] sm:$0xf]
  %v73 = vld [vmem:[%s1 + $0xb8] sm:$0xf]
  %v74 = vld [vmem:[%s1 + $0xbc] sm:$0xf]
  %v75 = vld [vmem:[%s1 + $0xc0] sm:$0xf]
  %v76 = vld [vmem:[%s1 + $0xc4] sm:$0xf]
  %v77 = vld [vmem:[%s1 + $0xc8] sm:$0xf]
  %v78 = vld [vmem:[%s1 + $0xcc] sm:$0xf]
  %v79 = vld [vmem:[%s1 + $0xd0] sm:$0xf]
  %v80 = vld [vmem:[%s1 + $0xd4] sm:$0xf]
  %v81 = vld [vmem:[%s1 + $0xd8] sm:$0xf]
  %v82 = vld [vmem:[%s1 + $0xdc] sm:$0xf]
  %v83 = vld [vmem:[%s1 + $0xe0] sm:$0xf]
  %v84 = vld [vmem:[%s1 + $0xe4] sm:$0xf]
  %v85 = vld [vmem:[%s1 + $0xe8] sm:$0xf]
  %v86 = vld [vmem:[%s1 + $0xec] sm:$0xf]
  %v87 = vld [vmem:[%s1 + $0xf0] sm:$0xf]
  %v88 = vld [vmem:[%s1 + $0xf4] sm:$0xf]
  %v89 = vld [vmem:[%s1 + $0xf8] sm:$0xf]
  %v90 = vld [vmem:[%s1 + $0xfc] sm:$0xf]
  %v91 = vld [vmem:[%s1 + $0x100] sm:$0xf]
  %v92 = vld [vmem:[%s1 + $0x104] sm:$0xf]
  %v93 = vld [vmem:[%s1 + $0x108] sm:$0xf]
  %v94 = vld [vmem:[%s1 + $0x10c] sm:$0xf]
  %v95 = vld [vmem:[%s1 + $0x110] sm:$0xf]
  %v96 = vld [vmem:[%s1 + $0x114] sm:$0xf]
  %v97 = vld [vmem:[%s1 + $0x118] sm:$0xf]
  %v98 = vld [vmem:[%s1 + $0x11c] sm:$0xf]
  %v99 = vld [vmem:[%s2] sm:$0x1]
  %v101 = vlaneseq
  %v102 = vshrl.u32 %v101, 7
  %v103 = vsub.s32 0, %v102
  %v104 = vrot.slane %v99, %v103
  %v118 = vunpack.c.l.b16 %v15
  %v119 = vunpack.c.h.b16 %v15
  %v120 = vunpack.c.l.b16 %v16
  %v121 = vunpack.c.h.b16 %v16
  %v122 = vunpack.c.l.b16 %v17
  %v123 = vunpack.c.l.b16 %v18
  %v124 = vunpack.c.h.b16 %v18
  %v125 = vunpack.c.l.b16 %v19
  %v126 = vunpack.c.h.b16 %v19
  %v127 = vunpack.c.l.b16 %v20
  %v128 = vunpack.c.l.b16 %v21
  %v129 = vunpack.c.h.b16 %v21
  %v130 = vunpack.c.l.b16 %v22
  %v131 = vunpack.c.h.b16 %v22
  %v132 = vunpack.c.l.b16 %v23
  %v133 = vunpack.c.l.b16 %v24
  %v134 = vunpack.c.h.b16 %v24
  %v135 = vunpack.c.l.b16 %v25
  %v136 = vunpack.c.h.b16 %v25
  %v137 = vunpack.c.l.b16 %v26
  %v138 = vpack.c.b16 %v123, %v118
  %v139 = vpack.c.b16 %v124, %v119
  %v140 = vpack.c.b16 %v125, %v120
  %v141 = vpack.c.b16 %v126, %v121
  %v142 = vpack.c.b16 %v127, %v122
  %v143 = vpack.c.b16 %v133, %v128
  %v144 = vpack.c.b16 %v134, %v129
  %v145 = vpack.c.b16 %v135, %v130
  %v146 = vpack.c.b16 %v136, %v131
  %v147 = vpack.c.b16 %v137, %v132
  %v228 = vunpack.c.l.b16 %v27
  %v229 = vunpack.c.l.b16 %v28
  %v230 = vunpack.c.l.b16 %v29
  %v231 = vunpack.c.l.b16 %v30
  %v232 = vunpack.c.l.b16 %v31
  %v233 = vunpack.c.l.b16 %v32
  %v234 = vunpack.c.l.b16 %v33
  %v235 = vunpack.c.l.b16 %v34
  %v236 = vunpack.c.l.b16 %v35
  %v237 = vunpack.c.l.b16 %v36
  %v238 = vunpack.c.l.b16 %v37
  %v239 = vunpack.c.l.b16 %v38
  %v240 = vunpack.c.l.b16 %v39
  %v241 = vunpack.c.l.b16 %v40
  %v242 = vunpack.c.l.b16 %v41
  %v243 = vunpack.c.l.b16 %v42
  %v244 = vunpack.c.l.b16 %v43
  %v245 = vunpack.c.l.b16 %v44
  %v246 = vunpack.c.l.b16 %v45
  %v247 = vunpack.c.l.b16 %v46
  %v248 = vunpack.c.l.b16 %v47
  %v249 = vunpack.c.l.b16 %v48
  %v250 = vunpack.c.l.b16 %v49
  %v251 = vunpack.c.l.b16 %v50
  %v252 = vunpack.c.l.b16 %v51
  %v253 = vunpack.c.l.b16 %v52
  %v254 = vunpack.c.l.b16 %v53
  %v255 = vunpack.c.l.b16 %v54
  %v256 = vunpack.c.l.b16 %v55
  %v257 = vunpack.c.l.b16 %v56
  %v258 = vunpack.c.l.b16 %v57
  %v259 = vunpack.c.l.b16 %v58
  %v260 = vunpack.c.l.b16 %v59
  %v261 = vunpack.c.l.b16 %v60
  %v262 = vunpack.c.l.b16 %v61
  %v263 = vunpack.c.l.b16 %v62
  %v264 = vunpack.c.l.b16 %v63
  %v265 = vunpack.c.l.b16 %v64
  %v266 = vunpack.c.l.b16 %v65
  %v267 = vunpack.c.l.b16 %v66
  %v268 = vunpack.c.l.b16 %v67
  %v269 = vunpack.c.l.b16 %v68
  %v270 = vunpack.c.l.b16 %v69
  %v271 = vunpack.c.l.b16 %v70
  %v272 = vunpack.c.l.b16 %v71
  %v273 = vunpack.c.l.b16 %v72
  %v274 = vunpack.c.l.b16 %v73
  %v275 = vunpack.c.l.b16 %v74
  %v276 = vunpack.c.l.b16 %v75
  %v277 = vunpack.c.l.b16 %v76
  %v278 = vunpack.c.l.b16 %v77
  %v279 = vunpack.c.l.b16 %v78
  %v280 = vunpack.c.l.b16 %v79
  %v281 = vunpack.c.l.b16 %v80
  %v282 = vunpack.c.l.b16 %v81
  %v283 = vunpack.c.l.b16 %v82
  %v284 = vunpack.c.l.b16 %v83
  %v285 = vunpack.c.l.b16 %v84
  %v286 = vunpack.c.l.b16 %v85
  %v287 = vunpack.c.l.b16 %v86
  %v288 = vunpack.c.l.b16 %v87
  %v289 = vunpack.c.l.b16 %v88
  %v290 = vunpack.c.l.b16 %v89
  %v291 = vunpack.c.l.b16 %v90
  %v292 = vunpack.c.l.b16 %v91
  %v293 = vunpack.c.l.b16 %v92
  %v294 = vunpack.c.l.b16 %v93
  %v295 = vunpack.c.l.b16 %v94
  %v296 = vunpack.c.l.b16 %v95
  %v297 = vunpack.c.l.b16 %v96
  %v298 = vunpack.c.l.b16 %v97
  %v299 = vunpack.c.l.b16 %v98
  %v300 = vpack.c.b16 %v229, %v228
  %v301 = vpack.c.b16 %v231, %v230
  %v302 = vpack.c.b16 %v233, %v232
  %v303 = vpack.c.b16 %v235, %v234
  %v304 = vpack.c.b16 %v237, %v236
  %v305 = vpack.c.b16 %v239, %v238
  %v306 = vpack.c.b16 %v241, %v240
  %v307 = vpack.c.b16 %v243, %v242
  %v308 = vpack.c.b16 %v245, %v244
  %v309 = vpack.c.b16 %v247, %v246
  %v310 = vpack.c.b16 %v249, %v248
  %v311 = vpack.c.b16 %v251, %v250
  %v312 = vpack.c.b16 %v253, %v252
  %v313 = vpack.c.b16 %v255, %v254
  %v314 = vpack.c.b16 %v257, %v256
  %v315 = vpack.c.b16 %v259, %v258
  %v316 = vpack.c.b16 %v261, %v260
  %v317 = vpack.c.b16 %v263, %v262
  %v318 = vpack.c.b16 %v265, %v264
  %v319 = vpack.c.b16 %v267, %v266
  %v320 = vpack.c.b16 %v269, %v268
  %v321 = vpack.c.b16 %v271, %v270
  %v322 = vpack.c.b16 %v273, %v272
  %v323 = vpack.c.b16 %v275, %v274
  %v324 = vpack.c.b16 %v277, %v276
  %v325 = vpack.c.b16 %v279, %v278
  %v326 = vpack.c.b16 %v281, %v280
  %v327 = vpack.c.b16 %v283, %v282
  %v328 = vpack.c.b16 %v285, %v284
  %v329 = vpack.c.b16 %v287, %v286
  %v330 = vpack.c.b16 %v289, %v288
  %v331 = vpack.c.b16 %v291, %v290
  %v332 = vpack.c.b16 %v293, %v292
  %v333 = vpack.c.b16 %v295, %v294
  %v334 = vpack.c.b16 %v297, %v296
  %v335 = vpack.c.b16 %v299, %v298
  %vm372 = vcmask 523264
  %v374 = vsel %vm372, %v142, 0
  %v377 = vsel %vm372, %v147, 0
  %379 = vmatprep.subr.bf16.mxu0 0
  %380 = vmatpush1.bf16.msra.mxu0 %v307
  %381 = vmatprep.subr.bf16.mxu0 0
  %382 = vmatpush1.bf16.msra.mxu0 %v306
  %383 = vmatprep.subr.bf16.mxu0 0
  %384 = vmatpush1.bf16.msra.mxu0 %v305
  %385 = vmatprep.subr.bf16.mxu0 0
  %386 = vmatpush1.bf16.msra.mxu0 %v304
  %387 = vmatprep.subr.bf16.mxu0 0
  %388 = vmatpush1.bf16.msra.mxu0 %v303
  %389 = vmatprep.subr.bf16.mxu0 0
  %390 = vmatpush1.bf16.msra.mxu0 %v302
  %391 = vmatprep.subr.bf16.mxu0 0
  %392 = vmatpush1.bf16.msra.mxu0 %v301
  %393 = vmatprep.subr.bf16.mxu0 0
  %394 = vmatpush1.bf16.msra.mxu0 %v300
  %395 = vmatprep.subr.bf16.mxu0 0
  %396 = vmatpush2.bf16.msra.mxu0 %v315
  %397 = vmatprep.subr.bf16.mxu0 0
  %398 = vmatpush2.bf16.msra.mxu0 %v314
  %399 = vmatprep.subr.bf16.mxu0 0
  %400 = vmatpush2.bf16.msra.mxu0 %v313
  %401 = vmatprep.subr.bf16.mxu0 0
  %402 = vmatpush2.bf16.msra.mxu0 %v312
  %403 = vmatprep.subr.bf16.mxu0 0
  %404 = vmatpush2.bf16.msra.mxu0 %v311
  %405 = vmatprep.subr.bf16.mxu0 0
  %406 = vmatpush2.bf16.msra.mxu0 %v310
  %407 = vmatprep.subr.bf16.mxu0 0
  %408 = vmatpush2.bf16.msra.mxu0 %v309
  %409 = vmatprep.subr.bf16.mxu0 0
  %410 = vmatpush2.bf16.msra.mxu0 %v308
  %411 = vmatprep.mubr.bf16.mxu0 %v139
  %412 = vmatmul.mubr.bf16.gmra.mxu0 %v138
  %v413 = vpop.f32.mrf.mxu0
  %v414 = vadd.f32 %v104, %v413
  %v415 = vpop.f32.mrf.mxu0
  %v416 = vpop.f32.mrf.mxu0
  %v417 = vadd.f32 %v104, %v416
  %v418 = vpop.f32.mrf.mxu0
  %419 = vmatprep.mubr.bf16.mxu0 %v144
  %420 = vmatmul.mubr.bf16.gmra.mxu0 %v143
  %v421 = vpop.f32.mrf.mxu0
  %v422 = vadd.f32 %v104, %v421
  %v423 = vpop.f32.mrf.mxu0
  %v424 = vpop.f32.mrf.mxu0
  %v425 = vadd.f32 %v104, %v424
  %v426 = vpop.f32.mrf.mxu0
  %427 = vdwg.mxu0
  %428 = vmatprep.subr.bf16.mxu0 0
  %429 = vmatpush1.bf16.msra.mxu0 %v323
  %430 = vmatprep.subr.bf16.mxu0 0
  %431 = vmatpush1.bf16.msra.mxu0 %v322
  %432 = vmatprep.subr.bf16.mxu0 0
  %433 = vmatpush1.bf16.msra.mxu0 %v321
  %434 = vmatprep.subr.bf16.mxu0 0
  %435 = vmatpush1.bf16.msra.mxu0 %v320
  %436 = vmatprep.subr.bf16.mxu0 0
  %437 = vmatpush1.bf16.msra.mxu0 %v319
  %438 = vmatprep.subr.bf16.mxu0 0
  %439 = vmatpush1.bf16.msra.mxu0 %v318
  %440 = vmatprep.subr.bf16.mxu0 0
  %441 = vmatpush1.bf16.msra.mxu0 %v317
  %442 = vmatprep.subr.bf16.mxu0 0
  %443 = vmatpush1.bf16.msra.mxu0 %v316
  %444 = vmatprep.subr.bf16.mxu0 0
  %445 = vmatpush2.bf16.msra.mxu0 %v331
  %446 = vmatprep.subr.bf16.mxu0 0
  %447 = vmatpush2.bf16.msra.mxu0 %v330
  %448 = vmatprep.subr.bf16.mxu0 0
  %449 = vmatpush2.bf16.msra.mxu0 %v329
  %450 = vmatprep.subr.bf16.mxu0 0
  %451 = vmatpush2.bf16.msra.mxu0 %v328
  %452 = vmatprep.subr.bf16.mxu0 0
  %453 = vmatpush2.bf16.msra.mxu0 %v327
  %454 = vmatprep.subr.bf16.mxu0 0
  %455 = vmatpush2.bf16.msra.mxu0 %v326
  %456 = vmatprep.subr.bf16.mxu0 0
  %457 = vmatpush2.bf16.msra.mxu0 %v325
  %458 = vmatprep.subr.bf16.mxu0 0
  %459 = vmatpush2.bf16.msra.mxu0 %v324
  %460 = vmatprep.mubr.bf16.mxu0 %v141
  %461 = vmatmul.mubr.bf16.gmra.mxu0 %v140
  %v462 = vpop.f32.mrf.mxu0
  %v463 = vadd.f32 %v414, %v462
  %v464 = vpop.f32.mrf.mxu0
  %v465 = vpop.f32.mrf.mxu0
  %v466 = vadd.f32 %v417, %v465
  %v467 = vpop.f32.mrf.mxu0
  %468 = vmatprep.mubr.bf16.mxu0 %v146
  %469 = vmatmul.mubr.bf16.gmra.mxu0 %v145
  %v470 = vpop.f32.mrf.mxu0
  %v471 = vadd.f32 %v422, %v470
  %v472 = vpop.f32.mrf.mxu0
  %v473 = vpop.f32.mrf.mxu0
  %v474 = vadd.f32 %v425, %v473
  %v475 = vpop.f32.mrf.mxu0
  %476 = vdwg.mxu0
  %477 = vmatprep.subr.bf16.mxu0 0
  %478 = vmatpush1.bf16.msra.mxu0 0
  %479 = vmatprep.subr.bf16.mxu0 0
  %480 = vmatpush1.bf16.msra.mxu0 0
  %481 = vmatprep.subr.bf16.mxu0 0
  %482 = vmatpush1.bf16.msra.mxu0 0
  %483 = vmatprep.subr.bf16.mxu0 0
  %484 = vmatpush1.bf16.msra.mxu0 0
  %485 = vmatprep.subr.bf16.mxu0 0
  %486 = vmatpush1.bf16.msra.mxu0 %v335
  %487 = vmatprep.subr.bf16.mxu0 0
  %488 = vmatpush1.bf16.msra.mxu0 %v334
  %489 = vmatprep.subr.bf16.mxu0 0
  %490 = vmatpush1.bf16.msra.mxu0 %v333
  %491 = vmatprep.subr.bf16.mxu0 0
  %492 = vmatpush1.bf16.msra.mxu0 %v332
  %493 = vmatprep.subr.bf16.mxu0 0
  %494 = vmatpush2.bf16.msra.mxu0 0
  %495 = vmatprep.subr.bf16.mxu0 0
  %496 = vmatpush2.bf16.msra.mxu0 0
  %497 = vmatprep.subr.bf16.mxu0 0
  %498 = vmatpush2.bf16.msra.mxu0 0
  %499 = vmatprep.subr.bf16.mxu0 0
  %500 = vmatpush2.bf16.msra.mxu0 0
  %501 = vmatprep.subr.bf16.mxu0 0
  %502 = vmatpush2.bf16.msra.mxu0 0
  %503 = vmatprep.subr.bf16.mxu0 0
  %504 = vmatpush2.bf16.msra.mxu0 0
  %505 = vmatprep.subr.bf16.mxu0 0
  %506 = vmatpush2.bf16.msra.mxu0 0
  %507 = vmatprep.subr.bf16.mxu0 0
  %508 = vmatpush2.bf16.msra.mxu0 0
  %509 = vmatprep.mubr.bf16.mxu0 0
  %510 = vmatmul.mubr.bf16.gmra.mxu0 %v374
  %v511 = vpop.f32.mrf.mxu0
  %v512 = vadd.f32 %v463, %v511
  %v513 = vpop.f32.mrf.mxu0
  %v514 = vpop.f32.mrf.mxu0
  %v515 = vadd.f32 %v466, %v514
  %v516 = vpop.f32.mrf.mxu0
  %517 = vmatprep.mubr.bf16.mxu0 0
  %518 = vmatmul.mubr.bf16.gmra.mxu0 %v377
  %v519 = vpop.f32.mrf.mxu0
  %v520 = vadd.f32 %v471, %v519
  %v521 = vpop.f32.mrf.mxu0
  %v522 = vpop.f32.mrf.mxu0
  %v523 = vadd.f32 %v474, %v522
  %v524 = vpop.f32.mrf.mxu0
  %525 = vdwg.mxu0
  %v526 = vmax.f32 %v512, 0.0
  %v527 = vmax.f32 %v515, 0.0
  %v528 = vmax.f32 %v520, 0.0
  %v529 = vmax.f32 %v523, 0.0
  %530 = vst [vmem:[%s3] sm:$0xff] %v526
  %531 = vst [vmem:[%s3 + $0x8] sm:$0xff] %v527
  %532 = vst [vmem:[%s3 + $0x10] sm:$0xff] %v528
  %533 = vst [vmem:[%s3 + $0x18] sm:$0xff] %v529
  // Predicated region
  $region14: #{vae_forward.11} parent=0 // pred_check
    _
  $region15: #{vae_forward.11} parent=0 // pred_check_branch
    %535 = sbr.rel (0) target = $region17
  $region16: #{vae_forward.11} parent=0 // pred_region
    _
  $region17: #{vae_forward.11} parent=0 // pred_fallthru
    _
  // Predicated region
  $region18: #{vae_forward.11} parent=0 // pred_check
    _
  $region19: #{vae_forward.11} parent=0 // pred_check_branch
    %537 = sbr.rel (0) target = $region21
  $region20: #{vae_forward.11} parent=0 // pred_region
    _
  $region21: #{vae_forward.11} parent=0 // pred_fallthru
    _

// kernel: tile.32
$region0: #{tile.32}
  #allocation0 [shape = 's32[1]{0}', space=sflag, size = 0x4, scoped, tag = 'scoped memory for tile.32']
  %s0 = inlined_call_operand.vmem [shape: f32[16], index: 0, kind: input, shape index: {}]
  %s1 = inlined_call_operand.vmem [shape: f32[4,16], index: 1, kind: output, shape index: {}]
  // Predicated region
  $region2: #{tile.32} parent=0 // pred_check
    _
  $region3: #{tile.32} parent=0 // pred_check_branch
    %3 = sbr.rel (0) target = $region5
  $region4: #{tile.32} parent=0 // pred_region
    _
  $region5: #{tile.32} parent=0 // pred_fallthru
    _
  %v4 = vld [vmem:[%s0] ss:$0 sm:$0xff]
  %5 = vst [vmem:[%s1] sm:$0xf] %v4

// kernel: tile.33
$region0: #{tile.33}
  %s0 = inlined_call_operand.vmem [shape: f32[4,16], index: 0, kind: input, shape index: {}]
  %s1 = inlined_call_operand.vmem [shape: f32[1,64], index: 1, kind: output, shape index: {}]
  $region1: #{tile.33} parent=0
    #allocation0 [shape = 'u8[4096]{0}', space=vmem, size = 0x1000, scoped, tag = 'scoped mem for output reshape']
    #allocation1 [shape = 'u8[4096]{0}', space=vmem, size = 0x1000, scoped, tag = 'scoped mem for input reshape']
    %s3 = sshll.u32 1, 4
    %s4 = ssub.s32 %s3, 1
    %v5 = vld [vmem:[%s0] sm:%s4]
    %6 = vst [vmem:[#allocation1] sm:%s4] %v5
    %v7 = vld [vmem:[#allocation1] sm:$0x1]
    %vm8 = vcmask 130048
    %9 = vst.msk [vmem:[#allocation0] sm:$0x1] %vm8, %v7
    %s10 = scalar_lea.vmem [#allocation1], 3
    %v11 = vld [vmem:[%s10] sm:$0x1]
    %12 = vrot.lane.b32.xlu0 %v11, 48
    %v13 = vpop.permute.xlu0 %12
    %vm14 = vcmask 523648
    %15 = vst.msk [vmem:[#allocation0] sm:$0x1] %vm14, %v13
    %s16 = scalar_lea.vmem [#allocation1], 2
    %v17 = vld [vmem:[%s16] sm:$0x1]
    %18 = vrot.lane.b32.xlu0 %v17, 32
    %v19 = vpop.permute.xlu0 %18
    %vm20 = vcmask 392448
    %21 = vst.msk [vmem:[#allocation0] sm:$0x1] %vm20, %v19
    %s22 = scalar_lea.vmem [#allocation1], 1
    %v23 = vld [vmem:[%s22] sm:$0x1]
    %24 = vrot.lane.b32.xlu0 %v23, 16
    %v25 = vpop.permute.xlu0 %24
    %vm26 = vcmask 261248
    %27 = vst.msk [vmem:[#allocation0] sm:$0x1] %vm26, %v25
    %s29 = sshll.u32 1, 1
    %s30 = ssub.s32 %s29, 1
    %v32 = vld [vmem:[#allocation0] sm:%s30]
    %s33 = sshll.u32 1, 1
    %s34 = ssub.s32 %s33, 1
    %35 = vst [vmem:[%s1] sm:%s34] %v32

// kernel: vae_forward.12
$region0: #{vae_forward.12}
  #allocation0 [shape = 'u32[]', space=smem, size = 0x4, offset = 0x4, fixed_abs, tag = 'smem constant byte address 0x4 - core index']
  #allocation1 [shape = 'u32[144,128]{1,0:T(1,128)}', space=vmem, size = 0x12000, scoped, tag = 'internal scratch']
  %s0 = inlined_call_operand.vmem [shape: bf16[128,288], index: 0, kind: input, shape index: {}]
  %s1 = inlined_call_operand.vmem [shape: bf16[288,64], index: 1, kind: input, shape index: {}]
  %s2 = inlined_call_operand.vmem [shape: f32[1,64], index: 2, kind: input, shape index: {}]
  %s3 = inlined_call_operand.vmem [shape: f32[128,64], index: 3, kind: output, shape index: {}]
  %s4 = sld [smem:[#allocation0]]
  $region22: #{vae_forward.12} parent=0
    _
  %s6 = ssub.s32 1, %s4
  %s7 = scalar_select 0, %s6, %s4
  // Predicated region
  $region2: #{vae_forward.12} parent=0 // pred_check
    _
  $region3: #{vae_forward.12} parent=0 // pred_check_branch
    %9 = sbr.rel (0) target = $region5
  $region4: #{vae_forward.12} parent=0 // pred_region
    _
  $region5: #{vae_forward.12} parent=0 // pred_fallthru
    _
  // Predicated region
  $region6: #{vae_forward.12} parent=0 // pred_check
    _
  $region7: #{vae_forward.12} parent=0 // pred_check_branch
    %11 = sbr.rel (0) target = $region9
  $region8: #{vae_forward.12} parent=0 // pred_region
    _
  $region9: #{vae_forward.12} parent=0 // pred_fallthru
    _
  // Predicated region
  $region10: #{vae_forward.12} parent=0 // pred_check
    _
  $region11: #{vae_forward.12} parent=0 // pred_check_branch
    %13 = sbr.rel (0) target = $region13
  $region12: #{vae_forward.12} parent=0 // pred_region
    _
  $region13: #{vae_forward.12} parent=0 // pred_fallthru
    _
  %v15 = vld [vmem:[%s0] sm:$0xff]
  %v16 = vld [vmem:[%s0 + $0x8] sm:$0xf]
  %v17 = vld [vmem:[%s0 + $0xc] sm:$0xff]
  %v18 = vld [vmem:[%s0 + $0x14] sm:$0xf]
  %v19 = vld [vmem:[%s0 + $0x18] sm:$0xff]
  %v20 = vld [vmem:[%s0 + $0x20] sm:$0xf]
  %v21 = vld [vmem:[%s0 + $0x24] sm:$0xff]
  %v22 = vld [vmem:[%s0 + $0x2c] sm:$0xf]
  %v23 = vld [vmem:[%s0 + $0x30] sm:$0xff]
  %v24 = vld [vmem:[%s0 + $0x38] sm:$0xf]
  %v25 = vld [vmem:[%s0 + $0x3c] sm:$0xff]
  %v26 = vld [vmem:[%s0 + $0x44] sm:$0xf]
  %v27 = vld [vmem:[%s0 + $0x48] sm:$0xff]
  %v28 = vld [vmem:[%s0 + $0x50] sm:$0xf]
  %v29 = vld [vmem:[%s0 + $0x54] sm:$0xff]
  %v30 = vld [vmem:[%s0 + $0x5c] sm:$0xf]
  %v31 = vld [vmem:[%s0 + $0x60] sm:$0xff]
  %v32 = vld [vmem:[%s0 + $0x68] sm:$0xf]
  %v33 = vld [vmem:[%s0 + $0x6c] sm:$0xff]
  %v34 = vld [vmem:[%s0 + $0x74] sm:$0xf]
  %v35 = vld [vmem:[%s0 + $0x78] sm:$0xff]
  %v36 = vld [vmem:[%s0 + $0x80] sm:$0xf]
  %v37 = vld [vmem:[%s0 + $0x84] sm:$0xff]
  %v38 = vld [vmem:[%s0 + $0x8c] sm:$0xf]
  %v39 = vld [vmem:[%s0 + $0x90] sm:$0xff]
  %v40 = vld [vmem:[%s0 + $0x98] sm:$0xf]
  %v41 = vld [vmem:[%s0 + $0x9c] sm:$0xff]
  %v42 = vld [vmem:[%s0 + $0xa4] sm:$0xf]
  %v43 = vld [vmem:[%s0 + $0xa8] sm:$0xff]
  %v44 = vld [vmem:[%s0 + $0xb0] sm:$0xf]
  %v45 = vld [vmem:[%s0 + $0xb4] sm:$0xff]
  %v46 = vld [vmem:[%s0 + $0xbc] sm:$0xf]
  %v47 = vld [vmem:[%s1] sm:$0xf]
  %v48 = vld [vmem:[%s1 + $0x4] sm:$0xf]
  %v49 = vld [vmem:[%s1 + $0x8] sm:$0xf]
  %v50 = vld [vmem:[%s1 + $0xc] sm:$0xf]
  %v51 = vld [vmem:[%s1 + $0x10] sm:$0xf]
  %v52 = vld [vmem:[%s1 + $0x14] sm:$0xf]
  %v53 = vld [vmem:[%s1 + $0x18] sm:$0xf]
  %v54 = vld [vmem:[%s1 + $0x1c] sm:$0xf]
  %v55 = vld [vmem:[%s1 + $0x20] sm:$0xf]
  %v56 = vld [vmem:[%s1 + $0x24] sm:$0xf]
  %v57 = vld [vmem:[%s1 + $0x28] sm:$0xf]
  %v58 = vld [vmem:[%s1 + $0x2c] sm:$0xf]
  %v59 = vld [vmem:[%s1 + $0x30] sm:$0xf]
  %v60 = vld [vmem:[%s1 + $0x34] sm:$0xf]
  %v61 = vld [vmem:[%s1 + $0x38] sm:$0xf]
  %v62 = vld [vmem:[%s1 + $0x3c] sm:$0xf]
  %v63 = vld [vmem:[%s1 + $0x40] sm:$0xf]
  %v64 = vld [vmem:[%s1 + $0x44] sm:$0xf]
  %v65 = vld [vmem:[%s1 + $0x48] sm:$0xf]
  %v66 = vld [vmem:[%s1 + $0x4c] sm:$0xf]
  %v67 = vld [vmem:[%s1 + $0x50] sm:$0xf]
  %v68 = vld [vmem:[%s1 + $0x54] sm:$0xf]
  %v69 = vld [vmem:[%s1 + $0x58] sm:$0xf]
  %v70 = vld [vmem:[%s1 + $0x5c] sm:$0xf]
  %v71 = vld [vmem:[%s1 + $0x60] sm:$0xf]
  %v72 = vld [vmem:[%s1 + $0x64] sm:$0xf]
  %v73 = vld [vmem:[%s1 + $0x68] sm:$0xf]
  %v74 = vld [vmem:[%s1 + $0x6c] sm:$0xf]
  %v75 = vld [vmem:[%s1 + $0x70] sm:$0xf]
  %v76 = vld [vmem:[%s1 + $0x74] sm:$0xf]
  %v77 = vld [vmem:[%s1 + $0x78] sm:$0xf]
  %v78 = vld [vmem:[%s1 + $0x7c] sm:$0xf]
  %v79 = vld [vmem:[%s1 + $0x80] sm:$0xf]
  %v80 = vld [vmem:[%s1 + $0x84] sm:$0xf]
  %v81 = vld [vmem:[%s1 + $0x88] sm:$0xf]
  %v82 = vld [vmem:[%s1 + $0x8c] sm:$0xf]
  %v83 = vld [vmem:[%s2] sm:$0x1]
  %v85 = vlaneseq
  %v86 = vshrl.u32 %v85, 7
  %v87 = vsub.s32 0, %v86
  %v88 = vrot.slane %v83, %v87
  %v122 = vunpack.c.l.b16 %v15
  %v123 = vunpack.c.h.b16 %v15
  %v124 = vunpack.c.l.b16 %v16
  %v125 = vunpack.c.l.b16 %v17
  %v126 = vunpack.c.h.b16 %v17
  %v127 = vunpack.c.l.b16 %v18
  %v128 = vunpack.c.l.b16 %v19
  %v129 = vunpack.c.h.b16 %v19
  %v130 = vunpack.c.l.b16 %v20
  %v131 = vunpack.c.l.b16 %v21
  %v132 = vunpack.c.h.b16 %v21
  %v133 = vunpack.c.l.b16 %v22
  %v134 = vunpack.c.l.b16 %v23
  %v135 = vunpack.c.h.b16 %v23
  %v136 = vunpack.c.l.b16 %v24
  %v137 = vunpack.c.l.b16 %v25
  %v138 = vunpack.c.h.b16 %v25
  %v139 = vunpack.c.l.b16 %v26
  %v140 = vunpack.c.l.b16 %v27
  %v141 = vunpack.c.h.b16 %v27
  %v142 = vunpack.c.l.b16 %v28
  %v143 = vunpack.c.l.b16 %v29
  %v144 = vunpack.c.h.b16 %v29
  %v145 = vunpack.c.l.b16 %v30
  %v146 = vunpack.c.l.b16 %v31
  %v147 = vunpack.c.h.b16 %v31
  %v148 = vunpack.c.l.b16 %v32
  %v149 = vunpack.c.l.b16 %v33
  %v150 = vunpack.c.h.b16 %v33
  %v151 = vunpack.c.l.b16 %v34
  %v152 = vunpack.c.l.b16 %v35
  %v153 = vunpack.c.h.b16 %v35
  %v154 = vunpack.c.l.b16 %v36
  %v155 = vunpack.c.l.b16 %v37
  %v156 = vunpack.c.h.b16 %v37
  %v157 = vunpack.c.l.b16 %v38
  %v158 = vunpack.c.l.b16 %v39
  %v159 = vunpack.c.h.b16 %v39
  %v160 = vunpack.c.l.b16 %v40
  %v161 = vunpack.c.l.b16 %v41
  %v162 = vunpack.c.h.b16 %v41
  %v163 = vunpack.c.l.b16 %v42
  %v164 = vunpack.c.l.b16 %v43
  %v165 = vunpack.c.h.b16 %v43
  %v166 = vunpack.c.l.b16 %v44
  %v167 = vunpack.c.l.b16 %v45
  %v168 = vunpack.c.h.b16 %v45
  %v169 = vunpack.c.l.b16 %v46
  %v170 = vpack.c.b16 %v125, %v122
  %v171 = vpack.c.b16 %v126, %v123
  %v172 = vpack.c.b16 %v127, %v124
  %v173 = vpack.c.b16 %v131, %v128
  %v174 = vpack.c.b16 %v132, %v129
  %v175 = vpack.c.b16 %v133, %v130
  %v176 = vpack.c.b16 %v137, %v134
  %v177 = vpack.c.b16 %v138, %v135
  %v178 = vpack.c.b16 %v139, %v136
  %v179 = vpack.c.b16 %v143, %v140
  %v180 = vpack.c.b16 %v144, %v141
  %v181 = vpack.c.b16 %v145, %v142
  %v182 = vpack.c.b16 %v149, %v146
  %v183 = vpack.c.b16 %v150, %v147
  %v184 = vpack.c.b16 %v151, %v148
  %v185 = vpack.c.b16 %v155, %v152
  %v186 = vpack.c.b16 %v156, %v153
  %v187 = vpack.c.b16 %v157, %v154
  %v188 = vpack.c.b16 %v161, %v158
  %v189 = vpack.c.b16 %v162, %v159
  %v190 = vpack.c.b16 %v163, %v160
  %v191 = vpack.c.b16 %v167, %v164
  %v192 = vpack.c.b16 %v168, %v165
  %v193 = vpack.c.b16 %v169, %v166
  %v246 = vunpack.c.l.b16 %v47
  %v247 = vunpack.c.l.b16 %v48
  %v248 = vunpack.c.l.b16 %v49
  %v249 = vunpack.c.l.b16 %v50
  %v250 = vunpack.c.l.b16 %v51
  %v251 = vunpack.c.l.b16 %v52
  %v252 = vunpack.c.l.b16 %v53
  %v253 = vunpack.c.l.b16 %v54
  %v254 = vunpack.c.l.b16 %v55
  %v255 = vunpack.c.l.b16 %v56
  %v256 = vunpack.c.l.b16 %v57
  %v257 = vunpack.c.l.b16 %v58
  %v258 = vunpack.c.l.b16 %v59
  %v259 = vunpack.c.l.b16 %v60
  %v260 = vunpack.c.l.b16 %v61
  %v261 = vunpack.c.l.b16 %v62
  %v262 = vunpack.c.l.b16 %v63
  %v263 = vunpack.c.l.b16 %v64
  %v264 = vunpack.c.l.b16 %v65
  %v265 = vunpack.c.l.b16 %v66
  %v266 = vunpack.c.l.b16 %v67
  %v267 = vunpack.c.l.b16 %v68
  %v268 = vunpack.c.l.b16 %v69
  %v269 = vunpack.c.l.b16 %v70
  %v270 = vunpack.c.l.b16 %v71
  %v271 = vunpack.c.l.b16 %v72
  %v272 = vunpack.c.l.b16 %v73
  %v273 = vunpack.c.l.b16 %v74
  %v274 = vunpack.c.l.b16 %v75
  %v275 = vunpack.c.l.b16 %v76
  %v276 = vunpack.c.l.b16 %v77
  %v277 = vunpack.c.l.b16 %v78
  %v278 = vunpack.c.l.b16 %v79
  %v279 = vunpack.c.l.b16 %v80
  %v280 = vunpack.c.l.b16 %v81
  %v281 = vunpack.c.l.b16 %v82
  %v282 = vpack.c.b16 %v247, %v246
  %v283 = vpack.c.b16 %v249, %v248
  %v284 = vpack.c.b16 %v251, %v250
  %v285 = vpack.c.b16 %v253, %v252
  %v286 = vpack.c.b16 %v255, %v254
  %v287 = vpack.c.b16 %v257, %v256
  %v288 = vpack.c.b16 %v259, %v258
  %v289 = vpack.c.b16 %v261, %v260
  %v290 = vpack.c.b16 %v263, %v262
  %v291 = vpack.c.b16 %v265, %v264
  %v292 = vpack.c.b16 %v267, %v266
  %v293 = vpack.c.b16 %v269, %v268
  %v294 = vpack.c.b16 %v271, %v270
  %v295 = vpack.c.b16 %v273, %v272
  %v296 = vpack.c.b16 %v275, %v274
  %v297 = vpack.c.b16 %v277, %v276
  %v298 = vpack.c.b16 %v279, %v278
  %v299 = vpack.c.b16 %v281, %v280
  %vm318 = vcmask 261120
  %v320 = vsel %vm318, %v172, 0
  %v323 = vsel %vm318, %v175, 0
  %v326 = vsel %vm318, %v178, 0
  %v329 = vsel %vm318, %v181, 0
  %v332 = vsel %vm318, %v184, 0
  %v335 = vsel %vm318, %v187, 0
  %v338 = vsel %vm318, %v190, 0
  %v341 = vsel %vm318, %v193, 0
  %343 = vmatprep.subr.bf16.mxu0 0
  %344 = vmatpush1.bf16.msra.mxu0 %v289
  %345 = vmatprep.subr.bf16.mxu0 0
  %346 = vmatpush1.bf16.msra.mxu0 %v288
  %347 = vmatprep.subr.bf16.mxu0 0
  %348 = vmatpush1.bf16.msra.mxu0 %v287
  %349 = vmatprep.subr.bf16.mxu0 0
  %350 = vmatpush1.bf16.msra.mxu0 %v286
  %351 = vmatprep.subr.bf16.mxu0 0
  %352 = vmatpush1.bf16.msra.mxu0 %v285
  %353 = vmatprep.subr.bf16.mxu0 0
  %354 = vmatpush1.bf16.msra.mxu0 %v284
  %355 = vmatprep.subr.bf16.mxu0 0
  %356 = vmatpush1.bf16.msra.mxu0 %v283
  %357 = vmatprep.subr.bf16.mxu0 0
  %358 = vmatpush1.bf16.msra.mxu0 %v282
  %359 = vmatprep.subr.bf16.mxu0 0
  %360 = vmatpush2.bf16.msra.mxu0 %v297
  %361 = vmatprep.subr.bf16.mxu0 0
  %362 = vmatpush2.bf16.msra.mxu0 %v296
  %363 = vmatprep.subr.bf16.mxu0 0
  %364 = vmatpush2.bf16.msra.mxu0 %v295
  %365 = vmatprep.subr.bf16.mxu0 0
  %366 = vmatpush2.bf16.msra.mxu0 %v294
  %367 = vmatprep.subr.bf16.mxu0 0
  %368 = vmatpush2.bf16.msra.mxu0 %v293
  %369 = vmatprep.subr.bf16.mxu0 0
  %370 = vmatpush2.bf16.msra.mxu0 %v292
  %371 = vmatprep.subr.bf16.mxu0 0
  %372 = vmatpush2.bf16.msra.mxu0 %v291
  %373 = vmatprep.subr.bf16.mxu0 0
  %374 = vmatpush2.bf16.msra.mxu0 %v290
  %375 = vmatprep.mubr.bf16.mxu0 %v171
  %376 = vmatmul.mubr.bf16.gmra.mxu0 %v170
  %v377 = vpop.f32.mrf.mxu0
  %v378 = vadd.f32 %v88, %v377
  %v379 = vpop.f32.mrf.mxu0
  %v380 = vpop.f32.mrf.mxu0
  %v381 = vadd.f32 %v88, %v380
  %v382 = vpop.f32.mrf.mxu0
  %383 = vmatprep.mubr.bf16.mxu0 %v174
  %384 = vmatmul.mubr.bf16.gmra.mxu0 %v173
  %v385 = vpop.f32.mrf.mxu0
  %v386 = vadd.f32 %v88, %v385
  %v387 = vpop.f32.mrf.mxu0
  %v388 = vpop.f32.mrf.mxu0
  %v389 = vadd.f32 %v88, %v388
  %v390 = vpop.f32.mrf.mxu0
  %391 = vmatprep.mubr.bf16.mxu0 %v177
  %392 = vmatmul.mubr.bf16.gmra.mxu0 %v176
  %v393 = vpop.f32.mrf.mxu0
  %v394 = vadd.f32 %v88, %v393
  %v395 = vpop.f32.mrf.mxu0
  %v396 = vpop.f32.mrf.mxu0
  %v397 = vadd.f32 %v88, %v396
  %v398 = vpop.f32.mrf.mxu0
  %399 = vmatprep.mubr.bf16.mxu0 %v180
  %400 = vmatmul.mubr.bf16.gmra.mxu0 %v179
  %v401 = vpop.f32.mrf.mxu0
  %v402 = vadd.f32 %v88, %v401
  %v403 = vpop.f32.mrf.mxu0
  %v404 = vpop.f32.mrf.mxu0
  %v405 = vadd.f32 %v88, %v404
  %v406 = vpop.f32.mrf.mxu0
  %407 = vmatprep.mubr.bf16.mxu0 %v183
  %408 = vmatmul.mubr.bf16.gmra.mxu0 %v182
  %v409 = vpop.f32.mrf.mxu0
  %v410 = vadd.f32 %v88, %v409
  %v411 = vpop.f32.mrf.mxu0
  %v412 = vpop.f32.mrf.mxu0
  %v413 = vadd.f32 %v88, %v412
  %v414 = vpop.f32.mrf.mxu0
  %415 = vmatprep.mubr.bf16.mxu0 %v186
  %416 = vmatmul.mubr.bf16.gmra.mxu0 %v185
  %v417 = vpop.f32.mrf.mxu0
  %v418 = vadd.f32 %v88, %v417
  %v419 = vpop.f32.mrf.mxu0
  %v420 = vpop.f32.mrf.mxu0
  %v421 = vadd.f32 %v88, %v420
  %v422 = vpop.f32.mrf.mxu0
  %423 = vmatprep.mubr.bf16.mxu0 %v189
  %424 = vmatmul.mubr.bf16.gmra.mxu0 %v188
  %v425 = vpop.f32.mrf.mxu0
  %v426 = vadd.f32 %v88, %v425
  %v427 = vpop.f32.mrf.mxu0
  %v428 = vpop.f32.mrf.mxu0
  %v429 = vadd.f32 %v88, %v428
  %v430 = vpop.f32.mrf.mxu0
  %431 = vmatprep.mubr.bf16.mxu0 %v192
  %432 = vmatmul.mubr.bf16.gmra.mxu0 %v191
  %v433 = vpop.f32.mrf.mxu0
  %v434 = vadd.f32 %v88, %v433
  %v435 = vpop.f32.mrf.mxu0
  %v436 = vpop.f32.mrf.mxu0
  %v437 = vadd.f32 %v88, %v436
  %v438 = vpop.f32.mrf.mxu0
  %439 = vdwg.mxu0
  %440 = vmatprep.subr.bf16.mxu0 0
  %441 = vmatpush1.bf16.msra.mxu0 0
  %442 = vmatprep.subr.bf16.mxu0 0
  %443 = vmatpush1.bf16.msra.mxu0 0
  %444 = vmatprep.subr.bf16.mxu0 0
  %445 = vmatpush1.bf16.msra.mxu0 0
  %446 = vmatprep.subr.bf16.mxu0 0
  %447 = vmatpush1.bf16.msra.mxu0 0
  %448 = vmatprep.subr.bf16.mxu0 0
  %449 = vmatpush1.bf16.msra.mxu0 0
  %450 = vmatprep.subr.bf16.mxu0 0
  %451 = vmatpush1.bf16.msra.mxu0 0
  %452 = vmatprep.subr.bf16.mxu0 0
  %453 = vmatpush1.bf16.msra.mxu0 %v299
  %454 = vmatprep.subr.bf16.mxu0 0
  %455 = vmatpush1.bf16.msra.mxu0 %v298
  %456 = vmatprep.subr.bf16.mxu0 0
  %457 = vmatpush2.bf16.msra.mxu0 0
  %458 = vmatprep.subr.bf16.mxu0 0
  %459 = vmatpush2.bf16.msra.mxu0 0
  %460 = vmatprep.subr.bf16.mxu0 0
  %461 = vmatpush2.bf16.msra.mxu0 0
  %462 = vmatprep.subr.bf16.mxu0 0
  %463 = vmatpush2.bf16.msra.mxu0 0
  %464 = vmatprep.subr.bf16.mxu0 0
  %465 = vmatpush2.bf16.msra.mxu0 0
  %466 = vmatprep.subr.bf16.mxu0 0
  %467 = vmatpush2.bf16.msra.mxu0 0
  %468 = vmatprep.subr.bf16.mxu0 0
  %469 = vmatpush2.bf16.msra.mxu0 0
  %470 = vmatprep.subr.bf16.mxu0 0
  %471 = vmatpush2.bf16.msra.mxu0 0
  %472 = vmatprep.mubr.bf16.mxu0 0
  %473 = vmatmul.mubr.bf16.gmra.mxu0 %v320
  %v474 = vpop.f32.mrf.mxu0
  %v475 = vadd.f32 %v378, %v474
  %v476 = vpop.f32.mrf.mxu0
  %v477 = vpop.f32.mrf.mxu0
  %v478 = vadd.f32 %v381, %v477
  %v479 = vpop.f32.mrf.mxu0
  %480 = vmatprep.mubr.bf16.mxu0 0
  %481 = vmatmul.mubr.bf16.gmra.mxu0 %v323
  %v482 = vpop.f32.mrf.mxu0
  %v483 = vadd.f32 %v386, %v482
  %v484 = vpop.f32.mrf.mxu0
  %v485 = vpop.f32.mrf.mxu0
  %v486 = vadd.f32 %v389, %v485
  %v487 = vpop.f32.mrf.mxu0
  %488 = vmatprep.mubr.bf16.mxu0 0
  %489 = vmatmul.mubr.bf16.gmra.mxu0 %v326
  %v490 = vpop.f32.mrf.mxu0
  %v491 = vadd.f32 %v394, %v490
  %v492 = vpop.f32.mrf.mxu0
  %v493 = vpop.f32.mrf.mxu0
  %v494 = vadd.f32 %v397, %v493
  %v495 = vpop.f32.mrf.mxu0
  %496 = vmatprep.mubr.bf16.mxu0 0
  %497 = vmatmul.mubr.bf16.gmra.mxu0 %v329
  %v498 = vpop.f32.mrf.mxu0
  %v499 = vadd.f32 %v402, %v498
  %v500 = vpop.f32.mrf.mxu0
  %v501 = vpop.f32.mrf.mxu0
  %v502 = vadd.f32 %v405, %v501
  %v503 = vpop.f32.mrf.mxu0
  %504 = vmatprep.mubr.bf16.mxu0 0
  %505 = vmatmul.mubr.bf16.gmra.mxu0 %v332
  %v506 = vpop.f32.mrf.mxu0
  %v507 = vadd.f32 %v410, %v506
  %v508 = vpop.f32.mrf.mxu0
  %v509 = vpop.f32.mrf.mxu0
  %v510 = vadd.f32 %v413, %v509
  %v511 = vpop.f32.mrf.mxu0
  %512 = vmatprep.mubr.bf16.mxu0 0
  %513 = vmatmul.mubr.bf16.gmra.mxu0 %v335
  %v514 = vpop.f32.mrf.mxu0
  %v515 = vadd.f32 %v418, %v514
  %v516 = vpop.f32.mrf.mxu0
  %v517 = vpop.f32.mrf.mxu0
  %v518 = vadd.f32 %v421, %v517
  %v519 = vpop.f32.mrf.mxu0
  %520 = vmatprep.mubr.bf16.mxu0 0
  %521 = vmatmul.mubr.bf16.gmra.mxu0 %v338
  %v522 = vpop.f32.mrf.mxu0
  %v523 = vadd.f32 %v426, %v522
  %v524 = vpop.f32.mrf.mxu0
  %v525 = vpop.f32.mrf.mxu0
  %v526 = vadd.f32 %v429, %v525
  %v527 = vpop.f32.mrf.mxu0
  %528 = vmatprep.mubr.bf16.mxu0 0
  %529 = vmatmul.mubr.bf16.gmra.mxu0 %v341
  %v530 = vpop.f32.mrf.mxu0
  %v531 = vadd.f32 %v434, %v530
  %v532 = vpop.f32.mrf.mxu0
  %v533 = vpop.f32.mrf.mxu0
  %v534 = vadd.f32 %v437, %v533
  %v535 = vpop.f32.mrf.mxu0
  %536 = vdwg.mxu0
  %v537 = vmax.f32 %v475, 0.0
  %v538 = vmax.f32 %v478, 0.0
  %v539 = vmax.f32 %v483, 0.0
  %v540 = vmax.f32 %v486, 0.0
  %v541 = vmax.f32 %v491, 0.0
  %v542 = vmax.f32 %v494, 0.0
  %v543 = vmax.f32 %v499, 0.0
  %v544 = vmax.f32 %v502, 0.0
  %v545 = vmax.f32 %v507, 0.0
  %v546 = vmax.f32 %v510, 0.0
  %v547 = vmax.f32 %v515, 0.0
  %v548 = vmax.f32 %v518, 0.0
  %v549 = vmax.f32 %v523, 0.0
  %v550 = vmax.f32 %v526, 0.0
  %v551 = vmax.f32 %v531, 0.0
  %v552 = vmax.f32 %v534, 0.0
  %vm553 = vcmask 523264
  %554 = vst.msk [vmem:[%s3] sm:$0xff] %vm553, %v537
  %555 = vst.msk [vmem:[%s3 + $0x8] sm:$0xff] %vm553, %v538
  %556 = vst.msk [vmem:[%s3 + $0x10] sm:$0xff] %vm553, %v539
  %557 = vst.msk [vmem:[%s3 + $0x18] sm:$0xff] %vm553, %v540
  %558 = vst.msk [vmem:[%s3 + $0x20] sm:$0xff] %vm553, %v541
  %559 = vst.msk [vmem:[%s3 + $0x28] sm:$0xff] %vm553, %v542
  %560 = vst.msk [vmem:[%s3 + $0x30] sm:$0xff] %vm553, %v543
  %561 = vst.msk [vmem:[%s3 + $0x38] sm:$0xff] %vm553, %v544
  %562 = vst.msk [vmem:[%s3 + $0x40] sm:$0xff] %vm553, %v545
  %563 = vst.msk [vmem:[%s3 + $0x48] sm:$0xff] %vm553, %v546
  %564 = vst.msk [vmem:[%s3 + $0x50] sm:$0xff] %vm553, %v547
  %565 = vst.msk [vmem:[%s3 + $0x58] sm:$0xff] %vm553, %v548
  %566 = vst.msk [vmem:[%s3 + $0x60] sm:$0xff] %vm553, %v549
  %567 = vst.msk [vmem:[%s3 + $0x68] sm:$0xff] %vm553, %v550
  %568 = vst.msk [vmem:[%s3 + $0x70] sm:$0xff] %vm553, %v551
  %569 = vst.msk [vmem:[%s3 + $0x78] sm:$0xff] %vm553, %v552
  // Predicated region
  $region14: #{vae_forward.12} parent=0 // pred_check
    _
  $region15: #{vae_forward.12} parent=0 // pred_check_branch
    %571 = sbr.rel (0) target = $region17
  $region16: #{vae_forward.12} parent=0 // pred_region
    _
  $region17: #{vae_forward.12} parent=0 // pred_fallthru
    _
  // Predicated region
  $region18: #{vae_forward.12} parent=0 // pred_check
    _
  $region19: #{vae_forward.12} parent=0 // pred_check_branch
    %573 = sbr.rel (0) target = $region21
  $region20: #{vae_forward.12} parent=0 // pred_region
    _
  $region21: #{vae_forward.12} parent=0 // pred_fallthru
    _

// kernel: tile.37
$region0: #{tile.37}
  #allocation0 [shape = 's32[1]{0}', space=sflag, size = 0x4, scoped, tag = 'scoped memory for tile.37']
  %s0 = inlined_call_operand.<no memory space> [shape: f32[], index: 0, kind: input, shape index: {}]
  %s1 = inlined_call_operand.vmem [shape: f32[4,1], index: 1, kind: output, shape index: {}]
  %v2 = vstv %s0
  %3 = vst [vmem:[%s1] sm:$0xf] %v2

// kernel: vae_forward.13
$region0: #{vae_forward.13}
  #allocation0 [shape = 'u32[]', space=smem, size = 0x4, offset = 0x4, fixed_abs, tag = 'smem constant byte address 0x4 - core index']
  #allocation1 [shape = 'u32[144,128]{1,0:T(1,128)}', space=vmem, size = 0x12000, scoped, tag = 'internal scratch']
  %s0 = inlined_call_operand.vmem [shape: bf16[4,144], index: 0, kind: input, shape index: {}]
  %s1 = inlined_call_operand.vmem [shape: bf16[144,512], index: 1, kind: input, shape index: {}]
  %s2 = inlined_call_operand.vmem [shape: f32[4,1], index: 2, kind: input, shape index: {}]
  %s3 = inlined_call_operand.vmem [shape: f32[4,512], index: 3, kind: output, shape index: {}]
  %s4 = sld [smem:[#allocation0]]
  $region83: #{vae_forward.13} parent=0
    _
  %s6 = ssub.s32 1, %s4
  %s7 = scalar_select 0, %s6, %s4
  $region1: #{vae_forward.13} parent=0
    #allocation2 [shape = 'u8[147456]{0}', space=vmem, size = 0x24000, scoped, tag = 'input window, operand 1']
    loop: start=0, step=1, limit=4
    $region2: #{vae_forward.13} parent=1 // loop_pre_header
      _
    $region3: #{vae_forward.13} parent=1 // loop_header
      %s9 = sphi 0, %s13
      %p10 = scmp.ge.s32.totalorder %s9, 4
      %s17 = sphi 0, %s17
      %s19 = sphi 0, %s17
      %s20 = sphi 0, %s19
      %s34 = sphi 0, %s20
      %s40 = sphi 0, %s42
      %s43 = sphi 0, %s40
      %s44 = sphi 0, %s43
      %s60 = sphi 0, %s44
      %s64 = sphi 0, %s64
      %s66 = sphi 0, %s64
      %s67 = sphi 0, %s66
      %s81 = sphi 0, %s67
      %s87 = sphi 0, %s89
      %s90 = sphi 0, %s87
      %s91 = sphi 0, %s90
      %s107 = sphi 0, %s91
    $region4: #{vae_forward.13} parent=1 // loop_header_branch
      %12 = sbr.rel (%p10) target = $region8
    $region5: #{vae_forward.13} parent=1 // loop_body
      %s14 = ssub.s32 %s9, 1
      %s15 = ssub.s32 %s9, 2
      %s16 = sadd.s32 %s9, 1
      %s18 = sadd.s32 %s17, 1
      %p21 = scmp.eq.s32.totalorder %s9, 1
      %p22 = scmp.ne.s32.totalorder %s17, %s19
      %p23 = scmp.eq.s32.totalorder %s9, 0
      %p24 = por %p22, %p23
      %p25 = scmp.ne.s32.totalorder %s17, %s19
      %p26 = scmp.eq.s32.totalorder %s14, 1
      %p27 = por %p25, %p26
      %p28 = scmp.ne.s32.totalorder %s19, %s20
      %p29 = scmp.eq.s32.totalorder %s14, 0
      %p30 = por %p28, %p29
      %p31 = scmp.ne.s32.totalorder %s19, %s20
      %p32 = scmp.eq.s32.totalorder %s15, 1
      %p33 = por %p31, %p32
      %p35 = scmp.ne.s32.totalorder %s20, %s34
      %p36 = scmp.eq.s32.totalorder %s15, 0
      %p37 = por %p35, %p36
      %s38 = ssub.s32 %s9, %s16
      %p39 = scmp.eq.s32.totalorder %s38, 0
      %s41 = sadd.s32 %s40, 1
      %s42 = scalar_select %p39, %s40, %s41
      %p45 = pneg %p39
      %p46 = scmp.eq.s32.totalorder %s9, 1
      %p47 = por %p45, %p46
      %p48 = scmp.ne.s32.totalorder %s40, %s43
      %p49 = scmp.eq.s32.totalorder %s9, 0
      %p50 = por %p48, %p49
      %p51 = scmp.ne.s32.totalorder %s40, %s43
      %p52 = scmp.eq.s32.totalorder %s14, 1
      %p53 = por %p51, %p52
      %p54 = scmp.ne.s32.totalorder %s43, %s44
      %p55 = scmp.eq.s32.totalorder %s14, 0
      %p56 = por %p54, %p55
      %p57 = scmp.ne.s32.totalorder %s43, %s44
      %p58 = scmp.eq.s32.totalorder %s15, 1
      %p59 = por %p57, %p58
      %p61 = scmp.ne.s32.totalorder %s44, %s60
      %p62 = scmp.eq.s32.totalorder %s15, 0
      %p63 = por %p61, %p62
      %s65 = sadd.s32 %s64, 1
      %p68 = scmp.eq.s32.totalorder %s9, 1
      %p69 = scmp.ne.s32.totalorder %s64, %s66
      %p70 = scmp.eq.s32.totalorder %s9, 0
      %p71 = por %p69, %p70
      %p72 = scmp.ne.s32.totalorder %s64, %s66
      %p73 = scmp.eq.s32.totalorder %s14, 1
      %p74 = por %p72, %p73
      %p75 = scmp.ne.s32.totalorder %s66, %s67
      %p76 = scmp.eq.s32.totalorder %s14, 0
      %p77 = por %p75, %p76
      %p78 = scmp.ne.s32.totalorder %s66, %s67
      %p79 = scmp.eq.s32.totalorder %s15, 1
      %p80 = por %p78, %p79
      %p82 = scmp.ne.s32.totalorder %s67, %s81
      %p83 = scmp.eq.s32.totalorder %s15, 0
      %p84 = por %p82, %p83
      %s85 = ssub.s32 %s9, %s16
      %p86 = scmp.eq.s32.totalorder %s85, 0
      %s88 = sadd.s32 %s87, 1
      %s89 = scalar_select %p86, %s87, %s88
      %p92 = pneg %p86
      %p93 = scmp.eq.s32.totalorder %s9, 1
      %p94 = por %p92, %p93
      %p95 = scmp.ne.s32.totalorder %s87, %s90
      %p96 = scmp.eq.s32.totalorder %s9, 0
      %p97 = por %p95, %p96
      %p98 = scmp.ne.s32.totalorder %s87, %s90
      %p99 = scmp.eq.s32.totalorder %s14, 1
      %p100 = por %p98, %p99
      %p101 = scmp.ne.s32.totalorder %s90, %s91
      %p102 = scmp.eq.s32.totalorder %s14, 0
      %p103 = por %p101, %p102
      %p104 = scmp.ne.s32.totalorder %s90, %s91
      %p105 = scmp.eq.s32.totalorder %s15, 1
      %p106 = por %p104, %p105
      %p108 = scmp.ne.s32.totalorder %s91, %s107
      %p109 = scmp.eq.s32.totalorder %s15, 0
      %p110 = por %p108, %p109
      %p111 = scmp.le.s32.totalorder 1, %s9
      %p112 = scmp.lt.s32.totalorder %s9, 3
      %p113 = pnand %p111, %p112
      %p114 = pneg %p113
      // Predicated region
      $region9: #{vae_forward.13} parent=5 // pred_check
        _
      $region10: #{vae_forward.13} parent=5 // pred_check_branch
        %116 = sbr.rel (%p113) target = $region12
      $region11: #{vae_forward.13} parent=5 // pred_region
        %s117 = ssub.s32 %s9, 1
        // Predicated region
        $region13: #{vae_forward.13} parent=11 // pred_check
          %p118 = pneg %p30
        $region14: #{vae_forward.13} parent=11 // pred_check_branch
          %120 = sbr.rel (%p118) target = $region16
        $region15: #{vae_forward.13} parent=11 // pred_region
          _
        $region16: #{vae_forward.13} parent=11 // pred_fallthru
          _
        // Predicated region
        $region17: #{vae_forward.13} parent=11 // pred_check
          %p121 = pneg %p77
        $region18: #{vae_forward.13} parent=11 // pred_check_branch
          %123 = sbr.rel (%p121) target = $region20
        $region19: #{vae_forward.13} parent=11 // pred_region
          _
        $region20: #{vae_forward.13} parent=11 // pred_fallthru
          _
      $region12: #{vae_forward.13} parent=5 // pred_fallthru
        _
      %p124 = scmp.lt.s32.totalorder %s9, 2
      // Predicated region
      $region21: #{vae_forward.13} parent=5 // pred_check
        %p125 = pneg %p124
      $region22: #{vae_forward.13} parent=5 // pred_check_branch
        %127 = sbr.rel (%p125) target = $region24
      $region23: #{vae_forward.13} parent=5 // pred_region
        // Predicated region
        $region25: #{vae_forward.13} parent=23 // pred_check
          %p128 = pneg %p50
        $region26: #{vae_forward.13} parent=23 // pred_check_branch
          %130 = sbr.rel (%p128) target = $region28
        $region27: #{vae_forward.13} parent=23 // pred_region
          %s131 = sand.u32 %s40, 1
          %s132 = sand.u32 %s40, 1
          %s133 = smul.addr %s132, 144
          %s134 = scalar_lea.vmem [#allocation2], %s133
          %s135 = smul.u32 2, %s9
          %s136 = smul.addr %s135, 4
          %s137 = scalar_lea.vmem %s1, %s136
          // Predicated region
          $region29: #{vae_forward.13} parent=27 // pred_check
            _
          $region30: #{vae_forward.13} parent=27 // pred_check_branch
            %139 = sbr.rel (0) target = $region32
          $region31: #{vae_forward.13} parent=27 // pred_region
            // Predicated region
            $region33: #{vae_forward.13} parent=31 // pred_check
              _
            $region34: #{vae_forward.13} parent=31 // pred_check_branch
              %141 = sbr.rel (0) target = $region36
            $region35: #{vae_forward.13} parent=31 // pred_region
              // Predicated region
              $region48: #{vae_forward.13} parent=35 // pred_check
                _
              $region49: #{vae_forward.13} parent=35 // pred_check_branch
                %191 = sbr.rel (0) target = $region51
              $region50: #{vae_forward.13} parent=35 // pred_region
                loop: start=0, step=1, limit=1
                $region52: #{vae_forward.13} parent=50 // loop_pre_header
                  _
                $region53: #{vae_forward.13} parent=50 // loop_header
                  %s193 = sphi 0, %s197
                  %p194 = scmp.ge.s32.totalorder %s193, 1
                  %s198 = sphi %s137, %s137
                  %s199 = sphi %s134, %s134
                $region54: #{vae_forward.13} parent=50 // loop_header_branch
                  %196 = sbr.rel (%p194) target = $region58
                $region55: #{vae_forward.13} parent=50 // loop_body
                  %v200 = vld [vmem:[%s198] sm:$0xff]
                  %201 = vst [vmem:[%s199] sm:$0xff] %v200
                  %v202 = vld [vmem:[%s198 + $0x10] sm:$0xff]
                  %203 = vst [vmem:[%s199 + $0x8] sm:$0xff] %v202
                  %v204 = vld [vmem:[%s198 + $0x20] sm:$0xff]
                  %205 = vst [vmem:[%s199 + $0x10] sm:$0xff] %v204
                  %v206 = vld [vmem:[%s198 + $0x30] sm:$0xff]
                  %207 = vst [vmem:[%s199 + $0x18] sm:$0xff] %v206
                  %v208 = vld [vmem:[%s198 + $0x40] sm:$0xff]
                  %209 = vst [vmem:[%s199 + $0x20] sm:$0xff] %v208
                  %v210 = vld [vmem:[%s198 + $0x50] sm:$0xff]
                  %211 = vst [vmem:[%s199 + $0x28] sm:$0xff] %v210
                  %v212 = vld [vmem:[%s198 + $0x60] sm:$0xff]
                  %213 = vst [vmem:[%s199 + $0x30] sm:$0xff] %v212
                  %v214 = vld [vmem:[%s198 + $0x70] sm:$0xff]
                  %215 = vst [vmem:[%s199 + $0x38] sm:$0xff] %v214
                  %v216 = vld [vmem:[%s198 + $0x80] sm:$0xff]
                  %217 = vst [vmem:[%s199 + $0x40] sm:$0xff] %v216
                  %v218 = vld [vmem:[%s198 + $0x90] sm:$0xff]
                  %219 = vst [vmem:[%s199 + $0x48] sm:$0xff] %v218
                  %v220 = vld [vmem:[%s198 + $0xa0] sm:$0xff]
                  %221 = vst [vmem:[%s199 + $0x50] sm:$0xff] %v220
                  %v222 = vld [vmem:[%s198 + $0xb0] sm:$0xff]
                  %223 = vst [vmem:[%s199 + $0x58] sm:$0xff] %v222
                  %v224 = vld [vmem:[%s198 + $0xc0] sm:$0xff]
                  %225 = vst [vmem:[%s199 + $0x60] sm:$0xff] %v224
                  %v226 = vld [vmem:[%s198 + $0xd0] sm:$0xff]
                  %227 = vst [vmem:[%s199 + $0x68] sm:$0xff] %v226
                  %v228 = vld [vmem:[%s198 + $0xe0] sm:$0xff]
                  %229 = vst [vmem:[%s199 + $0x70] sm:$0xff] %v228
                  %v230 = vld [vmem:[%s198 + $0xf0] sm:$0xff]
                  %231 = vst [vmem:[%s199 + $0x78] sm:$0xff] %v230
                  %v232 = vld [vmem:[%s198 + $0x100] sm:$0xff]
                  %233 = vst [vmem:[%s199 + $0x80] sm:$0xff] %v232
                  %v234 = vld [vmem:[%s198 + $0x110] sm:$0xff]
                  %235 = vst [vmem:[%s199 + $0x88] sm:$0xff] %v234
                $region56: #{vae_forward.13} parent=50 // loop_footer
                  %s197 = sadd.s32 1, %s193
                $region57: #{vae_forward.13} parent=50 // loop_footer_branch
                  %192 = sbr.rel target = $region53
                $region58: #{vae_forward.13} parent=50 // loop_exit
                  _
              $region51: #{vae_forward.13} parent=35 // pred_fallthru
                _
              // Predicated region
              $region59: #{vae_forward.13} parent=35 // pred_check
                _
              $region60: #{vae_forward.13} parent=35 // pred_check_branch
                %237 = sbr.rel target = $region62
              $region61: #{vae_forward.13} parent=35 // pred_region
                _
              $region62: #{vae_forward.13} parent=35 // pred_fallthru
                _
            $region36: #{vae_forward.13} parent=31 // pred_fallthru
              _
            // Predicated region
            $region37: #{vae_forward.13} parent=31 // pred_check
              _
            $region38: #{vae_forward.13} parent=31 // pred_check_branch
              %143 = sbr.rel target = $region40
            $region39: #{vae_forward.13} parent=31 // pred_region
              %s145 = ssub.s32 256, 1
              loop: start=0, step=1, limit=1
              $region41: #{vae_forward.13} parent=39 // loop_pre_header
                _
              $region42: #{vae_forward.13} parent=39 // loop_header
                %s147 = sphi 0, %s151
                %p148 = scmp.ge.s32.totalorder %s147, 1
                %s152 = sphi %s137, %s137
                %s153 = sphi %s134, %s134
              $region43: #{vae_forward.13} parent=39 // loop_header_branch
                %150 = sbr.rel (%p148) target = $region47
              $region44: #{vae_forward.13} parent=39 // loop_body
                %v154 = vld [vmem:[%s152] sm:%s145]
                %155 = vst [vmem:[%s153] sm:%s145] %v154
                %v156 = vld [vmem:[%s152 + $0x10] sm:%s145]
                %157 = vst [vmem:[%s153 + $0x8] sm:%s145] %v156
                %v158 = vld [vmem:[%s152 + $0x20] sm:%s145]
                %159 = vst [vmem:[%s153 + $0x10] sm:%s145] %v158
                %v160 = vld [vmem:[%s152 + $0x30] sm:%s145]
                %161 = vst [vmem:[%s153 + $0x18] sm:%s145] %v160
                %v162 = vld [vmem:[%s152 + $0x40] sm:%s145]
                %163 = vst [vmem:[%s153 + $0x20] sm:%s145] %v162
                %v164 = vld [vmem:[%s152 + $0x50] sm:%s145]
                %165 = vst [vmem:[%s153 + $0x28] sm:%s145] %v164
                %v166 = vld [vmem:[%s152 + $0x60] sm:%s145]
                %167 = vst [vmem:[%s153 + $0x30] sm:%s145] %v166
                %v168 = vld [vmem:[%s152 + $0x70] sm:%s145]
                %169 = vst [vmem:[%s153 + $0x38] sm:%s145] %v168
                %v170 = vld [vmem:[%s152 + $0x80] sm:%s145]
                %171 = vst [vmem:[%s153 + $0x40] sm:%s145] %v170
                %v172 = vld [vmem:[%s152 + $0x90] sm:%s145]
                %173 = vst [vmem:[%s153 + $0x48] sm:%s145] %v172
                %v174 = vld [vmem:[%s152 + $0xa0] sm:%s145]
                %175 = vst [vmem:[%s153 + $0x50] sm:%s145] %v174
                %v176 = vld [vmem:[%s152 + $0xb0] sm:%s145]
                %177 = vst [vmem:[%s153 + $0x58] sm:%s145] %v176
                %v178 = vld [vmem:[%s152 + $0xc0] sm:%s145]
                %179 = vst [vmem:[%s153 + $0x60] sm:%s145] %v178
                %v180 = vld [vmem:[%s152 + $0xd0] sm:%s145]
                %181 = vst [vmem:[%s153 + $0x68] sm:%s145] %v180
                %v182 = vld [vmem:[%s152 + $0xe0] sm:%s145]
                %183 = vst [vmem:[%s153 + $0x70] sm:%s145] %v182
                %v184 = vld [vmem:[%s152 + $0xf0] sm:%s145]
                %185 = vst [vmem:[%s153 + $0x78] sm:%s145] %v184
                %v186 = vld [vmem:[%s152 + $0x100] sm:%s145]
                %187 = vst [vmem:[%s153 + $0x80] sm:%s145] %v186
                %v188 = vld [vmem:[%s152 + $0x110] sm:%s145]
                %189 = vst [vmem:[%s153 + $0x88] sm:%s145] %v188
              $region45: #{vae_forward.13} parent=39 // loop_footer
                %s151 = sadd.s32 1, %s147
              $region46: #{vae_forward.13} parent=39 // loop_footer_branch
                %146 = sbr.rel target = $region42
              $region47: #{vae_forward.13} parent=39 // loop_exit
                _
            $region40: #{vae_forward.13} parent=31 // pred_fallthru
              _
          $region32: #{vae_forward.13} parent=27 // pred_fallthru
            _
          %238 = vnop
        $region28: #{vae_forward.13} parent=23 // pred_fallthru
          _
      $region24: #{vae_forward.13} parent=5 // pred_fallthru
        _
      %p239 = scmp.le.s32.totalorder 1, %s9
      %p240 = scmp.lt.s32.totalorder %s9, 3
      %p241 = pnand %p239, %p240
      %p242 = pneg %p241
      // Predicated region
      $region63: #{vae_forward.13} parent=5 // pred_check
        _
      $region64: #{vae_forward.13} parent=5 // pred_check_branch
        %244 = sbr.rel (%p241) target = $region66
      $region65: #{vae_forward.13} parent=5 // pred_region
        %s245 = ssub.s32 %s9, 1
        %s246 = sand.u32 %s43, 1
        %s247 = sand.u32 %s43, 1
        %s248 = smul.addr %s247, 144
        %s249 = scalar_lea.vmem [#allocation2], %s248
        // Predicated region
        $region67: #{vae_forward.13} parent=65 // pred_check
          %p250 = pneg %p56
        $region68: #{vae_forward.13} parent=65 // pred_check_branch
          %252 = sbr.rel (%p250) target = $region70
        $region69: #{vae_forward.13} parent=65 // pred_region
          _
        $region70: #{vae_forward.13} parent=65 // pred_fallthru
          _
        %p253 = pneg %p30
        %p254 = pneg %p27
        %s255 = sand.u32 %s43, 1
        %s256 = sand.u32 %s43, 1
        %s257 = smul.addr %s256, 144
        %s258 = scalar_lea.vmem [#allocation2], %s257
        %p259 = pneg %p56
        %p260 = pneg %p53
        %p261 = pneg %p77
        %p262 = pneg %p74
        %p263 = pneg %p103
        %p264 = pneg %p100
        %s265 = smul.u32 2, %s14
        %p266 = scmp.lt.s32.totalorder %s265, 3
        %s267 = scalar_select %p266, %s265, 3
        %s268 = smul.addr %s267, 4
        %s269 = scalar_lea.vmem %s3, %s268
        %s270 = smul.u32 2, %s14
        %s271 = smul.u32 2, %s14
        %p272 = scmp.lt.s32.totalorder %s271, 3
        %s273 = scalar_select %p272, %s271, 3
        %s274 = smul.addr %s273, 4
        %s275 = scalar_lea.vmem %s3, %s274
        %s276 = smul.u32 2, %s14
        %v278 = vld [vmem:[%s0] sm:$0xf]
        %v279 = vld [vmem:[%s249] sm:$0xff]
        %v280 = vld [vmem:[%s249 + $0x8] sm:$0xff]
        %v281 = vld [vmem:[%s249 + $0x10] sm:$0xff]
        %v282 = vld [vmem:[%s249 + $0x18] sm:$0xff]
        %v283 = vld [vmem:[%s249 + $0x20] sm:$0xff]
        %v284 = vld [vmem:[%s249 + $0x28] sm:$0xff]
        %v285 = vld [vmem:[%s249 + $0x30] sm:$0xff]
        %v286 = vld [vmem:[%s249 + $0x38] sm:$0xff]
        %v287 = vld [vmem:[%s249 + $0x40] sm:$0xff]
        %v288 = vld [vmem:[%s249 + $0x48] sm:$0xff]
        %v289 = vld [vmem:[%s249 + $0x50] sm:$0xff]
        %v290 = vld [vmem:[%s249 + $0x58] sm:$0xff]
        %v291 = vld [vmem:[%s249 + $0x60] sm:$0xff]
        %v292 = vld [vmem:[%s249 + $0x68] sm:$0xff]
        %v293 = vld [vmem:[%s249 + $0x70] sm:$0xff]
        %v294 = vld [vmem:[%s249 + $0x78] sm:$0xff]
        %v295 = vld [vmem:[%s249 + $0x80] sm:$0xff]
        %v296 = vld [vmem:[%s249 + $0x88] sm:$0xff]
        %v297 = vld [vmem:[%s2] sm:$0xf]
        %299 = vset.pattern.permute.xlu0 0
        %300 = vperm.xlu0 %299, %v297
        %v301 = vpop.permute.xlu0 %300
        %v305 = vunpack.c.l.s4 1983009808
        %v306 = vunpack.c.0.s8 %v305
        %v307 = vlaneseq
        %v308 = vshrl.u32 %v307, 7
        %v309 = vsub.s32 %v306, %v308
        %v310 = vrot.slane %v278, %v309
        %v311 = vcombine.high %v310, %v310
        %v331 = vunpack.c.l.b16 %v279
        %v332 = vunpack.c.h.b16 %v279
        %v333 = vunpack.c.l.b16 %v280
        %v334 = vunpack.c.h.b16 %v280
        %v335 = vunpack.c.l.b16 %v281
        %v336 = vunpack.c.h.b16 %v281
        %v337 = vunpack.c.l.b16 %v282
        %v338 = vunpack.c.h.b16 %v282
        %v339 = vunpack.c.l.b16 %v283
        %v340 = vunpack.c.h.b16 %v283
        %v341 = vunpack.c.l.b16 %v284
        %v342 = vunpack.c.h.b16 %v284
        %v343 = vunpack.c.l.b16 %v285
        %v344 = vunpack.c.h.b16 %v285
        %v345 = vunpack.c.l.b16 %v286
        %v346 = vunpack.c.h.b16 %v286
        %v347 = vunpack.c.l.b16 %v287
        %v348 = vunpack.c.h.b16 %v287
        %v349 = vunpack.c.l.b16 %v288
        %v350 = vunpack.c.h.b16 %v288
        %v351 = vunpack.c.l.b16 %v289
        %v352 = vunpack.c.h.b16 %v289
        %v353 = vunpack.c.l.b16 %v290
        %v354 = vunpack.c.h.b16 %v290
        %v355 = vunpack.c.l.b16 %v291
        %v356 = vunpack.c.h.b16 %v291
        %v357 = vunpack.c.l.b16 %v292
        %v358 = vunpack.c.h.b16 %v292
        %v359 = vunpack.c.l.b16 %v293
        %v360 = vunpack.c.h.b16 %v293
        %v361 = vunpack.c.l.b16 %v294
        %v362 = vunpack.c.h.b16 %v294
        %v363 = vunpack.c.l.b16 %v295
        %v364 = vunpack.c.h.b16 %v295
        %v365 = vunpack.c.l.b16 %v296
        %v366 = vunpack.c.h.b16 %v296
        %v367 = vpack.c.b16 %v333, %v331
        %v368 = vpack.c.b16 %v334, %v332
        %v369 = vpack.c.b16 %v337, %v335
        %v370 = vpack.c.b16 %v338, %v336
        %v371 = vpack.c.b16 %v341, %v339
        %v372 = vpack.c.b16 %v342, %v340
        %v373 = vpack.c.b16 %v345, %v343
        %v374 = vpack.c.b16 %v346, %v344
        %v375 = vpack.c.b16 %v349, %v347
        %v376 = vpack.c.b16 %v350, %v348
        %v377 = vpack.c.b16 %v353, %v351
        %v378 = vpack.c.b16 %v354, %v352
        %v379 = vpack.c.b16 %v357, %v355
        %v380 = vpack.c.b16 %v358, %v356
        %v381 = vpack.c.b16 %v361, %v359
        %v382 = vpack.c.b16 %v362, %v360
        %v383 = vpack.c.b16 %v365, %v363
        %v384 = vpack.c.b16 %v366, %v364
        %vm403 = vcmask 130048
        %v405 = vsel %vm403, %v311, 0
        %407 = vmatprep.subr.bf16.mxu0 %v382
        %408 = vmatpush1.bf16.msra.mxu0 %v381
        %409 = vmatprep.subr.bf16.mxu0 %v380
        %410 = vmatpush1.bf16.msra.mxu0 %v379
        %411 = vmatprep.subr.bf16.mxu0 %v378
        %412 = vmatpush1.bf16.msra.mxu0 %v377
        %413 = vmatprep.subr.bf16.mxu0 %v376
        %414 = vmatpush1.bf16.msra.mxu0 %v375
        %415 = vmatprep.subr.bf16.mxu0 %v374
        %416 = vmatpush1.bf16.msra.mxu0 %v373
        %417 = vmatprep.subr.bf16.mxu0 %v372
        %418 = vmatpush1.bf16.msra.mxu0 %v371
        %419 = vmatprep.subr.bf16.mxu0 %v370
        %420 = vmatpush1.bf16.msra.mxu0 %v369
        %421 = vmatprep.subr.bf16.mxu0 %v368
        %422 = vmatpush1.bf16.msra.mxu0 %v367
        %423 = vmatprep.subr.bf16.mxu0 0
        %424 = vmatpush2.bf16.msra.mxu0 0
        %425 = vmatprep.subr.bf16.mxu0 0
        %426 = vmatpush2.bf16.msra.mxu0 0
        %427 = vmatprep.subr.bf16.mxu0 0
        %428 = vmatpush2.bf16.msra.mxu0 0
        %429 = vmatprep.subr.bf16.mxu0 0
        %430 = vmatpush2.bf16.msra.mxu0 0
        %431 = vmatprep.subr.bf16.mxu0 0
        %432 = vmatpush2.bf16.msra.mxu0 0
        %433 = vmatprep.subr.bf16.mxu0 0
        %434 = vmatpush2.bf16.msra.mxu0 0
        %435 = vmatprep.subr.bf16.mxu0 0
        %436 = vmatpush2.bf16.msra.mxu0 0
        %437 = vmatprep.subr.bf16.mxu0 %v384
        %438 = vmatpush2.bf16.msra.mxu0 %v383
        %439 = vmatprep.mubr.bf16.mxu0 %v405
        %440 = vmatmul.mubr.bf16.gmra.mxu0 %v310
        %v441 = vpop.f32.mrf.mxu0
        %v442 = vadd.f32 %v301, %v441
        %v443 = vpop.f32.mrf.mxu0
        %v444 = vadd.f32 %v301, %v443
        %v445 = vpop.f32.mrf.mxu0
        %v446 = vpop.f32.mrf.mxu0
        %447 = vdwg.mxu0
        %v448 = vsub.f32 0.0, %v442
        %v449 = vsub.f32 0.0, %v444
        %v450 = vmul.f32 %v448, 1.442695
        %v451 = vpow.pop %v450
        %v452 = vmul.f32 %v449, 1.442695
        %v453 = vpow.pop %v452
        %v454 = vadd.f32 %v451, 1.0
        %v455 = vadd.f32 %v453, 1.0
        %v456 = vrcp.pop %v454
        %v457 = vrcp.pop %v455
        %v458 = vmax.f32 %v456, 0.0
        %v459 = vmax.f32 %v457, 0.0
        %v460 = vmin.f32 %v458, 1.0
        %v461 = vmin.f32 %v459, 1.0
        %v464 = vcombine.low %v460, %v461
        %466 = vst [vmem:[%s275] sm:$0xff] %v464
        %s467 = smul.u32 2, %s14
        %p468 = scmp.lt.s32.totalorder %s467, 3
        %s469 = scalar_select %p468, %s467, 3
        %s470 = smul.addr %s469, 4
        %s471 = scalar_lea.vmem %s3, %s470
        // Predicated region
        $region71: #{vae_forward.13} parent=65 // pred_check
          %p472 = pneg %p100
        $region72: #{vae_forward.13} parent=65 // pred_check_branch
          %474 = sbr.rel (%p472) target = $region74
        $region73: #{vae_forward.13} parent=65 // pred_region
          %s475 = smul.u32 2, %s14
        $region74: #{vae_forward.13} parent=65 // pred_fallthru
          _
      $region66: #{vae_forward.13} parent=5 // pred_fallthru
        _
      %p476 = scmp.le.s32.totalorder 2, %s9
      // Predicated region
      $region75: #{vae_forward.13} parent=5 // pred_check
        %p477 = pneg %p476
      $region76: #{vae_forward.13} parent=5 // pred_check_branch
        %479 = sbr.rel (%p477) target = $region78
      $region77: #{vae_forward.13} parent=5 // pred_region
        %s480 = ssub.s32 %s9, 2
        // Predicated region
        $region79: #{vae_forward.13} parent=77 // pred_check
          %p481 = pneg %p106
        $region80: #{vae_forward.13} parent=77 // pred_check_branch
          %483 = sbr.rel (%p481) target = $region82
        $region81: #{vae_forward.13} parent=77 // pred_region
          %s484 = smul.u32 2, %s15
          %p485 = scmp.lt.s32.totalorder %s484, 3
          %s486 = scalar_select %p485, %s484, 3
          %s487 = smul.addr %s486, 4
          %s488 = scalar_lea.vmem %s3, %s487
        $region82: #{vae_forward.13} parent=77 // pred_fallthru
          _
      $region78: #{vae_forward.13} parent=5 // pred_fallthru
        _
    $region6: #{vae_forward.13} parent=1 // loop_footer
      %s13 = sadd.s32 1, %s9
    $region7: #{vae_forward.13} parent=1 // loop_footer_branch
      %8 = sbr.rel target = $region3
    $region8: #{vae_forward.13} parent=1 // loop_exit
      _

</llo_original>
